<compile_context>
chip_gen: v7x
topology: tpu7x:2x2x1
jax: 0.10.0
libtpu: 0.0.40
codegen_flags: <defaults>
</compile_context>

<pallas_src>
import functools

import jax
import jax.numpy as jnp
from jax.experimental import pallas as pl
from jax.experimental.pallas import tpu as pltpu

EMBED_DIM = 32
HIDDEN0 = 128
HIDDEN = 256
N_LAYERS = 5
BN_EPS = 0.9          # nn.BatchNorm1d(256, 0.9) -> second positional arg is eps
LEAK = 0.3


def _leaky_relu(x):
    return jnp.where(x > 0, x, LEAK * x)


def _generator_kernel(z_ref, w1_ref, b1_ref, w0_ref, ws_ref, gb_ref, out_ref,
                      *, n_valid):
    bp = z_ref.shape[0]                      # padded batch (multiple of 8)
    inv_n = 1.0 / n_valid

    # Masked "ones" row for the stats matmuls (bf16 operands; 0/1 exact in bf16).
    # Hoisted: reused by every BN layer.
    if n_valid == bp:
        ones_row = jnp.ones((1, bp), jnp.bfloat16)
    else:
        row_ids = jax.lax.broadcasted_iota(jnp.int32, (1, bp), 1)
        ones_row = (row_ids < n_valid).astype(jnp.bfloat16)

    # l1: Linear(embed_dim -> 128) + LeakyReLU  (bf16 operands, f32 accumulation)
    x = jnp.dot(z_ref[...].astype(jnp.bfloat16), w1_ref[...],
                preferred_element_type=jnp.float32)
    x = _leaky_relu(x + b1_ref[...])

    # 5 x (Linear[no bias] -> BatchNorm1d(training stats, eps=0.9) -> LeakyReLU)
    for i in range(N_LAYERS):
        w = w0_ref[...] if i == 0 else ws_ref[i - 1]        # bf16 (in, 256)
        g = gb_ref[2 * i:2 * i + 1, :]                      # (1, 256) f32 gamma
        beta = gb_ref[2 * i + 1:2 * i + 2, :]               # (1, 256) f32 beta

        # Linear bias dropped: it cancels exactly inside BatchNorm.
        x = jnp.dot(x.astype(jnp.bfloat16), w,
                    preferred_element_type=jnp.float32)     # (Bp, 256) f32

        # Single-pass (masked) batch statistics on the MXU, bf16 operands,
        # f32 accumulation: sum(x) and sum(x^2) over the real rows only.
        xb = x.astype(jnp.bfloat16)
        s1 = jnp.dot(ones_row, xb, preferred_element_type=jnp.float32)
        s2 = jnp.dot(ones_row, xb * xb, preferred_element_type=jnp.float32)
        mean = s1 * inv_n
        var = s2 * inv_n - mean * mean                      # biased variance

        # Folded BN affine: one multiply + one add over the (Bp, 256) tile.
        scale = g * jax.lax.rsqrt(var + BN_EPS)
        shift = beta - mean * scale
        x = _leaky_relu(x * scale + shift)

    out_ref[...] = x.astype(out_ref.dtype)


def _vmem_limit_bytes():
    """Generation-aware VMEM limit: ~75% of physical capacity."""
    try:
        cap = int(pltpu.get_tpu_info().vmem_capacity_bytes)
    except Exception:
        cap = 64 * 1024 * 1024            # conservative fallback (v7x-sized)
    return max(32 * 1024 * 1024, int(cap * 3 // 4))


def init_params(key, embed_dim=EMBED_DIM):
    """Deterministic synthetic parameters.

    Returns (kernel_params, lin_biases):
      kernel_params = (w1, b1, w0, w_stack, gb)   -- what the Pallas kernel needs
      lin_biases    = (5, 256) f32                -- reference-only (cancel in BN)
    """
    k = key

    def nxt():
        nonlocal k
        k, sub = jax.random.split(k)
        return sub

    # l1: Linear(embed_dim, 128)
    w1 = (jax.random.normal(nxt(), (embed_dim, HIDDEN0), jnp.float32) * 0.05
          ).astype(jnp.bfloat16)
    b1 = jax.random.normal(nxt(), (1, HIDDEN0), jnp.float32) * 0.01

    # 5 blocks: Linear(in, 256) + BatchNorm1d(256)
    ws, gb_rows, bias_rows = [], [], []
    for i in range(N_LAYERS):
        fan_in = HIDDEN0 if i == 0 else HIDDEN
        w = (jax.random.normal(nxt(), (fan_in, HIDDEN), jnp.float32) * 0.05
             ).astype(jnp.bfloat16)
        b = jax.random.normal(nxt(), (HIDDEN,), jnp.float32) * 0.01
        gamma = 1.0 + 0.1 * jax.random.normal(nxt(), (HIDDEN,), jnp.float32)
        beta = 0.1 * jax.random.normal(nxt(), (HIDDEN,), jnp.float32)
        ws.append(w)
        gb_rows += [gamma, beta]
        bias_rows.append(b)

    w0 = ws[0]                               # (128, 256) bf16
    w_stack = jnp.stack(ws[1:], axis=0)      # (4, 256, 256) bf16
    gb = jnp.stack(gb_rows, axis=0)          # (10, 256) f32  [g0,beta0,g1,beta1,..]
    lin_biases = jnp.stack(bias_rows, 0)     # (5, 256) f32  (reference only)
    return (w1, b1, w0, w_stack, gb), lin_biases


def generator_forward(z, kernel_params):
    w1, b1, w0, w_stack, gb = kernel_params
    b = z.shape[0]
    bp = ((b + 7) // 8) * 8                  # pad batch to a sublane multiple
    if bp != b:
        z = jnp.pad(z, ((0, bp - b), (0, 0)))

    vmem = pl.BlockSpec(memory_space=pltpu.MemorySpace.VMEM)
    out = pl.pallas_call(
        functools.partial(_generator_kernel, n_valid=b),
        out_shape=jax.ShapeDtypeStruct((bp, HIDDEN), jnp.float32),
        in_specs=[vmem] * 6,
        out_specs=vmem,
        compiler_params=pltpu.CompilerParams(
            vmem_limit_bytes=_vmem_limit_bytes()),
    )(z, w1, b1, w0, w_stack, gb)
    return out[:b]


def generator_ref(z, kernel_params, lin_biases):
    """Pure-JAX reference (same bf16 weights, f32 accumulation, f32 BN stats,
    Linear biases INCLUDED) for verification."""
    w1, b1, w0, w_stack, gb = kernel_params
    x = jnp.dot(z.astype(jnp.bfloat16), w1,
                preferred_element_type=jnp.float32) + b1
    x = jnp.where(x > 0, x, LEAK * x)
    for i in range(N_LAYERS):
        w = w0 if i == 0 else w_stack[i - 1]
        x = jnp.dot(x.astype(jnp.bfloat16), w,
                    preferred_element_type=jnp.float32) + lin_biases[i]
        mean = jnp.mean(x, axis=0, keepdims=True)
        var = jnp.mean((x - mean) ** 2, axis=0, keepdims=True)   # biased variance
        x = (x - mean) * jax.lax.rsqrt(var + BN_EPS) * gb[2 * i] + gb[2 * i + 1]
        x = jnp.where(x > 0, x, LEAK * x)
    return x


if __name__ == "__main__":
    key = jax.random.PRNGKey(0)
    kz, kp = jax.random.split(key)

    B = 128          # >= 128 rows per block; multiple of 8 (sublane aligned)
    z = jax.random.normal(kz, (B, EMBED_DIM), jnp.float32)
    kernel_params, lin_biases = init_params(kp)

    out = generator_forward(z, kernel_params)
    out = jax.block_until_ready(out)

    ref = generator_ref(z, kernel_params, lin_biases)
    assert out.shape == (B, HIDDEN)
    assert bool(jnp.allclose(out, ref, atol=1e-2, rtol=1e-2)), \
        "mismatch vs JAX reference"

    print("KERNEL_OK")
</pallas_src>

<mosaic_0001>
module attributes {stable_mosaic.version = 11 : i64} {
  func.func @_generator_kernel(%arg0: memref<128x32xf32, #tpu.memory_space<vmem>>, %arg1: memref<32x128xbf16, #tpu.memory_space<vmem>>, %arg2: memref<1x128xf32, #tpu.memory_space<vmem>>, %arg3: memref<128x256xbf16, #tpu.memory_space<vmem>>, %arg4: memref<4x256x256xbf16, #tpu.memory_space<vmem>>, %arg5: memref<10x256xf32, #tpu.memory_space<vmem>>, %arg6: memref<128x256xf32, #tpu.memory_space<vmem>>) attributes {dimension_semantics = [], scalar_prefetch = 0 : i64, scratch_operands = 0 : i64, tpu.core_type = #tpu.core_type<tc>} {
    %cst = arith.constant 1.000000e+00 : bf16
    %0 = vector.broadcast %cst : bf16 to vector<1x128xbf16>
    %c0 = arith.constant 0 : index
    %c0_0 = arith.constant 0 : index
    %1 = vector.load %arg0[%c0, %c0_0] : memref<128x32xf32, #tpu.memory_space<vmem>>, vector<128x32xf32>
    %2 = arith.truncf %1 : vector<128x32xf32> to vector<128x32xbf16>
    %c0_1 = arith.constant 0 : index
    %c0_2 = arith.constant 0 : index
    %3 = vector.load %arg1[%c0_1, %c0_2] : memref<32x128xbf16, #tpu.memory_space<vmem>>, vector<32x128xbf16>
    %cst_3 = arith.constant dense<0.000000e+00> : vector<128x128xf32>
    %4 = tpu.matmul %2, %3, %cst_3 {dimension_numbers = #tpu.dot_dimension_numbers<[1], [0], [0], [1], [0, 0, 1, 1], [], []>} : vector<128x32xbf16>, vector<32x128xbf16>, vector<128x128xf32> -> vector<128x128xf32>
    %c0_4 = arith.constant 0 : index
    %c0_5 = arith.constant 0 : index
    %5 = vector.load %arg2[%c0_4, %c0_5] : memref<1x128xf32, #tpu.memory_space<vmem>>, vector<1x128xf32>
    %6 = vector.broadcast %5 : vector<1x128xf32> to vector<128x128xf32>
    %7 = arith.addf %4, %6 : vector<128x128xf32>
    %cst_6 = arith.constant 0.000000e+00 : f32
    %8 = vector.broadcast %cst_6 : f32 to vector<128x128xf32>
    %9 = arith.cmpf ogt, %7, %8 : vector<128x128xf32>
    %cst_7 = arith.constant 3.000000e-01 : f32
    %10 = vector.broadcast %cst_7 : f32 to vector<128x128xf32>
    %11 = arith.mulf %10, %7 : vector<128x128xf32>
    %12 = arith.select %9, %7, %11 : vector<128x128xi1>, vector<128x128xf32>
    %c0_8 = arith.constant 0 : index
    %c0_9 = arith.constant 0 : index
    %13 = vector.load %arg3[%c0_8, %c0_9] : memref<128x256xbf16, #tpu.memory_space<vmem>>, vector<128x256xbf16>
    %c0_10 = arith.constant 0 : index
    %c0_11 = arith.constant 0 : index
    %14 = vector.load %arg5[%c0_10, %c0_11] : memref<10x256xf32, #tpu.memory_space<vmem>>, vector<1x256xf32>
    %c1 = arith.constant 1 : index
    %c0_12 = arith.constant 0 : index
    %15 = vector.load %arg5[%c1, %c0_12] : memref<10x256xf32, #tpu.memory_space<vmem>>, vector<1x256xf32>
    %16 = arith.truncf %12 : vector<128x128xf32> to vector<128x128xbf16>
    %cst_13 = arith.constant dense<0.000000e+00> : vector<128x256xf32>
    %17 = tpu.matmul %16, %13, %cst_13 {dimension_numbers = #tpu.dot_dimension_numbers<[1], [0], [0], [1], [0, 0, 1, 1], [], []>} : vector<128x128xbf16>, vector<128x256xbf16>, vector<128x256xf32> -> vector<128x256xf32>
    %18 = arith.truncf %17 : vector<128x256xf32> to vector<128x256xbf16>
    %cst_14 = arith.constant dense<0.000000e+00> : vector<1x256xf32>
    %19 = tpu.matmul %0, %18, %cst_14 {dimension_numbers = #tpu.dot_dimension_numbers<[1], [0], [0], [1], [0, 0, 1, 1], [], []>} : vector<1x128xbf16>, vector<128x256xbf16>, vector<1x256xf32> -> vector<1x256xf32>
    %20 = arith.mulf %18, %18 : vector<128x256xbf16>
    %cst_15 = arith.constant dense<0.000000e+00> : vector<1x256xf32>
    %21 = tpu.matmul %0, %20, %cst_15 {dimension_numbers = #tpu.dot_dimension_numbers<[1], [0], [0], [1], [0, 0, 1, 1], [], []>} : vector<1x128xbf16>, vector<128x256xbf16>, vector<1x256xf32> -> vector<1x256xf32>
    %cst_16 = arith.constant 7.812500e-03 : f32
    %22 = vector.broadcast %cst_16 : f32 to vector<1x256xf32>
    %23 = arith.mulf %19, %22 : vector<1x256xf32>
    %cst_17 = arith.constant 7.812500e-03 : f32
    %24 = vector.broadcast %cst_17 : f32 to vector<1x256xf32>
    %25 = arith.mulf %21, %24 : vector<1x256xf32>
    %26 = arith.mulf %23, %23 : vector<1x256xf32>
    %27 = arith.subf %25, %26 : vector<1x256xf32>
    %cst_18 = arith.constant 0.899999976 : f32
    %28 = vector.broadcast %cst_18 : f32 to vector<1x256xf32>
    %29 = arith.addf %27, %28 : vector<1x256xf32>
    %30 = math.rsqrt %29 : vector<1x256xf32>
    %31 = arith.mulf %14, %30 : vector<1x256xf32>
    %32 = arith.mulf %23, %31 : vector<1x256xf32>
    %33 = arith.subf %15, %32 : vector<1x256xf32>
    %34 = vector.broadcast %31 : vector<1x256xf32> to vector<128x256xf32>
    %35 = arith.mulf %17, %34 : vector<128x256xf32>
    %36 = vector.broadcast %33 : vector<1x256xf32> to vector<128x256xf32>
    %37 = arith.addf %35, %36 : vector<128x256xf32>
    %cst_19 = arith.constant 0.000000e+00 : f32
    %38 = vector.broadcast %cst_19 : f32 to vector<128x256xf32>
    %39 = arith.cmpf ogt, %37, %38 : vector<128x256xf32>
    %cst_20 = arith.constant 3.000000e-01 : f32
    %40 = vector.broadcast %cst_20 : f32 to vector<128x256xf32>
    %41 = arith.mulf %40, %37 : vector<128x256xf32>
    %42 = arith.select %39, %37, %41 : vector<128x256xi1>, vector<128x256xf32>
    %c0_21 = arith.constant 0 : index
    %c0_22 = arith.constant 0 : index
    %c0_23 = arith.constant 0 : index
    %43 = vector.load %arg4[%c0_21, %c0_22, %c0_23] : memref<4x256x256xbf16, #tpu.memory_space<vmem>>, vector<1x256x256xbf16>
    %44 = vector.shape_cast %43 : vector<1x256x256xbf16> to vector<256x256xbf16>
    %c2 = arith.constant 2 : index
    %c0_24 = arith.constant 0 : index
    %45 = vector.load %arg5[%c2, %c0_24] : memref<10x256xf32, #tpu.memory_space<vmem>>, vector<1x256xf32>
    %c3 = arith.constant 3 : index
    %c0_25 = arith.constant 0 : index
    %46 = vector.load %arg5[%c3, %c0_25] : memref<10x256xf32, #tpu.memory_space<vmem>>, vector<1x256xf32>
    %47 = arith.truncf %42 : vector<128x256xf32> to vector<128x256xbf16>
    %cst_26 = arith.constant dense<0.000000e+00> : vector<128x256xf32>
    %48 = tpu.matmul %47, %44, %cst_26 {dimension_numbers = #tpu.dot_dimension_numbers<[1], [0], [0], [1], [0, 0, 1, 1], [], []>} : vector<128x256xbf16>, vector<256x256xbf16>, vector<128x256xf32> -> vector<128x256xf32>
    %49 = arith.truncf %48 : vector<128x256xf32> to vector<128x256xbf16>
    %cst_27 = arith.constant dense<0.000000e+00> : vector<1x256xf32>
    %50 = tpu.matmul %0, %49, %cst_27 {dimension_numbers = #tpu.dot_dimension_numbers<[1], [0], [0], [1], [0, 0, 1, 1], [], []>} : vector<1x128xbf16>, vector<128x256xbf16>, vector<1x256xf32> -> vector<1x256xf32>
    %51 = arith.mulf %49, %49 : vector<128x256xbf16>
    %cst_28 = arith.constant dense<0.000000e+00> : vector<1x256xf32>
    %52 = tpu.matmul %0, %51, %cst_28 {dimension_numbers = #tpu.dot_dimension_numbers<[1], [0], [0], [1], [0, 0, 1, 1], [], []>} : vector<1x128xbf16>, vector<128x256xbf16>, vector<1x256xf32> -> vector<1x256xf32>
    %cst_29 = arith.constant 7.812500e-03 : f32
    %53 = vector.broadcast %cst_29 : f32 to vector<1x256xf32>
    %54 = arith.mulf %50, %53 : vector<1x256xf32>
    %cst_30 = arith.constant 7.812500e-03 : f32
    %55 = vector.broadcast %cst_30 : f32 to vector<1x256xf32>
    %56 = arith.mulf %52, %55 : vector<1x256xf32>
    %57 = arith.mulf %54, %54 : vector<1x256xf32>
    %58 = arith.subf %56, %57 : vector<1x256xf32>
    %cst_31 = arith.constant 0.899999976 : f32
    %59 = vector.broadcast %cst_31 : f32 to vector<1x256xf32>
    %60 = arith.addf %58, %59 : vector<1x256xf32>
    %61 = math.rsqrt %60 : vector<1x256xf32>
    %62 = arith.mulf %45, %61 : vector<1x256xf32>
    %63 = arith.mulf %54, %62 : vector<1x256xf32>
    %64 = arith.subf %46, %63 : vector<1x256xf32>
    %65 = vector.broadcast %62 : vector<1x256xf32> to vector<128x256xf32>
    %66 = arith.mulf %48, %65 : vector<128x256xf32>
    %67 = vector.broadcast %64 : vector<1x256xf32> to vector<128x256xf32>
    %68 = arith.addf %66, %67 : vector<128x256xf32>
    %cst_32 = arith.constant 0.000000e+00 : f32
    %69 = vector.broadcast %cst_32 : f32 to vector<128x256xf32>
    %70 = arith.cmpf ogt, %68, %69 : vector<128x256xf32>
    %cst_33 = arith.constant 3.000000e-01 : f32
    %71 = vector.broadcast %cst_33 : f32 to vector<128x256xf32>
    %72 = arith.mulf %71, %68 : vector<128x256xf32>
    %73 = arith.select %70, %68, %72 : vector<128x256xi1>, vector<128x256xf32>
    %c1_34 = arith.constant 1 : index
    %c0_35 = arith.constant 0 : index
    %c0_36 = arith.constant 0 : index
    %74 = vector.load %arg4[%c1_34, %c0_35, %c0_36] : memref<4x256x256xbf16, #tpu.memory_space<vmem>>, vector<1x256x256xbf16>
    %75 = vector.shape_cast %74 : vector<1x256x256xbf16> to vector<256x256xbf16>
    %c4 = arith.constant 4 : index
    %c0_37 = arith.constant 0 : index
    %76 = vector.load %arg5[%c4, %c0_37] : memref<10x256xf32, #tpu.memory_space<vmem>>, vector<1x256xf32>
    %c5 = arith.constant 5 : index
    %c0_38 = arith.constant 0 : index
    %77 = vector.load %arg5[%c5, %c0_38] : memref<10x256xf32, #tpu.memory_space<vmem>>, vector<1x256xf32>
    %78 = arith.truncf %73 : vector<128x256xf32> to vector<128x256xbf16>
    %cst_39 = arith.constant dense<0.000000e+00> : vector<128x256xf32>
    %79 = tpu.matmul %78, %75, %cst_39 {dimension_numbers = #tpu.dot_dimension_numbers<[1], [0], [0], [1], [0, 0, 1, 1], [], []>} : vector<128x256xbf16>, vector<256x256xbf16>, vector<128x256xf32> -> vector<128x256xf32>
    %80 = arith.truncf %79 : vector<128x256xf32> to vector<128x256xbf16>
    %cst_40 = arith.constant dense<0.000000e+00> : vector<1x256xf32>
    %81 = tpu.matmul %0, %80, %cst_40 {dimension_numbers = #tpu.dot_dimension_numbers<[1], [0], [0], [1], [0, 0, 1, 1], [], []>} : vector<1x128xbf16>, vector<128x256xbf16>, vector<1x256xf32> -> vector<1x256xf32>
    %82 = arith.mulf %80, %80 : vector<128x256xbf16>
    %cst_41 = arith.constant dense<0.000000e+00> : vector<1x256xf32>
    %83 = tpu.matmul %0, %82, %cst_41 {dimension_numbers = #tpu.dot_dimension_numbers<[1], [0], [0], [1], [0, 0, 1, 1], [], []>} : vector<1x128xbf16>, vector<128x256xbf16>, vector<1x256xf32> -> vector<1x256xf32>
    %cst_42 = arith.constant 7.812500e-03 : f32
    %84 = vector.broadcast %cst_42 : f32 to vector<1x256xf32>
    %85 = arith.mulf %81, %84 : vector<1x256xf32>
    %cst_43 = arith.constant 7.812500e-03 : f32
    %86 = vector.broadcast %cst_43 : f32 to vector<1x256xf32>
    %87 = arith.mulf %83, %86 : vector<1x256xf32>
    %88 = arith.mulf %85, %85 : vector<1x256xf32>
    %89 = arith.subf %87, %88 : vector<1x256xf32>
    %cst_44 = arith.constant 0.899999976 : f32
    %90 = vector.broadcast %cst_44 : f32 to vector<1x256xf32>
    %91 = arith.addf %89, %90 : vector<1x256xf32>
    %92 = math.rsqrt %91 : vector<1x256xf32>
    %93 = arith.mulf %76, %92 : vector<1x256xf32>
    %94 = arith.mulf %85, %93 : vector<1x256xf32>
    %95 = arith.subf %77, %94 : vector<1x256xf32>
    %96 = vector.broadcast %93 : vector<1x256xf32> to vector<128x256xf32>
    %97 = arith.mulf %79, %96 : vector<128x256xf32>
    %98 = vector.broadcast %95 : vector<1x256xf32> to vector<128x256xf32>
    %99 = arith.addf %97, %98 : vector<128x256xf32>
    %cst_45 = arith.constant 0.000000e+00 : f32
    %100 = vector.broadcast %cst_45 : f32 to vector<128x256xf32>
    %101 = arith.cmpf ogt, %99, %100 : vector<128x256xf32>
    %cst_46 = arith.constant 3.000000e-01 : f32
    %102 = vector.broadcast %cst_46 : f32 to vector<128x256xf32>
    %103 = arith.mulf %102, %99 : vector<128x256xf32>
    %104 = arith.select %101, %99, %103 : vector<128x256xi1>, vector<128x256xf32>
    %c2_47 = arith.constant 2 : index
    %c0_48 = arith.constant 0 : index
    %c0_49 = arith.constant 0 : index
    %105 = vector.load %arg4[%c2_47, %c0_48, %c0_49] : memref<4x256x256xbf16, #tpu.memory_space<vmem>>, vector<1x256x256xbf16>
    %106 = vector.shape_cast %105 : vector<1x256x256xbf16> to vector<256x256xbf16>
    %c6 = arith.constant 6 : index
    %c0_50 = arith.constant 0 : index
    %107 = vector.load %arg5[%c6, %c0_50] : memref<10x256xf32, #tpu.memory_space<vmem>>, vector<1x256xf32>
    %c7 = arith.constant 7 : index
    %c0_51 = arith.constant 0 : index
    %108 = vector.load %arg5[%c7, %c0_51] : memref<10x256xf32, #tpu.memory_space<vmem>>, vector<1x256xf32>
    %109 = arith.truncf %104 : vector<128x256xf32> to vector<128x256xbf16>
    %cst_52 = arith.constant dense<0.000000e+00> : vector<128x256xf32>
    %110 = tpu.matmul %109, %106, %cst_52 {dimension_numbers = #tpu.dot_dimension_numbers<[1], [0], [0], [1], [0, 0, 1, 1], [], []>} : vector<128x256xbf16>, vector<256x256xbf16>, vector<128x256xf32> -> vector<128x256xf32>
    %111 = arith.truncf %110 : vector<128x256xf32> to vector<128x256xbf16>
    %cst_53 = arith.constant dense<0.000000e+00> : vector<1x256xf32>
    %112 = tpu.matmul %0, %111, %cst_53 {dimension_numbers = #tpu.dot_dimension_numbers<[1], [0], [0], [1], [0, 0, 1, 1], [], []>} : vector<1x128xbf16>, vector<128x256xbf16>, vector<1x256xf32> -> vector<1x256xf32>
    %113 = arith.mulf %111, %111 : vector<128x256xbf16>
    %cst_54 = arith.constant dense<0.000000e+00> : vector<1x256xf32>
    %114 = tpu.matmul %0, %113, %cst_54 {dimension_numbers = #tpu.dot_dimension_numbers<[1], [0], [0], [1], [0, 0, 1, 1], [], []>} : vector<1x128xbf16>, vector<128x256xbf16>, vector<1x256xf32> -> vector<1x256xf32>
    %cst_55 = arith.constant 7.812500e-03 : f32
    %115 = vector.broadcast %cst_55 : f32 to vector<1x256xf32>
    %116 = arith.mulf %112, %115 : vector<1x256xf32>
    %cst_56 = arith.constant 7.812500e-03 : f32
    %117 = vector.broadcast %cst_56 : f32 to vector<1x256xf32>
    %118 = arith.mulf %114, %117 : vector<1x256xf32>
    %119 = arith.mulf %116, %116 : vector<1x256xf32>
    %120 = arith.subf %118, %119 : vector<1x256xf32>
    %cst_57 = arith.constant 0.899999976 : f32
    %121 = vector.broadcast %cst_57 : f32 to vector<1x256xf32>
    %122 = arith.addf %120, %121 : vector<1x256xf32>
    %123 = math.rsqrt %122 : vector<1x256xf32>
    %124 = arith.mulf %107, %123 : vector<1x256xf32>
    %125 = arith.mulf %116, %124 : vector<1x256xf32>
    %126 = arith.subf %108, %125 : vector<1x256xf32>
    %127 = vector.broadcast %124 : vector<1x256xf32> to vector<128x256xf32>
    %128 = arith.mulf %110, %127 : vector<128x256xf32>
    %129 = vector.broadcast %126 : vector<1x256xf32> to vector<128x256xf32>
    %130 = arith.addf %128, %129 : vector<128x256xf32>
    %cst_58 = arith.constant 0.000000e+00 : f32
    %131 = vector.broadcast %cst_58 : f32 to vector<128x256xf32>
    %132 = arith.cmpf ogt, %130, %131 : vector<128x256xf32>
    %cst_59 = arith.constant 3.000000e-01 : f32
    %133 = vector.broadcast %cst_59 : f32 to vector<128x256xf32>
    %134 = arith.mulf %133, %130 : vector<128x256xf32>
    %135 = arith.select %132, %130, %134 : vector<128x256xi1>, vector<128x256xf32>
    %c3_60 = arith.constant 3 : index
    %c0_61 = arith.constant 0 : index
    %c0_62 = arith.constant 0 : index
    %136 = vector.load %arg4[%c3_60, %c0_61, %c0_62] : memref<4x256x256xbf16, #tpu.memory_space<vmem>>, vector<1x256x256xbf16>
    %137 = vector.shape_cast %136 : vector<1x256x256xbf16> to vector<256x256xbf16>
    %c8 = arith.constant 8 : index
    %c0_63 = arith.constant 0 : index
    %138 = vector.load %arg5[%c8, %c0_63] : memref<10x256xf32, #tpu.memory_space<vmem>>, vector<1x256xf32>
    %c9 = arith.constant 9 : index
    %c0_64 = arith.constant 0 : index
    %139 = vector.load %arg5[%c9, %c0_64] : memref<10x256xf32, #tpu.memory_space<vmem>>, vector<1x256xf32>
    %140 = arith.truncf %135 : vector<128x256xf32> to vector<128x256xbf16>
    %cst_65 = arith.constant dense<0.000000e+00> : vector<128x256xf32>
    %141 = tpu.matmul %140, %137, %cst_65 {dimension_numbers = #tpu.dot_dimension_numbers<[1], [0], [0], [1], [0, 0, 1, 1], [], []>} : vector<128x256xbf16>, vector<256x256xbf16>, vector<128x256xf32> -> vector<128x256xf32>
    %142 = arith.truncf %141 : vector<128x256xf32> to vector<128x256xbf16>
    %cst_66 = arith.constant dense<0.000000e+00> : vector<1x256xf32>
    %143 = tpu.matmul %0, %142, %cst_66 {dimension_numbers = #tpu.dot_dimension_numbers<[1], [0], [0], [1], [0, 0, 1, 1], [], []>} : vector<1x128xbf16>, vector<128x256xbf16>, vector<1x256xf32> -> vector<1x256xf32>
    %144 = arith.mulf %142, %142 : vector<128x256xbf16>
    %cst_67 = arith.constant dense<0.000000e+00> : vector<1x256xf32>
    %145 = tpu.matmul %0, %144, %cst_67 {dimension_numbers = #tpu.dot_dimension_numbers<[1], [0], [0], [1], [0, 0, 1, 1], [], []>} : vector<1x128xbf16>, vector<128x256xbf16>, vector<1x256xf32> -> vector<1x256xf32>
    %cst_68 = arith.constant 7.812500e-03 : f32
    %146 = vector.broadcast %cst_68 : f32 to vector<1x256xf32>
    %147 = arith.mulf %143, %146 : vector<1x256xf32>
    %cst_69 = arith.constant 7.812500e-03 : f32
    %148 = vector.broadcast %cst_69 : f32 to vector<1x256xf32>
    %149 = arith.mulf %145, %148 : vector<1x256xf32>
    %150 = arith.mulf %147, %147 : vector<1x256xf32>
    %151 = arith.subf %149, %150 : vector<1x256xf32>
    %cst_70 = arith.constant 0.899999976 : f32
    %152 = vector.broadcast %cst_70 : f32 to vector<1x256xf32>
    %153 = arith.addf %151, %152 : vector<1x256xf32>
    %154 = math.rsqrt %153 : vector<1x256xf32>
    %155 = arith.mulf %138, %154 : vector<1x256xf32>
    %156 = arith.mulf %147, %155 : vector<1x256xf32>
    %157 = arith.subf %139, %156 : vector<1x256xf32>
    %158 = vector.broadcast %155 : vector<1x256xf32> to vector<128x256xf32>
    %159 = arith.mulf %141, %158 : vector<128x256xf32>
    %160 = vector.broadcast %157 : vector<1x256xf32> to vector<128x256xf32>
    %161 = arith.addf %159, %160 : vector<128x256xf32>
    %cst_71 = arith.constant 0.000000e+00 : f32
    %162 = vector.broadcast %cst_71 : f32 to vector<128x256xf32>
    %163 = arith.cmpf ogt, %161, %162 : vector<128x256xf32>
    %cst_72 = arith.constant 3.000000e-01 : f32
    %164 = vector.broadcast %cst_72 : f32 to vector<128x256xf32>
    %165 = arith.mulf %164, %161 : vector<128x256xf32>
    %166 = arith.select %163, %161, %165 : vector<128x256xi1>, vector<128x256xf32>
    %c0_73 = arith.constant 0 : index
    %c0_74 = arith.constant 0 : index
    %167 = vector.load %arg6[%c0_73, %c0_74] : memref<128x256xf32, #tpu.memory_space<vmem>>, vector<128x256xf32>
    tpu.vector_store %arg6[%c0_73, %c0_74], %166 {strides = array<i32>} : memref<128x256xf32, #tpu.memory_space<vmem>>, vector<128x256xf32>,
    return
  }
}

</mosaic_0001>

<llo_original>
// kernel: tpu_custom_call.1
$region0: #{tpu_custom_call.1}
  #allocation0 [shape = 'u32[]', space=smem, size = 0x4, offset = 0x4, fixed_abs, tag = 'smem constant byte address 0x4 - core index']
  #allocation1 [shape = 'u32[144,128]{1,0:T(1,128)}', space=vmem, size = 0x12000, scoped, tag = 'internal scratch']
  %s0 = inlined_call_operand.vmem [shape: f32[128,32], index: 0, kind: input, shape index: {}]
  %s1 = inlined_call_operand.hbm [shape: bf16[32,128], index: 1, kind: input, shape index: {}]
  %s2 = inlined_call_operand.vmem [shape: f32[1,128], index: 2, kind: input, shape index: {}]
  %s3 = inlined_call_operand.vmem [shape: bf16[128,256], index: 3, kind: input, shape index: {}]
  %s4 = inlined_call_operand.hbm [shape: bf16[4,256,256], index: 4, kind: input, shape index: {}]
  %s5 = inlined_call_operand.vmem [shape: f32[10,256], index: 5, kind: input, shape index: {}]
  %s6 = inlined_call_operand.hbm [shape: f32[128,256], index: 6, kind: output, shape index: {}]
  %s7 = sld [smem:[#allocation0]]
  $region42: #{tpu_custom_call.1} parent=0
    _
  %s9 = ssub.s32 1, %s7
  %s10 = scalar_select 0, %s9, %s7
  $region1: #{tpu_custom_call.1} parent=0
    #allocation2 [shape = 'u8[8192]{0}', space=vmem, size = 0x2000, scoped, tag = 'input window, operand 1, single buffered']
    #allocation3 [shape = 's32[1]{0}', space=sflag, size = 0x4, scoped, tag = 'scoped memory for tpu_custom_call.1']
    #allocation4 [shape = 's32[1]{0}', space=sflag, size = 0x4, scoped, tag = 'scoped memory for tpu_custom_call.1']
    #allocation5 [shape = 'u8[524288]{0}', space=vmem, size = 0x80000, scoped, tag = 'input window, operand 4, single buffered']
    #allocation6 [shape = 's32[1]{0}', space=sflag, size = 0x4, scoped, tag = 'scoped memory for tpu_custom_call.1']
    #allocation7 [shape = 'u8[131072]{0}', space=vmem, size = 0x20000, scoped, tag = 'output window, operand 0, single buffered']
    %11 = vsyncpa [#allocation3], 0
    %12 = vsyncpa [#allocation6], 0
    %13 = vsyncpa [#allocation4], 0
    // Predicated region
    $region2: #{tpu_custom_call.1} parent=1 // pred_check
      _
    $region3: #{tpu_custom_call.1} parent=1 // pred_check_branch
      %15 = sbr.rel (0) target = $region5
    $region4: #{tpu_custom_call.1} parent=1 // pred_region
      _
    $region5: #{tpu_custom_call.1} parent=1 // pred_fallthru
      _
    // Predicated region
    $region6: #{tpu_custom_call.1} parent=1 // pred_check
      _
    $region7: #{tpu_custom_call.1} parent=1 // pred_check_branch
      %17 = sbr.rel (0) target = $region9
    $region8: #{tpu_custom_call.1} parent=1 // pred_region
      %s19 = ssub.s32 256, 256
      %20 = vsyncadd [#allocation3], %s19
      %s21 = sshll.u32 [#allocation2], 4
      %s22 = int_to_ptr.vmem [resolvable:$true] %s21
      %27 = dma.hbm_to_vmem [thread:$0]  %s1, 256, %s22, [#allocation3], 64, 64, 4
    $region9: #{tpu_custom_call.1} parent=1 // pred_fallthru
      _
    // Predicated region
    $region10: #{tpu_custom_call.1} parent=1 // pred_check
      _
    $region11: #{tpu_custom_call.1} parent=1 // pred_check_branch
      %29 = sbr.rel (0) target = $region13
    $region12: #{tpu_custom_call.1} parent=1 // pred_region
      _
    $region13: #{tpu_custom_call.1} parent=1 // pred_fallthru
      _
    // Predicated region
    $region14: #{tpu_custom_call.1} parent=1 // pred_check
      _
    $region15: #{tpu_custom_call.1} parent=1 // pred_check_branch
      %31 = sbr.rel (0) target = $region17
    $region16: #{tpu_custom_call.1} parent=1 // pred_region
      _
    $region17: #{tpu_custom_call.1} parent=1 // pred_fallthru
      _
    // Predicated region
    $region18: #{tpu_custom_call.1} parent=1 // pred_check
      _
    $region19: #{tpu_custom_call.1} parent=1 // pred_check_branch
      %33 = sbr.rel (0) target = $region21
    $region20: #{tpu_custom_call.1} parent=1 // pred_region
      %s35 = ssub.s32 16384, 16384
      %36 = vsyncadd [#allocation6], %s35
      %s37 = sshll.u32 [#allocation5], 4
      %s38 = int_to_ptr.vmem [resolvable:$true] %s37
      %43 = dma.hbm_to_vmem [thread:$0]  %s4, 16384, %s38, [#allocation6], 128, 128, 8
    $region21: #{tpu_custom_call.1} parent=1 // pred_fallthru
      _
    // Predicated region
    $region22: #{tpu_custom_call.1} parent=1 // pred_check
      _
    $region23: #{tpu_custom_call.1} parent=1 // pred_check_branch
      %45 = sbr.rel (0) target = $region25
    $region24: #{tpu_custom_call.1} parent=1 // pred_region
      _
    $region25: #{tpu_custom_call.1} parent=1 // pred_fallthru
      _
    // Predicated region
    $region26: #{tpu_custom_call.1} parent=1 // pred_check
      _
    $region27: #{tpu_custom_call.1} parent=1 // pred_check_branch
      %47 = sbr.rel (0) target = $region29
    $region28: #{tpu_custom_call.1} parent=1 // pred_region
      %48 = dma.done [#allocation3], 256
    $region29: #{tpu_custom_call.1} parent=1 // pred_fallthru
      _
    // Predicated region
    $region30: #{tpu_custom_call.1} parent=1 // pred_check
      _
    $region31: #{tpu_custom_call.1} parent=1 // pred_check_branch
      %50 = sbr.rel (0) target = $region33
    $region32: #{tpu_custom_call.1} parent=1 // pred_region
      %51 = dma.done [#allocation6], 16384
    $region33: #{tpu_custom_call.1} parent=1 // pred_fallthru
      _
    %v54 = vld [vmem:[%s0] sm:$0xff]
    %v55 = vld [vmem:[%s0 + $0x8] sm:$0xff]
    %v56 = vld [vmem:[%s0 + $0x10] sm:$0xff]
    %v57 = vld [vmem:[%s0 + $0x18] sm:$0xff]
    %v58 = vld [vmem:[%s0 + $0x20] sm:$0xff]
    %v59 = vld [vmem:[%s0 + $0x28] sm:$0xff]
    %v60 = vld [vmem:[%s0 + $0x30] sm:$0xff]
    %v61 = vld [vmem:[%s0 + $0x38] sm:$0xff]
    %v62 = vld [vmem:[%s0 + $0x40] sm:$0xff]
    %v63 = vld [vmem:[%s0 + $0x48] sm:$0xff]
    %v64 = vld [vmem:[%s0 + $0x50] sm:$0xff]
    %v65 = vld [vmem:[%s0 + $0x58] sm:$0xff]
    %v66 = vld [vmem:[%s0 + $0x60] sm:$0xff]
    %v67 = vld [vmem:[%s0 + $0x68] sm:$0xff]
    %v68 = vld [vmem:[%s0 + $0x70] sm:$0xff]
    %v69 = vld [vmem:[%s0 + $0x78] sm:$0xff]
    %v70 = vpack.c.bf16 %v55, %v54
    %v71 = vpack.c.bf16 %v57, %v56
    %v72 = vpack.c.bf16 %v59, %v58
    %v73 = vpack.c.bf16 %v61, %v60
    %v74 = vpack.c.bf16 %v63, %v62
    %v75 = vpack.c.bf16 %v65, %v64
    %v76 = vpack.c.bf16 %v67, %v66
    %v77 = vpack.c.bf16 %v69, %v68
    %v78 = vld [vmem:[#allocation2] sm:$0xf]
    %v79 = vld [vmem:[#allocation2 + $0x4] sm:$0xf]
    %v80 = vld [vmem:[#allocation2 + $0x8] sm:$0xf]
    %v81 = vld [vmem:[#allocation2 + $0xc] sm:$0xf]
    %v82 = vld [vmem:[%s2] sm:$0x1]
    %v84 = vlaneseq
    %v85 = vshrl.u32 %v84, 7
    %v86 = vsub.s32 0, %v85
    %v87 = vrot.slane %v82, %v86
    %v93 = vunpack.c.l.b16 %v78
    %v94 = vunpack.c.l.b16 %v79
    %v95 = vunpack.c.l.b16 %v80
    %v96 = vunpack.c.l.b16 %v81
    %v97 = vpack.c.b16 %v94, %v93
    %v98 = vpack.c.b16 %v96, %v95
    %vm101 = vcmask 261120
    %v103 = vsel %vm101, %v70, 0
    %v106 = vsel %vm101, %v71, 0
    %v109 = vsel %vm101, %v72, 0
    %v112 = vsel %vm101, %v73, 0
    %v115 = vsel %vm101, %v74, 0
    %v118 = vsel %vm101, %v75, 0
    %v121 = vsel %vm101, %v76, 0
    %v124 = vsel %vm101, %v77, 0
    %126 = vmatprep.subr.bf16.mxu0 0
    %127 = vmatpush1.bf16.msra.mxu0 %v97
    %128 = vmatprep.subr.bf16.mxu0 0
    %129 = vmatpush1.bf16.msra.mxu0 %v98
    %130 = vmatprep.subr.bf16.mxu0 0
    %131 = vmatpush1.bf16.msra.mxu0 0
    %132 = vmatprep.subr.bf16.mxu0 0
    %133 = vmatpush1.bf16.msra.mxu0 0
    %134 = vmatprep.subr.bf16.mxu0 0
    %135 = vmatpush1.bf16.msra.mxu0 0
    %136 = vmatprep.subr.bf16.mxu0 0
    %137 = vmatpush1.bf16.msra.mxu0 0
    %138 = vmatprep.subr.bf16.mxu0 0
    %139 = vmatpush1.bf16.msra.mxu0 0
    %140 = vmatprep.subr.bf16.mxu0 0
    %141 = vmatpush1.bf16.msra.mxu0 0
    %142 = vmatprep.subr.bf16.mxu0 0
    %143 = vmatpush1.bf16.msra.mxu0 0
    %144 = vmatprep.subr.bf16.mxu0 0
    %145 = vmatpush1.bf16.msra.mxu0 0
    %146 = vmatprep.subr.bf16.mxu0 0
    %147 = vmatpush1.bf16.msra.mxu0 0
    %148 = vmatprep.subr.bf16.mxu0 0
    %149 = vmatpush1.bf16.msra.mxu0 0
    %150 = vmatprep.subr.bf16.mxu0 0
    %151 = vmatpush1.bf16.msra.mxu0 0
    %152 = vmatprep.subr.bf16.mxu0 0
    %153 = vmatpush1.bf16.msra.mxu0 0
    %154 = vmatprep.subr.bf16.mxu0 0
    %155 = vmatpush1.bf16.msra.mxu0 0
    %156 = vmatprep.subr.bf16.mxu0 0
    %157 = vmatpush1.bf16.msra.mxu0 0
    %158 = vmatprep.mubr.bf16.mxu0 0
    %159 = vmatmul.mubr.bf16.gmra.mrb[0].mxu0 %v103
    %v160 = vpop.f32.mrb[0].mxu0
    %v161 = vadd.f32 %v87, %v160
    %v162 = vpop.f32.mrb[0].mxu0
    %v163 = vpop.f32.mrb[0].mxu0
    %v164 = vadd.f32 %v87, %v163
    %v165 = vpop.f32.mrb[0].mxu0
    %166 = vmatprep.mubr.bf16.mxu0 0
    %167 = vmatmul.mubr.bf16.gmra.mrb[0].mxu0 %v106
    %v168 = vpop.f32.mrb[0].mxu0
    %v169 = vadd.f32 %v87, %v168
    %v170 = vpop.f32.mrb[0].mxu0
    %v171 = vpop.f32.mrb[0].mxu0
    %v172 = vadd.f32 %v87, %v171
    %v173 = vpop.f32.mrb[0].mxu0
    %174 = vmatprep.mubr.bf16.mxu0 0
    %175 = vmatmul.mubr.bf16.gmra.mrb[0].mxu0 %v109
    %v176 = vpop.f32.mrb[0].mxu0
    %v177 = vadd.f32 %v87, %v176
    %v178 = vpop.f32.mrb[0].mxu0
    %v179 = vpop.f32.mrb[0].mxu0
    %v180 = vadd.f32 %v87, %v179
    %v181 = vpop.f32.mrb[0].mxu0
    %182 = vmatprep.mubr.bf16.mxu0 0
    %183 = vmatmul.mubr.bf16.gmra.mrb[0].mxu0 %v112
    %v184 = vpop.f32.mrb[0].mxu0
    %v185 = vadd.f32 %v87, %v184
    %v186 = vpop.f32.mrb[0].mxu0
    %v187 = vpop.f32.mrb[0].mxu0
    %v188 = vadd.f32 %v87, %v187
    %v189 = vpop.f32.mrb[0].mxu0
    %190 = vmatprep.mubr.bf16.mxu0 0
    %191 = vmatmul.mubr.bf16.gmra.mrb[0].mxu0 %v115
    %v192 = vpop.f32.mrb[0].mxu0
    %v193 = vadd.f32 %v87, %v192
    %v194 = vpop.f32.mrb[0].mxu0
    %v195 = vpop.f32.mrb[0].mxu0
    %v196 = vadd.f32 %v87, %v195
    %v197 = vpop.f32.mrb[0].mxu0
    %198 = vmatprep.mubr.bf16.mxu0 0
    %199 = vmatmul.mubr.bf16.gmra.mrb[0].mxu0 %v118
    %v200 = vpop.f32.mrb[0].mxu0
    %v201 = vadd.f32 %v87, %v200
    %v202 = vpop.f32.mrb[0].mxu0
    %v203 = vpop.f32.mrb[0].mxu0
    %v204 = vadd.f32 %v87, %v203
    %v205 = vpop.f32.mrb[0].mxu0
    %206 = vmatprep.mubr.bf16.mxu0 0
    %207 = vmatmul.mubr.bf16.gmra.mrb[0].mxu0 %v121
    %v208 = vpop.f32.mrb[0].mxu0
    %v209 = vadd.f32 %v87, %v208
    %v210 = vpop.f32.mrb[0].mxu0
    %v211 = vpop.f32.mrb[0].mxu0
    %v212 = vadd.f32 %v87, %v211
    %v213 = vpop.f32.mrb[0].mxu0
    %214 = vmatprep.mubr.bf16.mxu0 0
    %215 = vmatmul.mubr.bf16.gmra.mrb[0].mxu0 %v124
    %v216 = vpop.f32.mrb[0].mxu0
    %v217 = vadd.f32 %v87, %v216
    %v218 = vpop.f32.mrb[0].mxu0
    %v219 = vpop.f32.mrb[0].mxu0
    %v220 = vadd.f32 %v87, %v219
    %v221 = vpop.f32.mrb[0].mxu0
    %222 = vdwg.mxu0
    %vm223 = vcmp.gt.f32.partialorder %v161, 0.0
    %vm224 = vcmp.gt.f32.partialorder %v164, 0.0
    %vm225 = vcmp.gt.f32.partialorder %v169, 0.0
    %vm226 = vcmp.gt.f32.partialorder %v172, 0.0
    %vm227 = vcmp.gt.f32.partialorder %v177, 0.0
    %vm228 = vcmp.gt.f32.partialorder %v180, 0.0
    %vm229 = vcmp.gt.f32.partialorder %v185, 0.0
    %vm230 = vcmp.gt.f32.partialorder %v188, 0.0
    %vm231 = vcmp.gt.f32.partialorder %v193, 0.0
    %vm232 = vcmp.gt.f32.partialorder %v196, 0.0
    %vm233 = vcmp.gt.f32.partialorder %v201, 0.0
    %vm234 = vcmp.gt.f32.partialorder %v204, 0.0
    %vm235 = vcmp.gt.f32.partialorder %v209, 0.0
    %vm236 = vcmp.gt.f32.partialorder %v212, 0.0
    %vm237 = vcmp.gt.f32.partialorder %v217, 0.0
    %vm238 = vcmp.gt.f32.partialorder %v220, 0.0
    %v239 = vmul.f32 %v161, 0.3
    %v240 = vmul.f32 %v164, 0.3
    %v241 = vmul.f32 %v169, 0.3
    %v242 = vmul.f32 %v172, 0.3
    %v243 = vmul.f32 %v177, 0.3
    %v244 = vmul.f32 %v180, 0.3
    %v245 = vmul.f32 %v185, 0.3
    %v246 = vmul.f32 %v188, 0.3
    %v247 = vmul.f32 %v193, 0.3
    %v248 = vmul.f32 %v196, 0.3
    %v249 = vmul.f32 %v201, 0.3
    %v250 = vmul.f32 %v204, 0.3
    %v251 = vmul.f32 %v209, 0.3
    %v252 = vmul.f32 %v212, 0.3
    %v253 = vmul.f32 %v217, 0.3
    %v254 = vmul.f32 %v220, 0.3
    %v255 = vsel %vm223, %v161, %v239
    %v256 = vsel %vm224, %v164, %v240
    %v257 = vsel %vm225, %v169, %v241
    %v258 = vsel %vm226, %v172, %v242
    %v259 = vsel %vm227, %v177, %v243
    %v260 = vsel %vm228, %v180, %v244
    %v261 = vsel %vm229, %v185, %v245
    %v262 = vsel %vm230, %v188, %v246
    %v263 = vsel %vm231, %v193, %v247
    %v264 = vsel %vm232, %v196, %v248
    %v265 = vsel %vm233, %v201, %v249
    %v266 = vsel %vm234, %v204, %v250
    %v267 = vsel %vm235, %v209, %v251
    %v268 = vsel %vm236, %v212, %v252
    %v269 = vsel %vm237, %v217, %v253
    %v270 = vsel %vm238, %v220, %v254
    %v271 = vld [vmem:[%s3] sm:$0xff]
    %v272 = vld [vmem:[%s3 + $0x8] sm:$0xff]
    %v273 = vld [vmem:[%s3 + $0x10] sm:$0xff]
    %v274 = vld [vmem:[%s3 + $0x18] sm:$0xff]
    %v275 = vld [vmem:[%s3 + $0x20] sm:$0xff]
    %v276 = vld [vmem:[%s3 + $0x28] sm:$0xff]
    %v277 = vld [vmem:[%s3 + $0x30] sm:$0xff]
    %v278 = vld [vmem:[%s3 + $0x38] sm:$0xff]
    %v279 = vld [vmem:[%s3 + $0x40] sm:$0xff]
    %v280 = vld [vmem:[%s3 + $0x48] sm:$0xff]
    %v281 = vld [vmem:[%s3 + $0x50] sm:$0xff]
    %v282 = vld [vmem:[%s3 + $0x58] sm:$0xff]
    %v283 = vld [vmem:[%s3 + $0x60] sm:$0xff]
    %v284 = vld [vmem:[%s3 + $0x68] sm:$0xff]
    %v285 = vld [vmem:[%s3 + $0x70] sm:$0xff]
    %v286 = vld [vmem:[%s3 + $0x78] sm:$0xff]
    %v287 = vld [vmem:[%s5] ss:$8 sm:$0x3]
    %s288 = scalar_lea.vmem %s5, 1
    %v289 = vld [vmem:[%s288] ss:$8 sm:$0x3]
    %v290 = vpack.c.bf16 %v256, %v255
    %v291 = vpack.c.bf16 %v258, %v257
    %v292 = vpack.c.bf16 %v260, %v259
    %v293 = vpack.c.bf16 %v262, %v261
    %v294 = vpack.c.bf16 %v264, %v263
    %v295 = vpack.c.bf16 %v266, %v265
    %v296 = vpack.c.bf16 %v268, %v267
    %v297 = vpack.c.bf16 %v270, %v269
    %v314 = vunpack.c.l.b16 %v271
    %v315 = vunpack.c.h.b16 %v271
    %v316 = vunpack.c.l.b16 %v272
    %v317 = vunpack.c.h.b16 %v272
    %v318 = vunpack.c.l.b16 %v273
    %v319 = vunpack.c.h.b16 %v273
    %v320 = vunpack.c.l.b16 %v274
    %v321 = vunpack.c.h.b16 %v274
    %v322 = vunpack.c.l.b16 %v275
    %v323 = vunpack.c.h.b16 %v275
    %v324 = vunpack.c.l.b16 %v276
    %v325 = vunpack.c.h.b16 %v276
    %v326 = vunpack.c.l.b16 %v277
    %v327 = vunpack.c.h.b16 %v277
    %v328 = vunpack.c.l.b16 %v278
    %v329 = vunpack.c.h.b16 %v278
    %v330 = vunpack.c.l.b16 %v279
    %v331 = vunpack.c.h.b16 %v279
    %v332 = vunpack.c.l.b16 %v280
    %v333 = vunpack.c.h.b16 %v280
    %v334 = vunpack.c.l.b16 %v281
    %v335 = vunpack.c.h.b16 %v281
    %v336 = vunpack.c.l.b16 %v282
    %v337 = vunpack.c.h.b16 %v282
    %v338 = vunpack.c.l.b16 %v283
    %v339 = vunpack.c.h.b16 %v283
    %v340 = vunpack.c.l.b16 %v284
    %v341 = vunpack.c.h.b16 %v284
    %v342 = vunpack.c.l.b16 %v285
    %v343 = vunpack.c.h.b16 %v285
    %v344 = vunpack.c.l.b16 %v286
    %v345 = vunpack.c.h.b16 %v286
    %v346 = vpack.c.b16 %v316, %v314
    %v347 = vpack.c.b16 %v317, %v315
    %v348 = vpack.c.b16 %v320, %v318
    %v349 = vpack.c.b16 %v321, %v319
    %v350 = vpack.c.b16 %v324, %v322
    %v351 = vpack.c.b16 %v325, %v323
    %v352 = vpack.c.b16 %v328, %v326
    %v353 = vpack.c.b16 %v329, %v327
    %v354 = vpack.c.b16 %v332, %v330
    %v355 = vpack.c.b16 %v333, %v331
    %v356 = vpack.c.b16 %v336, %v334
    %v357 = vpack.c.b16 %v337, %v335
    %v358 = vpack.c.b16 %v340, %v338
    %v359 = vpack.c.b16 %v341, %v339
    %v360 = vpack.c.b16 %v344, %v342
    %v361 = vpack.c.b16 %v345, %v343
    %378 = vmatprep.subr.bf16.mxu0 %v347
    %379 = vmatpush1.bf16.msra.mxu0 %v346
    %380 = vmatprep.subr.bf16.mxu0 %v349
    %381 = vmatpush1.bf16.msra.mxu0 %v348
    %382 = vmatprep.subr.bf16.mxu0 %v351
    %383 = vmatpush1.bf16.msra.mxu0 %v350
    %384 = vmatprep.subr.bf16.mxu0 %v353
    %385 = vmatpush1.bf16.msra.mxu0 %v352
    %386 = vmatprep.subr.bf16.mxu0 %v355
    %387 = vmatpush1.bf16.msra.mxu0 %v354
    %388 = vmatprep.subr.bf16.mxu0 %v357
    %389 = vmatpush1.bf16.msra.mxu0 %v356
    %390 = vmatprep.subr.bf16.mxu0 %v359
    %391 = vmatpush1.bf16.msra.mxu0 %v358
    %392 = vmatprep.subr.bf16.mxu0 %v361
    %393 = vmatpush1.bf16.msra.mxu0 %v360
    %394 = vmatprep.subr.bf16.mxu0 0
    %395 = vmatpush1.bf16.msra.mxu0 0
    %396 = vmatprep.subr.bf16.mxu0 0
    %397 = vmatpush1.bf16.msra.mxu0 0
    %398 = vmatprep.subr.bf16.mxu0 0
    %399 = vmatpush1.bf16.msra.mxu0 0
    %400 = vmatprep.subr.bf16.mxu0 0
    %401 = vmatpush1.bf16.msra.mxu0 0
    %402 = vmatprep.subr.bf16.mxu0 0
    %403 = vmatpush1.bf16.msra.mxu0 0
    %404 = vmatprep.subr.bf16.mxu0 0
    %405 = vmatpush1.bf16.msra.mxu0 0
    %406 = vmatprep.subr.bf16.mxu0 0
    %407 = vmatpush1.bf16.msra.mxu0 0
    %408 = vmatprep.subr.bf16.mxu0 0
    %409 = vmatpush1.bf16.msra.mxu0 0
    %410 = vmatprep.mubr.bf16.mxu0 0
    %411 = vmatmul.mubr.bf16.gmra.mrb[0].mxu0 %v290
    %v412 = vpop.f32.mrb[0].mxu0
    %v413 = vadd.f32 0.0, %v412
    %v414 = vpop.f32.mrb[0].mxu0
    %v415 = vadd.f32 0.0, %v414
    %v416 = vpop.f32.mrb[0].mxu0
    %v417 = vadd.f32 0.0, %v416
    %v418 = vpop.f32.mrb[0].mxu0
    %v419 = vadd.f32 0.0, %v418
    %420 = vmatprep.mubr.bf16.mxu0 0
    %421 = vmatmul.mubr.bf16.gmra.mrb[0].mxu0 %v291
    %v422 = vpop.f32.mrb[0].mxu0
    %v423 = vadd.f32 0.0, %v422
    %v424 = vpop.f32.mrb[0].mxu0
    %v425 = vadd.f32 0.0, %v424
    %v426 = vpop.f32.mrb[0].mxu0
    %v427 = vadd.f32 0.0, %v426
    %v428 = vpop.f32.mrb[0].mxu0
    %v429 = vadd.f32 0.0, %v428
    %430 = vmatprep.mubr.bf16.mxu0 0
    %431 = vmatmul.mubr.bf16.gmra.mrb[0].mxu0 %v292
    %v432 = vpop.f32.mrb[0].mxu0
    %v433 = vadd.f32 0.0, %v432
    %v434 = vpop.f32.mrb[0].mxu0
    %v435 = vadd.f32 0.0, %v434
    %v436 = vpop.f32.mrb[0].mxu0
    %v437 = vadd.f32 0.0, %v436
    %v438 = vpop.f32.mrb[0].mxu0
    %v439 = vadd.f32 0.0, %v438
    %440 = vmatprep.mubr.bf16.mxu0 0
    %441 = vmatmul.mubr.bf16.gmra.mrb[0].mxu0 %v293
    %v442 = vpop.f32.mrb[0].mxu0
    %v443 = vadd.f32 0.0, %v442
    %v444 = vpop.f32.mrb[0].mxu0
    %v445 = vadd.f32 0.0, %v444
    %v446 = vpop.f32.mrb[0].mxu0
    %v447 = vadd.f32 0.0, %v446
    %v448 = vpop.f32.mrb[0].mxu0
    %v449 = vadd.f32 0.0, %v448
    %450 = vmatprep.mubr.bf16.mxu0 0
    %451 = vmatmul.mubr.bf16.gmra.mrb[0].mxu0 %v294
    %v452 = vpop.f32.mrb[0].mxu0
    %v453 = vadd.f32 0.0, %v452
    %v454 = vpop.f32.mrb[0].mxu0
    %v455 = vadd.f32 0.0, %v454
    %v456 = vpop.f32.mrb[0].mxu0
    %v457 = vadd.f32 0.0, %v456
    %v458 = vpop.f32.mrb[0].mxu0
    %v459 = vadd.f32 0.0, %v458
    %460 = vmatprep.mubr.bf16.mxu0 0
    %461 = vmatmul.mubr.bf16.gmra.mrb[0].mxu0 %v295
    %v462 = vpop.f32.mrb[0].mxu0
    %v463 = vadd.f32 0.0, %v462
    %v464 = vpop.f32.mrb[0].mxu0
    %v465 = vadd.f32 0.0, %v464
    %v466 = vpop.f32.mrb[0].mxu0
    %v467 = vadd.f32 0.0, %v466
    %v468 = vpop.f32.mrb[0].mxu0
    %v469 = vadd.f32 0.0, %v468
    %470 = vmatprep.mubr.bf16.mxu0 0
    %471 = vmatmul.mubr.bf16.gmra.mrb[0].mxu0 %v296
    %v472 = vpop.f32.mrb[0].mxu0
    %v473 = vadd.f32 0.0, %v472
    %v474 = vpop.f32.mrb[0].mxu0
    %v475 = vadd.f32 0.0, %v474
    %v476 = vpop.f32.mrb[0].mxu0
    %v477 = vadd.f32 0.0, %v476
    %v478 = vpop.f32.mrb[0].mxu0
    %v479 = vadd.f32 0.0, %v478
    %480 = vmatprep.mubr.bf16.mxu0 0
    %481 = vmatmul.mubr.bf16.gmra.mrb[0].mxu0 %v297
    %v482 = vpop.f32.mrb[0].mxu0
    %v483 = vadd.f32 0.0, %v482
    %v484 = vpop.f32.mrb[0].mxu0
    %v485 = vadd.f32 0.0, %v484
    %v486 = vpop.f32.mrb[0].mxu0
    %v487 = vadd.f32 0.0, %v486
    %v488 = vpop.f32.mrb[0].mxu0
    %v489 = vadd.f32 0.0, %v488
    %490 = vdwg.mxu0
    %v491 = vpack.c.bf16 %v417, %v413
    %v492 = vpack.c.bf16 %v419, %v415
    %v493 = vpack.c.bf16 %v427, %v423
    %v494 = vpack.c.bf16 %v429, %v425
    %v495 = vpack.c.bf16 %v437, %v433
    %v496 = vpack.c.bf16 %v439, %v435
    %v497 = vpack.c.bf16 %v447, %v443
    %v498 = vpack.c.bf16 %v449, %v445
    %v499 = vpack.c.bf16 %v457, %v453
    %v500 = vpack.c.bf16 %v459, %v455
    %v501 = vpack.c.bf16 %v467, %v463
    %v502 = vpack.c.bf16 %v469, %v465
    %v503 = vpack.c.bf16 %v477, %v473
    %v504 = vpack.c.bf16 %v479, %v475
    %v505 = vpack.c.bf16 %v487, %v483
    %v506 = vpack.c.bf16 %v489, %v485
    %507 = vmatprep.subr.bf16.mxu0 %v492
    %508 = vmatpush1.bf16.msra.mxu0 %v491
    %509 = vmatprep.subr.bf16.mxu0 %v494
    %510 = vmatpush1.bf16.msra.mxu0 %v493
    %511 = vmatprep.subr.bf16.mxu0 %v496
    %512 = vmatpush1.bf16.msra.mxu0 %v495
    %513 = vmatprep.subr.bf16.mxu0 %v498
    %514 = vmatpush1.bf16.msra.mxu0 %v497
    %515 = vmatprep.subr.bf16.mxu0 %v500
    %516 = vmatpush1.bf16.msra.mxu0 %v499
    %517 = vmatprep.subr.bf16.mxu0 %v502
    %518 = vmatpush1.bf16.msra.mxu0 %v501
    %519 = vmatprep.subr.bf16.mxu0 %v504
    %520 = vmatpush1.bf16.msra.mxu0 %v503
    %521 = vmatprep.subr.bf16.mxu0 %v506
    %522 = vmatpush1.bf16.msra.mxu0 %v505
    %523 = vmatprep.subr.bf16.mxu0 0
    %524 = vmatpush1.bf16.msra.mxu0 0
    %525 = vmatprep.subr.bf16.mxu0 0
    %526 = vmatpush1.bf16.msra.mxu0 0
    %527 = vmatprep.subr.bf16.mxu0 0
    %528 = vmatpush1.bf16.msra.mxu0 0
    %529 = vmatprep.subr.bf16.mxu0 0
    %530 = vmatpush1.bf16.msra.mxu0 0
    %531 = vmatprep.subr.bf16.mxu0 0
    %532 = vmatpush1.bf16.msra.mxu0 0
    %533 = vmatprep.subr.bf16.mxu0 0
    %534 = vmatpush1.bf16.msra.mxu0 0
    %535 = vmatprep.subr.bf16.mxu0 0
    %536 = vmatpush1.bf16.msra.mxu0 0
    %537 = vmatprep.subr.bf16.mxu0 0
    %538 = vmatpush1.bf16.msra.mxu0 0
    %539 = vmatprep.mubr.bf16.mxu0 0
    %540 = vmatmul.mubr.bf16.gmra.mrb[0].mxu0 1065369472
    %v541 = vpop.f32.mrb[0].mxu0
    %v542 = vadd.f32 0.0, %v541
    %v543 = vpop.f32.mrb[0].mxu0
    %v544 = vadd.f32 0.0, %v543
    %v545 = vpop.f32.mrb[0].mxu0
    %v546 = vpop.f32.mrb[0].mxu0
    %547 = vdwg.mxu0
    %v548 = vmul.bf16 %v491, %v491
    %v549 = vmul.bf16 %v492, %v492
    %v550 = vmul.bf16 %v493, %v493
    %v551 = vmul.bf16 %v494, %v494
    %v552 = vmul.bf16 %v495, %v495
    %v553 = vmul.bf16 %v496, %v496
    %v554 = vmul.bf16 %v497, %v497
    %v555 = vmul.bf16 %v498, %v498
    %v556 = vmul.bf16 %v499, %v499
    %v557 = vmul.bf16 %v500, %v500
    %v558 = vmul.bf16 %v501, %v501
    %v559 = vmul.bf16 %v502, %v502
    %v560 = vmul.bf16 %v503, %v503
    %v561 = vmul.bf16 %v504, %v504
    %v562 = vmul.bf16 %v505, %v505
    %v563 = vmul.bf16 %v506, %v506
    %564 = vmatprep.subr.bf16.mxu0 %v549
    %565 = vmatpush1.bf16.msra.mxu0 %v548
    %566 = vmatprep.subr.bf16.mxu0 %v551
    %567 = vmatpush1.bf16.msra.mxu0 %v550
    %568 = vmatprep.subr.bf16.mxu0 %v553
    %569 = vmatpush1.bf16.msra.mxu0 %v552
    %570 = vmatprep.subr.bf16.mxu0 %v555
    %571 = vmatpush1.bf16.msra.mxu0 %v554
    %572 = vmatprep.subr.bf16.mxu0 %v557
    %573 = vmatpush1.bf16.msra.mxu0 %v556
    %574 = vmatprep.subr.bf16.mxu0 %v559
    %575 = vmatpush1.bf16.msra.mxu0 %v558
    %576 = vmatprep.subr.bf16.mxu0 %v561
    %577 = vmatpush1.bf16.msra.mxu0 %v560
    %578 = vmatprep.subr.bf16.mxu0 %v563
    %579 = vmatpush1.bf16.msra.mxu0 %v562
    %580 = vmatprep.subr.bf16.mxu0 0
    %581 = vmatpush1.bf16.msra.mxu0 0
    %582 = vmatprep.subr.bf16.mxu0 0
    %583 = vmatpush1.bf16.msra.mxu0 0
    %584 = vmatprep.subr.bf16.mxu0 0
    %585 = vmatpush1.bf16.msra.mxu0 0
    %586 = vmatprep.subr.bf16.mxu0 0
    %587 = vmatpush1.bf16.msra.mxu0 0
    %588 = vmatprep.subr.bf16.mxu0 0
    %589 = vmatpush1.bf16.msra.mxu0 0
    %590 = vmatprep.subr.bf16.mxu0 0
    %591 = vmatpush1.bf16.msra.mxu0 0
    %592 = vmatprep.subr.bf16.mxu0 0
    %593 = vmatpush1.bf16.msra.mxu0 0
    %594 = vmatprep.subr.bf16.mxu0 0
    %595 = vmatpush1.bf16.msra.mxu0 0
    %596 = vmatprep.mubr.bf16.mxu0 0
    %597 = vmatmul.mubr.bf16.gmra.mrb[0].mxu0 1065369472
    %v598 = vpop.f32.mrb[0].mxu0
    %v599 = vadd.f32 0.0, %v598
    %v600 = vpop.f32.mrb[0].mxu0
    %v601 = vadd.f32 0.0, %v600
    %v602 = vpop.f32.mrb[0].mxu0
    %v603 = vpop.f32.mrb[0].mxu0
    %604 = vdwg.mxu0
    %v605 = vmul.f32 %v542, 0.0078125
    %v606 = vmul.f32 %v544, 0.0078125
    %v607 = vmul.f32 %v599, 0.0078125
    %v608 = vmul.f32 %v601, 0.0078125
    %v609 = vmul.f32 %v605, %v605
    %v610 = vmul.f32 %v606, %v606
    %v611 = vsub.f32 %v607, %v609
    %v612 = vsub.f32 %v608, %v610
    %v613 = vadd.f32 %v611, 0.9
    %v614 = vadd.f32 %v612, 0.9
    %v615 = vrsqrt.pop %v613
    %v616 = vrsqrt.pop %v614
    %v619 = vcombine.low %v615, %v616
    %v621 = vunpack.c.l.s4 1966171168
    %v622 = vunpack.c.0.s8 %v621
    %v623 = vlaneseq
    %v624 = vshrl.u32 %v623, 7
    %v625 = vsub.s32 %v622, %v624
    %v626 = vrot.slane %v619, %v625
    %v628 = vunpack.c.l.s4 1966171168
    %v629 = vunpack.c.0.s8 %v628
    %v630 = vlaneseq
    %v631 = vshrl.u32 %v630, 7
    %v632 = vsub.s32 %v629, %v631
    %v633 = vrot.slane %v626, %v632
    %v635 = vmul.f32 %v287, %v633
    %v637 = vlaneseq
    %v638 = vshrl.u32 %v637, 7
    %v639 = vsub.s32 0, %v638
    %v640 = vrot.slane %v635, %v639
    %v641 = vlaneseq
    %v642 = vshrl.u32 %v641, 7
    %v643 = vsub.s32 1, %v642
    %v644 = vrot.slane %v635, %v643
    %v647 = vmul.f32 %v605, %v640
    %v648 = vmul.f32 %v606, %v644
    %v651 = vcombine.low %v647, %v648
    %v653 = vunpack.c.l.s4 1966171168
    %v654 = vunpack.c.0.s8 %v653
    %v655 = vlaneseq
    %v656 = vshrl.u32 %v655, 7
    %v657 = vsub.s32 %v654, %v656
    %v658 = vrot.slane %v651, %v657
    %v660 = vunpack.c.l.s4 1966171168
    %v661 = vunpack.c.0.s8 %v660
    %v662 = vlaneseq
    %v663 = vshrl.u32 %v662, 7
    %v664 = vsub.s32 %v661, %v663
    %v665 = vrot.slane %v658, %v664
    %v667 = vsub.f32 %v289, %v665
    %v668 = vmul.f32 %v413, %v640
    %v669 = vmul.f32 %v415, %v644
    %v670 = vmul.f32 %v417, %v640
    %v671 = vmul.f32 %v419, %v644
    %v672 = vmul.f32 %v423, %v640
    %v673 = vmul.f32 %v425, %v644
    %v674 = vmul.f32 %v427, %v640
    %v675 = vmul.f32 %v429, %v644
    %v676 = vmul.f32 %v433, %v640
    %v677 = vmul.f32 %v435, %v644
    %v678 = vmul.f32 %v437, %v640
    %v679 = vmul.f32 %v439, %v644
    %v680 = vmul.f32 %v443, %v640
    %v681 = vmul.f32 %v445, %v644
    %v682 = vmul.f32 %v447, %v640
    %v683 = vmul.f32 %v449, %v644
    %v684 = vmul.f32 %v453, %v640
    %v685 = vmul.f32 %v455, %v644
    %v686 = vmul.f32 %v457, %v640
    %v687 = vmul.f32 %v459, %v644
    %v688 = vmul.f32 %v463, %v640
    %v689 = vmul.f32 %v465, %v644
    %v690 = vmul.f32 %v467, %v640
    %v691 = vmul.f32 %v469, %v644
    %v692 = vmul.f32 %v473, %v640
    %v693 = vmul.f32 %v475, %v644
    %v694 = vmul.f32 %v477, %v640
    %v695 = vmul.f32 %v479, %v644
    %v696 = vmul.f32 %v483, %v640
    %v697 = vmul.f32 %v485, %v644
    %v698 = vmul.f32 %v487, %v640
    %v699 = vmul.f32 %v489, %v644
    %v701 = vlaneseq
    %v702 = vshrl.u32 %v701, 7
    %v703 = vsub.s32 0, %v702
    %v704 = vrot.slane %v667, %v703
    %v705 = vlaneseq
    %v706 = vshrl.u32 %v705, 7
    %v707 = vsub.s32 1, %v706
    %v708 = vrot.slane %v667, %v707
    %v711 = vadd.f32 %v668, %v704
    %v712 = vadd.f32 %v669, %v708
    %v713 = vadd.f32 %v670, %v704
    %v714 = vadd.f32 %v671, %v708
    %v715 = vadd.f32 %v672, %v704
    %v716 = vadd.f32 %v673, %v708
    %v717 = vadd.f32 %v674, %v704
    %v718 = vadd.f32 %v675, %v708
    %v719 = vadd.f32 %v676, %v704
    %v720 = vadd.f32 %v677, %v708
    %v721 = vadd.f32 %v678, %v704
    %v722 = vadd.f32 %v679, %v708
    %v723 = vadd.f32 %v680, %v704
    %v724 = vadd.f32 %v681, %v708
    %v725 = vadd.f32 %v682, %v704
    %v726 = vadd.f32 %v683, %v708
    %v727 = vadd.f32 %v684, %v704
    %v728 = vadd.f32 %v685, %v708
    %v729 = vadd.f32 %v686, %v704
    %v730 = vadd.f32 %v687, %v708
    %v731 = vadd.f32 %v688, %v704
    %v732 = vadd.f32 %v689, %v708
    %v733 = vadd.f32 %v690, %v704
    %v734 = vadd.f32 %v691, %v708
    %v735 = vadd.f32 %v692, %v704
    %v736 = vadd.f32 %v693, %v708
    %v737 = vadd.f32 %v694, %v704
    %v738 = vadd.f32 %v695, %v708
    %v739 = vadd.f32 %v696, %v704
    %v740 = vadd.f32 %v697, %v708
    %v741 = vadd.f32 %v698, %v704
    %v742 = vadd.f32 %v699, %v708
    %vm743 = vcmp.gt.f32.partialorder %v711, 0.0
    %vm744 = vcmp.gt.f32.partialorder %v712, 0.0
    %vm745 = vcmp.gt.f32.partialorder %v713, 0.0
    %vm746 = vcmp.gt.f32.partialorder %v714, 0.0
    %vm747 = vcmp.gt.f32.partialorder %v715, 0.0
    %vm748 = vcmp.gt.f32.partialorder %v716, 0.0
    %vm749 = vcmp.gt.f32.partialorder %v717, 0.0
    %vm750 = vcmp.gt.f32.partialorder %v718, 0.0
    %vm751 = vcmp.gt.f32.partialorder %v719, 0.0
    %vm752 = vcmp.gt.f32.partialorder %v720, 0.0
    %vm753 = vcmp.gt.f32.partialorder %v721, 0.0
    %vm754 = vcmp.gt.f32.partialorder %v722, 0.0
    %vm755 = vcmp.gt.f32.partialorder %v723, 0.0
    %vm756 = vcmp.gt.f32.partialorder %v724, 0.0
    %vm757 = vcmp.gt.f32.partialorder %v725, 0.0
    %vm758 = vcmp.gt.f32.partialorder %v726, 0.0
    %vm759 = vcmp.gt.f32.partialorder %v727, 0.0
    %vm760 = vcmp.gt.f32.partialorder %v728, 0.0
    %vm761 = vcmp.gt.f32.partialorder %v729, 0.0
    %vm762 = vcmp.gt.f32.partialorder %v730, 0.0
    %vm763 = vcmp.gt.f32.partialorder %v731, 0.0
    %vm764 = vcmp.gt.f32.partialorder %v732, 0.0
    %vm765 = vcmp.gt.f32.partialorder %v733, 0.0
    %vm766 = vcmp.gt.f32.partialorder %v734, 0.0
    %vm767 = vcmp.gt.f32.partialorder %v735, 0.0
    %vm768 = vcmp.gt.f32.partialorder %v736, 0.0
    %vm769 = vcmp.gt.f32.partialorder %v737, 0.0
    %vm770 = vcmp.gt.f32.partialorder %v738, 0.0
    %vm771 = vcmp.gt.f32.partialorder %v739, 0.0
    %vm772 = vcmp.gt.f32.partialorder %v740, 0.0
    %vm773 = vcmp.gt.f32.partialorder %v741, 0.0
    %vm774 = vcmp.gt.f32.partialorder %v742, 0.0
    %v775 = vmul.f32 %v711, 0.3
    %v776 = vmul.f32 %v712, 0.3
    %v777 = vmul.f32 %v713, 0.3
    %v778 = vmul.f32 %v714, 0.3
    %v779 = vmul.f32 %v715, 0.3
    %v780 = vmul.f32 %v716, 0.3
    %v781 = vmul.f32 %v717, 0.3
    %v782 = vmul.f32 %v718, 0.3
    %v783 = vmul.f32 %v719, 0.3
    %v784 = vmul.f32 %v720, 0.3
    %v785 = vmul.f32 %v721, 0.3
    %v786 = vmul.f32 %v722, 0.3
    %v787 = vmul.f32 %v723, 0.3
    %v788 = vmul.f32 %v724, 0.3
    %v789 = vmul.f32 %v725, 0.3
    %v790 = vmul.f32 %v726, 0.3
    %v791 = vmul.f32 %v727, 0.3
    %v792 = vmul.f32 %v728, 0.3
    %v793 = vmul.f32 %v729, 0.3
    %v794 = vmul.f32 %v730, 0.3
    %v795 = vmul.f32 %v731, 0.3
    %v796 = vmul.f32 %v732, 0.3
    %v797 = vmul.f32 %v733, 0.3
    %v798 = vmul.f32 %v734, 0.3
    %v799 = vmul.f32 %v735, 0.3
    %v800 = vmul.f32 %v736, 0.3
    %v801 = vmul.f32 %v737, 0.3
    %v802 = vmul.f32 %v738, 0.3
    %v803 = vmul.f32 %v739, 0.3
    %v804 = vmul.f32 %v740, 0.3
    %v805 = vmul.f32 %v741, 0.3
    %v806 = vmul.f32 %v742, 0.3
    %v807 = vsel %vm743, %v711, %v775
    %v808 = vsel %vm744, %v712, %v776
    %v809 = vsel %vm745, %v713, %v777
    %v810 = vsel %vm746, %v714, %v778
    %v811 = vsel %vm747, %v715, %v779
    %v812 = vsel %vm748, %v716, %v780
    %v813 = vsel %vm749, %v717, %v781
    %v814 = vsel %vm750, %v718, %v782
    %v815 = vsel %vm751, %v719, %v783
    %v816 = vsel %vm752, %v720, %v784
    %v817 = vsel %vm753, %v721, %v785
    %v818 = vsel %vm754, %v722, %v786
    %v819 = vsel %vm755, %v723, %v787
    %v820 = vsel %vm756, %v724, %v788
    %v821 = vsel %vm757, %v725, %v789
    %v822 = vsel %vm758, %v726, %v790
    %v823 = vsel %vm759, %v727, %v791
    %v824 = vsel %vm760, %v728, %v792
    %v825 = vsel %vm761, %v729, %v793
    %v826 = vsel %vm762, %v730, %v794
    %v827 = vsel %vm763, %v731, %v795
    %v828 = vsel %vm764, %v732, %v796
    %v829 = vsel %vm765, %v733, %v797
    %v830 = vsel %vm766, %v734, %v798
    %v831 = vsel %vm767, %v735, %v799
    %v832 = vsel %vm768, %v736, %v800
    %v833 = vsel %vm769, %v737, %v801
    %v834 = vsel %vm770, %v738, %v802
    %v835 = vsel %vm771, %v739, %v803
    %v836 = vsel %vm772, %v740, %v804
    %v837 = vsel %vm773, %v741, %v805
    %v838 = vsel %vm774, %v742, %v806
    %v839 = vld [vmem:[#allocation5] sm:$0xff]
    %v840 = vld [vmem:[#allocation5 + $0x8] sm:$0xff]
    %v841 = vld [vmem:[#allocation5 + $0x10] sm:$0xff]
    %v842 = vld [vmem:[#allocation5 + $0x18] sm:$0xff]
    %v843 = vld [vmem:[#allocation5 + $0x20] sm:$0xff]
    %v844 = vld [vmem:[#allocation5 + $0x28] sm:$0xff]
    %v845 = vld [vmem:[#allocation5 + $0x30] sm:$0xff]
    %v846 = vld [vmem:[#allocation5 + $0x38] sm:$0xff]
    %v847 = vld [vmem:[#allocation5 + $0x40] sm:$0xff]
    %v848 = vld [vmem:[#allocation5 + $0x48] sm:$0xff]
    %v849 = vld [vmem:[#allocation5 + $0x50] sm:$0xff]
    %v850 = vld [vmem:[#allocation5 + $0x58] sm:$0xff]
    %v851 = vld [vmem:[#allocation5 + $0x60] sm:$0xff]
    %v852 = vld [vmem:[#allocation5 + $0x68] sm:$0xff]
    %v853 = vld [vmem:[#allocation5 + $0x70] sm:$0xff]
    %v854 = vld [vmem:[#allocation5 + $0x78] sm:$0xff]
    %v855 = vld [vmem:[#allocation5 + $0x80] sm:$0xff]
    %v856 = vld [vmem:[#allocation5 + $0x88] sm:$0xff]
    %v857 = vld [vmem:[#allocation5 + $0x90] sm:$0xff]
    %v858 = vld [vmem:[#allocation5 + $0x98] sm:$0xff]
    %v859 = vld [vmem:[#allocation5 + $0xa0] sm:$0xff]
    %v860 = vld [vmem:[#allocation5 + $0xa8] sm:$0xff]
    %v861 = vld [vmem:[#allocation5 + $0xb0] sm:$0xff]
    %v862 = vld [vmem:[#allocation5 + $0xb8] sm:$0xff]
    %v863 = vld [vmem:[#allocation5 + $0xc0] sm:$0xff]
    %v864 = vld [vmem:[#allocation5 + $0xc8] sm:$0xff]
    %v865 = vld [vmem:[#allocation5 + $0xd0] sm:$0xff]
    %v866 = vld [vmem:[#allocation5 + $0xd8] sm:$0xff]
    %v867 = vld [vmem:[#allocation5 + $0xe0] sm:$0xff]
    %v868 = vld [vmem:[#allocation5 + $0xe8] sm:$0xff]
    %v869 = vld [vmem:[#allocation5 + $0xf0] sm:$0xff]
    %v870 = vld [vmem:[#allocation5 + $0xf8] sm:$0xff]
    %s871 = scalar_lea.vmem %s5, 2
    %v872 = vld [vmem:[%s871] ss:$8 sm:$0x3]
    %s873 = scalar_lea.vmem %s5, 3
    %v874 = vld [vmem:[%s873] ss:$8 sm:$0x3]
    %v875 = vpack.c.bf16 %v809, %v807
    %v876 = vpack.c.bf16 %v810, %v808
    %v877 = vpack.c.bf16 %v813, %v811
    %v878 = vpack.c.bf16 %v814, %v812
    %v879 = vpack.c.bf16 %v817, %v815
    %v880 = vpack.c.bf16 %v818, %v816
    %v881 = vpack.c.bf16 %v821, %v819
    %v882 = vpack.c.bf16 %v822, %v820
    %v883 = vpack.c.bf16 %v825, %v823
    %v884 = vpack.c.bf16 %v826, %v824
    %v885 = vpack.c.bf16 %v829, %v827
    %v886 = vpack.c.bf16 %v830, %v828
    %v887 = vpack.c.bf16 %v833, %v831
    %v888 = vpack.c.bf16 %v834, %v832
    %v889 = vpack.c.bf16 %v837, %v835
    %v890 = vpack.c.bf16 %v838, %v836
    %v923 = vunpack.c.l.b16 %v839
    %v924 = vunpack.c.h.b16 %v839
    %v925 = vunpack.c.l.b16 %v840
    %v926 = vunpack.c.h.b16 %v840
    %v927 = vunpack.c.l.b16 %v841
    %v928 = vunpack.c.h.b16 %v841
    %v929 = vunpack.c.l.b16 %v842
    %v930 = vunpack.c.h.b16 %v842
    %v931 = vunpack.c.l.b16 %v843
    %v932 = vunpack.c.h.b16 %v843
    %v933 = vunpack.c.l.b16 %v844
    %v934 = vunpack.c.h.b16 %v844
    %v935 = vunpack.c.l.b16 %v845
    %v936 = vunpack.c.h.b16 %v845
    %v937 = vunpack.c.l.b16 %v846
    %v938 = vunpack.c.h.b16 %v846
    %v939 = vunpack.c.l.b16 %v847
    %v940 = vunpack.c.h.b16 %v847
    %v941 = vunpack.c.l.b16 %v848
    %v942 = vunpack.c.h.b16 %v848
    %v943 = vunpack.c.l.b16 %v849
    %v944 = vunpack.c.h.b16 %v849
    %v945 = vunpack.c.l.b16 %v850
    %v946 = vunpack.c.h.b16 %v850
    %v947 = vunpack.c.l.b16 %v851
    %v948 = vunpack.c.h.b16 %v851
    %v949 = vunpack.c.l.b16 %v852
    %v950 = vunpack.c.h.b16 %v852
    %v951 = vunpack.c.l.b16 %v853
    %v952 = vunpack.c.h.b16 %v853
    %v953 = vunpack.c.l.b16 %v854
    %v954 = vunpack.c.h.b16 %v854
    %v955 = vunpack.c.l.b16 %v855
    %v956 = vunpack.c.h.b16 %v855
    %v957 = vunpack.c.l.b16 %v856
    %v958 = vunpack.c.h.b16 %v856
    %v959 = vunpack.c.l.b16 %v857
    %v960 = vunpack.c.h.b16 %v857
    %v961 = vunpack.c.l.b16 %v858
    %v962 = vunpack.c.h.b16 %v858
    %v963 = vunpack.c.l.b16 %v859
    %v964 = vunpack.c.h.b16 %v859
    %v965 = vunpack.c.l.b16 %v860
    %v966 = vunpack.c.h.b16 %v860
    %v967 = vunpack.c.l.b16 %v861
    %v968 = vunpack.c.h.b16 %v861
    %v969 = vunpack.c.l.b16 %v862
    %v970 = vunpack.c.h.b16 %v862
    %v971 = vunpack.c.l.b16 %v863
    %v972 = vunpack.c.h.b16 %v863
    %v973 = vunpack.c.l.b16 %v864
    %v974 = vunpack.c.h.b16 %v864
    %v975 = vunpack.c.l.b16 %v865
    %v976 = vunpack.c.h.b16 %v865
    %v977 = vunpack.c.l.b16 %v866
    %v978 = vunpack.c.h.b16 %v866
    %v979 = vunpack.c.l.b16 %v867
    %v980 = vunpack.c.h.b16 %v867
    %v981 = vunpack.c.l.b16 %v868
    %v982 = vunpack.c.h.b16 %v868
    %v983 = vunpack.c.l.b16 %v869
    %v984 = vunpack.c.h.b16 %v869
    %v985 = vunpack.c.l.b16 %v870
    %v986 = vunpack.c.h.b16 %v870
    %v987 = vpack.c.b16 %v925, %v923
    %v988 = vpack.c.b16 %v926, %v924
    %v989 = vpack.c.b16 %v929, %v927
    %v990 = vpack.c.b16 %v930, %v928
    %v991 = vpack.c.b16 %v933, %v931
    %v992 = vpack.c.b16 %v934, %v932
    %v993 = vpack.c.b16 %v937, %v935
    %v994 = vpack.c.b16 %v938, %v936
    %v995 = vpack.c.b16 %v941, %v939
    %v996 = vpack.c.b16 %v942, %v940
    %v997 = vpack.c.b16 %v945, %v943
    %v998 = vpack.c.b16 %v946, %v944
    %v999 = vpack.c.b16 %v949, %v947
    %v1000 = vpack.c.b16 %v950, %v948
    %v1001 = vpack.c.b16 %v953, %v951
    %v1002 = vpack.c.b16 %v954, %v952
    %v1003 = vpack.c.b16 %v957, %v955
    %v1004 = vpack.c.b16 %v958, %v956
    %v1005 = vpack.c.b16 %v961, %v959
    %v1006 = vpack.c.b16 %v962, %v960
    %v1007 = vpack.c.b16 %v965, %v963
    %v1008 = vpack.c.b16 %v966, %v964
    %v1009 = vpack.c.b16 %v969, %v967
    %v1010 = vpack.c.b16 %v970, %v968
    %v1011 = vpack.c.b16 %v973, %v971
    %v1012 = vpack.c.b16 %v974, %v972
    %v1013 = vpack.c.b16 %v977, %v975
    %v1014 = vpack.c.b16 %v978, %v976
    %v1015 = vpack.c.b16 %v981, %v979
    %v1016 = vpack.c.b16 %v982, %v980
    %v1017 = vpack.c.b16 %v985, %v983
    %v1018 = vpack.c.b16 %v986, %v984
    %1051 = vmatprep.subr.bf16.mxu0 %v988
    %1052 = vmatpush1.bf16.msra.mxu0 %v987
    %1053 = vmatprep.subr.bf16.mxu0 %v990
    %1054 = vmatpush1.bf16.msra.mxu0 %v989
    %1055 = vmatprep.subr.bf16.mxu0 %v992
    %1056 = vmatpush1.bf16.msra.mxu0 %v991
    %1057 = vmatprep.subr.bf16.mxu0 %v994
    %1058 = vmatpush1.bf16.msra.mxu0 %v993
    %1059 = vmatprep.subr.bf16.mxu0 %v996
    %1060 = vmatpush1.bf16.msra.mxu0 %v995
    %1061 = vmatprep.subr.bf16.mxu0 %v998
    %1062 = vmatpush1.bf16.msra.mxu0 %v997
    %1063 = vmatprep.subr.bf16.mxu0 %v1000
    %1064 = vmatpush1.bf16.msra.mxu0 %v999
    %1065 = vmatprep.subr.bf16.mxu0 %v1002
    %1066 = vmatpush1.bf16.msra.mxu0 %v1001
    %1067 = vmatprep.subr.bf16.mxu0 %v1004
    %1068 = vmatpush1.bf16.msra.mxu0 %v1003
    %1069 = vmatprep.subr.bf16.mxu0 %v1006
    %1070 = vmatpush1.bf16.msra.mxu0 %v1005
    %1071 = vmatprep.subr.bf16.mxu0 %v1008
    %1072 = vmatpush1.bf16.msra.mxu0 %v1007
    %1073 = vmatprep.subr.bf16.mxu0 %v1010
    %1074 = vmatpush1.bf16.msra.mxu0 %v1009
    %1075 = vmatprep.subr.bf16.mxu0 %v1012
    %1076 = vmatpush1.bf16.msra.mxu0 %v1011
    %1077 = vmatprep.subr.bf16.mxu0 %v1014
    %1078 = vmatpush1.bf16.msra.mxu0 %v1013
    %1079 = vmatprep.subr.bf16.mxu0 %v1016
    %1080 = vmatpush1.bf16.msra.mxu0 %v1015
    %1081 = vmatprep.subr.bf16.mxu0 %v1018
    %1082 = vmatpush1.bf16.msra.mxu0 %v1017
    %1083 = vmatprep.mubr.bf16.mxu0 %v876
    %1084 = vmatmul.mubr.bf16.gmra.mrb[0].mxu0 %v875
    %v1085 = vpop.f32.mrb[0].mxu0
    %v1086 = vadd.f32 0.0, %v1085
    %v1087 = vpop.f32.mrb[0].mxu0
    %v1088 = vadd.f32 0.0, %v1087
    %v1089 = vpop.f32.mrb[0].mxu0
    %v1090 = vadd.f32 0.0, %v1089
    %v1091 = vpop.f32.mrb[0].mxu0
    %v1092 = vadd.f32 0.0, %v1091
    %1093 = vmatprep.mubr.bf16.mxu0 %v878
    %1094 = vmatmul.mubr.bf16.gmra.mrb[0].mxu0 %v877
    %v1095 = vpop.f32.mrb[0].mxu0
    %v1096 = vadd.f32 0.0, %v1095
    %v1097 = vpop.f32.mrb[0].mxu0
    %v1098 = vadd.f32 0.0, %v1097
    %v1099 = vpop.f32.mrb[0].mxu0
    %v1100 = vadd.f32 0.0, %v1099
    %v1101 = vpop.f32.mrb[0].mxu0
    %v1102 = vadd.f32 0.0, %v1101
    %1103 = vmatprep.mubr.bf16.mxu0 %v880
    %1104 = vmatmul.mubr.bf16.gmra.mrb[0].mxu0 %v879
    %v1105 = vpop.f32.mrb[0].mxu0
    %v1106 = vadd.f32 0.0, %v1105
    %v1107 = vpop.f32.mrb[0].mxu0
    %v1108 = vadd.f32 0.0, %v1107
    %v1109 = vpop.f32.mrb[0].mxu0
    %v1110 = vadd.f32 0.0, %v1109
    %v1111 = vpop.f32.mrb[0].mxu0
    %v1112 = vadd.f32 0.0, %v1111
    %1113 = vmatprep.mubr.bf16.mxu0 %v882
    %1114 = vmatmul.mubr.bf16.gmra.mrb[0].mxu0 %v881
    %v1115 = vpop.f32.mrb[0].mxu0
    %v1116 = vadd.f32 0.0, %v1115
    %v1117 = vpop.f32.mrb[0].mxu0
    %v1118 = vadd.f32 0.0, %v1117
    %v1119 = vpop.f32.mrb[0].mxu0
    %v1120 = vadd.f32 0.0, %v1119
    %v1121 = vpop.f32.mrb[0].mxu0
    %v1122 = vadd.f32 0.0, %v1121
    %1123 = vmatprep.mubr.bf16.mxu0 %v884
    %1124 = vmatmul.mubr.bf16.gmra.mrb[0].mxu0 %v883
    %v1125 = vpop.f32.mrb[0].mxu0
    %v1126 = vadd.f32 0.0, %v1125
    %v1127 = vpop.f32.mrb[0].mxu0
    %v1128 = vadd.f32 0.0, %v1127
    %v1129 = vpop.f32.mrb[0].mxu0
    %v1130 = vadd.f32 0.0, %v1129
    %v1131 = vpop.f32.mrb[0].mxu0
    %v1132 = vadd.f32 0.0, %v1131
    %1133 = vmatprep.mubr.bf16.mxu0 %v886
    %1134 = vmatmul.mubr.bf16.gmra.mrb[0].mxu0 %v885
    %v1135 = vpop.f32.mrb[0].mxu0
    %v1136 = vadd.f32 0.0, %v1135
    %v1137 = vpop.f32.mrb[0].mxu0
    %v1138 = vadd.f32 0.0, %v1137
    %v1139 = vpop.f32.mrb[0].mxu0
    %v1140 = vadd.f32 0.0, %v1139
    %v1141 = vpop.f32.mrb[0].mxu0
    %v1142 = vadd.f32 0.0, %v1141
    %1143 = vmatprep.mubr.bf16.mxu0 %v888
    %1144 = vmatmul.mubr.bf16.gmra.mrb[0].mxu0 %v887
    %v1145 = vpop.f32.mrb[0].mxu0
    %v1146 = vadd.f32 0.0, %v1145
    %v1147 = vpop.f32.mrb[0].mxu0
    %v1148 = vadd.f32 0.0, %v1147
    %v1149 = vpop.f32.mrb[0].mxu0
    %v1150 = vadd.f32 0.0, %v1149
    %v1151 = vpop.f32.mrb[0].mxu0
    %v1152 = vadd.f32 0.0, %v1151
    %1153 = vmatprep.mubr.bf16.mxu0 %v890
    %1154 = vmatmul.mubr.bf16.gmra.mrb[0].mxu0 %v889
    %v1155 = vpop.f32.mrb[0].mxu0
    %v1156 = vadd.f32 0.0, %v1155
    %v1157 = vpop.f32.mrb[0].mxu0
    %v1158 = vadd.f32 0.0, %v1157
    %v1159 = vpop.f32.mrb[0].mxu0
    %v1160 = vadd.f32 0.0, %v1159
    %v1161 = vpop.f32.mrb[0].mxu0
    %v1162 = vadd.f32 0.0, %v1161
    %1163 = vdwg.mxu0
    %v1164 = vpack.c.bf16 %v1090, %v1086
    %v1165 = vpack.c.bf16 %v1092, %v1088
    %v1166 = vpack.c.bf16 %v1100, %v1096
    %v1167 = vpack.c.bf16 %v1102, %v1098
    %v1168 = vpack.c.bf16 %v1110, %v1106
    %v1169 = vpack.c.bf16 %v1112, %v1108
    %v1170 = vpack.c.bf16 %v1120, %v1116
    %v1171 = vpack.c.bf16 %v1122, %v1118
    %v1172 = vpack.c.bf16 %v1130, %v1126
    %v1173 = vpack.c.bf16 %v1132, %v1128
    %v1174 = vpack.c.bf16 %v1140, %v1136
    %v1175 = vpack.c.bf16 %v1142, %v1138
    %v1176 = vpack.c.bf16 %v1150, %v1146
    %v1177 = vpack.c.bf16 %v1152, %v1148
    %v1178 = vpack.c.bf16 %v1160, %v1156
    %v1179 = vpack.c.bf16 %v1162, %v1158
    %1180 = vmatprep.subr.bf16.mxu0 %v1165
    %1181 = vmatpush1.bf16.msra.mxu0 %v1164
    %1182 = vmatprep.subr.bf16.mxu0 %v1167
    %1183 = vmatpush1.bf16.msra.mxu0 %v1166
    %1184 = vmatprep.subr.bf16.mxu0 %v1169
    %1185 = vmatpush1.bf16.msra.mxu0 %v1168
    %1186 = vmatprep.subr.bf16.mxu0 %v1171
    %1187 = vmatpush1.bf16.msra.mxu0 %v1170
    %1188 = vmatprep.subr.bf16.mxu0 %v1173
    %1189 = vmatpush1.bf16.msra.mxu0 %v1172
    %1190 = vmatprep.subr.bf16.mxu0 %v1175
    %1191 = vmatpush1.bf16.msra.mxu0 %v1174
    %1192 = vmatprep.subr.bf16.mxu0 %v1177
    %1193 = vmatpush1.bf16.msra.mxu0 %v1176
    %1194 = vmatprep.subr.bf16.mxu0 %v1179
    %1195 = vmatpush1.bf16.msra.mxu0 %v1178
    %1196 = vmatprep.subr.bf16.mxu0 0
    %1197 = vmatpush1.bf16.msra.mxu0 0
    %1198 = vmatprep.subr.bf16.mxu0 0
    %1199 = vmatpush1.bf16.msra.mxu0 0
    %1200 = vmatprep.subr.bf16.mxu0 0
    %1201 = vmatpush1.bf16.msra.mxu0 0
    %1202 = vmatprep.subr.bf16.mxu0 0
    %1203 = vmatpush1.bf16.msra.mxu0 0
    %1204 = vmatprep.subr.bf16.mxu0 0
    %1205 = vmatpush1.bf16.msra.mxu0 0
    %1206 = vmatprep.subr.bf16.mxu0 0
    %1207 = vmatpush1.bf16.msra.mxu0 0
    %1208 = vmatprep.subr.bf16.mxu0 0
    %1209 = vmatpush1.bf16.msra.mxu0 0
    %1210 = vmatprep.subr.bf16.mxu0 0
    %1211 = vmatpush1.bf16.msra.mxu0 0
    %1212 = vmatprep.mubr.bf16.mxu0 0
    %1213 = vmatmul.mubr.bf16.gmra.mrb[0].mxu0 1065369472
    %v1214 = vpop.f32.mrb[0].mxu0
    %v1215 = vadd.f32 0.0, %v1214
    %v1216 = vpop.f32.mrb[0].mxu0
    %v1217 = vadd.f32 0.0, %v1216
    %v1218 = vpop.f32.mrb[0].mxu0
    %v1219 = vpop.f32.mrb[0].mxu0
    %1220 = vdwg.mxu0
    %v1221 = vmul.bf16 %v1164, %v1164
    %v1222 = vmul.bf16 %v1165, %v1165
    %v1223 = vmul.bf16 %v1166, %v1166
    %v1224 = vmul.bf16 %v1167, %v1167
    %v1225 = vmul.bf16 %v1168, %v1168
    %v1226 = vmul.bf16 %v1169, %v1169
    %v1227 = vmul.bf16 %v1170, %v1170
    %v1228 = vmul.bf16 %v1171, %v1171
    %v1229 = vmul.bf16 %v1172, %v1172
    %v1230 = vmul.bf16 %v1173, %v1173
    %v1231 = vmul.bf16 %v1174, %v1174
    %v1232 = vmul.bf16 %v1175, %v1175
    %v1233 = vmul.bf16 %v1176, %v1176
    %v1234 = vmul.bf16 %v1177, %v1177
    %v1235 = vmul.bf16 %v1178, %v1178
    %v1236 = vmul.bf16 %v1179, %v1179
    %1237 = vmatprep.subr.bf16.mxu0 %v1222
    %1238 = vmatpush1.bf16.msra.mxu0 %v1221
    %1239 = vmatprep.subr.bf16.mxu0 %v1224
    %1240 = vmatpush1.bf16.msra.mxu0 %v1223
    %1241 = vmatprep.subr.bf16.mxu0 %v1226
    %1242 = vmatpush1.bf16.msra.mxu0 %v1225
    %1243 = vmatprep.subr.bf16.mxu0 %v1228
    %1244 = vmatpush1.bf16.msra.mxu0 %v1227
    %1245 = vmatprep.subr.bf16.mxu0 %v1230
    %1246 = vmatpush1.bf16.msra.mxu0 %v1229
    %1247 = vmatprep.subr.bf16.mxu0 %v1232
    %1248 = vmatpush1.bf16.msra.mxu0 %v1231
    %1249 = vmatprep.subr.bf16.mxu0 %v1234
    %1250 = vmatpush1.bf16.msra.mxu0 %v1233
    %1251 = vmatprep.subr.bf16.mxu0 %v1236
    %1252 = vmatpush1.bf16.msra.mxu0 %v1235
    %1253 = vmatprep.subr.bf16.mxu0 0
    %1254 = vmatpush1.bf16.msra.mxu0 0
    %1255 = vmatprep.subr.bf16.mxu0 0
    %1256 = vmatpush1.bf16.msra.mxu0 0
    %1257 = vmatprep.subr.bf16.mxu0 0
    %1258 = vmatpush1.bf16.msra.mxu0 0
    %1259 = vmatprep.subr.bf16.mxu0 0
    %1260 = vmatpush1.bf16.msra.mxu0 0
    %1261 = vmatprep.subr.bf16.mxu0 0
    %1262 = vmatpush1.bf16.msra.mxu0 0
    %1263 = vmatprep.subr.bf16.mxu0 0
    %1264 = vmatpush1.bf16.msra.mxu0 0
    %1265 = vmatprep.subr.bf16.mxu0 0
    %1266 = vmatpush1.bf16.msra.mxu0 0
    %1267 = vmatprep.subr.bf16.mxu0 0
    %1268 = vmatpush1.bf16.msra.mxu0 0
    %1269 = vmatprep.mubr.bf16.mxu0 0
    %1270 = vmatmul.mubr.bf16.gmra.mrb[0].mxu0 1065369472
    %v1271 = vpop.f32.mrb[0].mxu0
    %v1272 = vadd.f32 0.0, %v1271
    %v1273 = vpop.f32.mrb[0].mxu0
    %v1274 = vadd.f32 0.0, %v1273
    %v1275 = vpop.f32.mrb[0].mxu0
    %v1276 = vpop.f32.mrb[0].mxu0
    %1277 = vdwg.mxu0
    %v1278 = vmul.f32 %v1215, 0.0078125
    %v1279 = vmul.f32 %v1217, 0.0078125
    %v1280 = vmul.f32 %v1272, 0.0078125
    %v1281 = vmul.f32 %v1274, 0.0078125
    %v1282 = vmul.f32 %v1278, %v1278
    %v1283 = vmul.f32 %v1279, %v1279
    %v1284 = vsub.f32 %v1280, %v1282
    %v1285 = vsub.f32 %v1281, %v1283
    %v1286 = vadd.f32 %v1284, 0.9
    %v1287 = vadd.f32 %v1285, 0.9
    %v1288 = vrsqrt.pop %v1286
    %v1289 = vrsqrt.pop %v1287
    %v1292 = vcombine.low %v1288, %v1289
    %v1294 = vunpack.c.l.s4 1966171168
    %v1295 = vunpack.c.0.s8 %v1294
    %v1296 = vlaneseq
    %v1297 = vshrl.u32 %v1296, 7
    %v1298 = vsub.s32 %v1295, %v1297
    %v1299 = vrot.slane %v1292, %v1298
    %v1301 = vunpack.c.l.s4 1966171168
    %v1302 = vunpack.c.0.s8 %v1301
    %v1303 = vlaneseq
    %v1304 = vshrl.u32 %v1303, 7
    %v1305 = vsub.s32 %v1302, %v1304
    %v1306 = vrot.slane %v1299, %v1305
    %v1308 = vmul.f32 %v872, %v1306
    %v1310 = vlaneseq
    %v1311 = vshrl.u32 %v1310, 7
    %v1312 = vsub.s32 0, %v1311
    %v1313 = vrot.slane %v1308, %v1312
    %v1314 = vlaneseq
    %v1315 = vshrl.u32 %v1314, 7
    %v1316 = vsub.s32 1, %v1315
    %v1317 = vrot.slane %v1308, %v1316
    %v1320 = vmul.f32 %v1278, %v1313
    %v1321 = vmul.f32 %v1279, %v1317
    %v1324 = vcombine.low %v1320, %v1321
    %v1326 = vunpack.c.l.s4 1966171168
    %v1327 = vunpack.c.0.s8 %v1326
    %v1328 = vlaneseq
    %v1329 = vshrl.u32 %v1328, 7
    %v1330 = vsub.s32 %v1327, %v1329
    %v1331 = vrot.slane %v1324, %v1330
    %v1333 = vunpack.c.l.s4 1966171168
    %v1334 = vunpack.c.0.s8 %v1333
    %v1335 = vlaneseq
    %v1336 = vshrl.u32 %v1335, 7
    %v1337 = vsub.s32 %v1334, %v1336
    %v1338 = vrot.slane %v1331, %v1337
    %v1340 = vsub.f32 %v874, %v1338
    %v1341 = vmul.f32 %v1086, %v1313
    %v1342 = vmul.f32 %v1088, %v1317
    %v1343 = vmul.f32 %v1090, %v1313
    %v1344 = vmul.f32 %v1092, %v1317
    %v1345 = vmul.f32 %v1096, %v1313
    %v1346 = vmul.f32 %v1098, %v1317
    %v1347 = vmul.f32 %v1100, %v1313
    %v1348 = vmul.f32 %v1102, %v1317
    %v1349 = vmul.f32 %v1106, %v1313
    %v1350 = vmul.f32 %v1108, %v1317
    %v1351 = vmul.f32 %v1110, %v1313
    %v1352 = vmul.f32 %v1112, %v1317
    %v1353 = vmul.f32 %v1116, %v1313
    %v1354 = vmul.f32 %v1118, %v1317
    %v1355 = vmul.f32 %v1120, %v1313
    %v1356 = vmul.f32 %v1122, %v1317
    %v1357 = vmul.f32 %v1126, %v1313
    %v1358 = vmul.f32 %v1128, %v1317
    %v1359 = vmul.f32 %v1130, %v1313
    %v1360 = vmul.f32 %v1132, %v1317
    %v1361 = vmul.f32 %v1136, %v1313
    %v1362 = vmul.f32 %v1138, %v1317
    %v1363 = vmul.f32 %v1140, %v1313
    %v1364 = vmul.f32 %v1142, %v1317
    %v1365 = vmul.f32 %v1146, %v1313
    %v1366 = vmul.f32 %v1148, %v1317
    %v1367 = vmul.f32 %v1150, %v1313
    %v1368 = vmul.f32 %v1152, %v1317
    %v1369 = vmul.f32 %v1156, %v1313
    %v1370 = vmul.f32 %v1158, %v1317
    %v1371 = vmul.f32 %v1160, %v1313
    %v1372 = vmul.f32 %v1162, %v1317
    %v1374 = vlaneseq
    %v1375 = vshrl.u32 %v1374, 7
    %v1376 = vsub.s32 0, %v1375
    %v1377 = vrot.slane %v1340, %v1376
    %v1378 = vlaneseq
    %v1379 = vshrl.u32 %v1378, 7
    %v1380 = vsub.s32 1, %v1379
    %v1381 = vrot.slane %v1340, %v1380
    %v1384 = vadd.f32 %v1341, %v1377
    %v1385 = vadd.f32 %v1342, %v1381
    %v1386 = vadd.f32 %v1343, %v1377
    %v1387 = vadd.f32 %v1344, %v1381
    %v1388 = vadd.f32 %v1345, %v1377
    %v1389 = vadd.f32 %v1346, %v1381
    %v1390 = vadd.f32 %v1347, %v1377
    %v1391 = vadd.f32 %v1348, %v1381
    %v1392 = vadd.f32 %v1349, %v1377
    %v1393 = vadd.f32 %v1350, %v1381
    %v1394 = vadd.f32 %v1351, %v1377
    %v1395 = vadd.f32 %v1352, %v1381
    %v1396 = vadd.f32 %v1353, %v1377
    %v1397 = vadd.f32 %v1354, %v1381
    %v1398 = vadd.f32 %v1355, %v1377
    %v1399 = vadd.f32 %v1356, %v1381
    %v1400 = vadd.f32 %v1357, %v1377
    %v1401 = vadd.f32 %v1358, %v1381
    %v1402 = vadd.f32 %v1359, %v1377
    %v1403 = vadd.f32 %v1360, %v1381
    %v1404 = vadd.f32 %v1361, %v1377
    %v1405 = vadd.f32 %v1362, %v1381
    %v1406 = vadd.f32 %v1363, %v1377
    %v1407 = vadd.f32 %v1364, %v1381
    %v1408 = vadd.f32 %v1365, %v1377
    %v1409 = vadd.f32 %v1366, %v1381
    %v1410 = vadd.f32 %v1367, %v1377
    %v1411 = vadd.f32 %v1368, %v1381
    %v1412 = vadd.f32 %v1369, %v1377
    %v1413 = vadd.f32 %v1370, %v1381
    %v1414 = vadd.f32 %v1371, %v1377
    %v1415 = vadd.f32 %v1372, %v1381
    %vm1416 = vcmp.gt.f32.partialorder %v1384, 0.0
    %vm1417 = vcmp.gt.f32.partialorder %v1385, 0.0
    %vm1418 = vcmp.gt.f32.partialorder %v1386, 0.0
    %vm1419 = vcmp.gt.f32.partialorder %v1387, 0.0
    %vm1420 = vcmp.gt.f32.partialorder %v1388, 0.0
    %vm1421 = vcmp.gt.f32.partialorder %v1389, 0.0
    %vm1422 = vcmp.gt.f32.partialorder %v1390, 0.0
    %vm1423 = vcmp.gt.f32.partialorder %v1391, 0.0
    %vm1424 = vcmp.gt.f32.partialorder %v1392, 0.0
    %vm1425 = vcmp.gt.f32.partialorder %v1393, 0.0
    %vm1426 = vcmp.gt.f32.partialorder %v1394, 0.0
    %vm1427 = vcmp.gt.f32.partialorder %v1395, 0.0
    %vm1428 = vcmp.gt.f32.partialorder %v1396, 0.0
    %vm1429 = vcmp.gt.f32.partialorder %v1397, 0.0
    %vm1430 = vcmp.gt.f32.partialorder %v1398, 0.0
    %vm1431 = vcmp.gt.f32.partialorder %v1399, 0.0
    %vm1432 = vcmp.gt.f32.partialorder %v1400, 0.0
    %vm1433 = vcmp.gt.f32.partialorder %v1401, 0.0
    %vm1434 = vcmp.gt.f32.partialorder %v1402, 0.0
    %vm1435 = vcmp.gt.f32.partialorder %v1403, 0.0
    %vm1436 = vcmp.gt.f32.partialorder %v1404, 0.0
    %vm1437 = vcmp.gt.f32.partialorder %v1405, 0.0
    %vm1438 = vcmp.gt.f32.partialorder %v1406, 0.0
    %vm1439 = vcmp.gt.f32.partialorder %v1407, 0.0
    %vm1440 = vcmp.gt.f32.partialorder %v1408, 0.0
    %vm1441 = vcmp.gt.f32.partialorder %v1409, 0.0
    %vm1442 = vcmp.gt.f32.partialorder %v1410, 0.0
    %vm1443 = vcmp.gt.f32.partialorder %v1411, 0.0
    %vm1444 = vcmp.gt.f32.partialorder %v1412, 0.0
    %vm1445 = vcmp.gt.f32.partialorder %v1413, 0.0
    %vm1446 = vcmp.gt.f32.partialorder %v1414, 0.0
    %vm1447 = vcmp.gt.f32.partialorder %v1415, 0.0
    %v1448 = vmul.f32 %v1384, 0.3
    %v1449 = vmul.f32 %v1385, 0.3
    %v1450 = vmul.f32 %v1386, 0.3
    %v1451 = vmul.f32 %v1387, 0.3
    %v1452 = vmul.f32 %v1388, 0.3
    %v1453 = vmul.f32 %v1389, 0.3
    %v1454 = vmul.f32 %v1390, 0.3
    %v1455 = vmul.f32 %v1391, 0.3
    %v1456 = vmul.f32 %v1392, 0.3
    %v1457 = vmul.f32 %v1393, 0.3
    %v1458 = vmul.f32 %v1394, 0.3
    %v1459 = vmul.f32 %v1395, 0.3
    %v1460 = vmul.f32 %v1396, 0.3
    %v1461 = vmul.f32 %v1397, 0.3
    %v1462 = vmul.f32 %v1398, 0.3
    %v1463 = vmul.f32 %v1399, 0.3
    %v1464 = vmul.f32 %v1400, 0.3
    %v1465 = vmul.f32 %v1401, 0.3
    %v1466 = vmul.f32 %v1402, 0.3
    %v1467 = vmul.f32 %v1403, 0.3
    %v1468 = vmul.f32 %v1404, 0.3
    %v1469 = vmul.f32 %v1405, 0.3
    %v1470 = vmul.f32 %v1406, 0.3
    %v1471 = vmul.f32 %v1407, 0.3
    %v1472 = vmul.f32 %v1408, 0.3
    %v1473 = vmul.f32 %v1409, 0.3
    %v1474 = vmul.f32 %v1410, 0.3
    %v1475 = vmul.f32 %v1411, 0.3
    %v1476 = vmul.f32 %v1412, 0.3
    %v1477 = vmul.f32 %v1413, 0.3
    %v1478 = vmul.f32 %v1414, 0.3
    %v1479 = vmul.f32 %v1415, 0.3
    %v1480 = vsel %vm1416, %v1384, %v1448
    %v1481 = vsel %vm1417, %v1385, %v1449
    %v1482 = vsel %vm1418, %v1386, %v1450
    %v1483 = vsel %vm1419, %v1387, %v1451
    %v1484 = vsel %vm1420, %v1388, %v1452
    %v1485 = vsel %vm1421, %v1389, %v1453
    %v1486 = vsel %vm1422, %v1390, %v1454
    %v1487 = vsel %vm1423, %v1391, %v1455
    %v1488 = vsel %vm1424, %v1392, %v1456
    %v1489 = vsel %vm1425, %v1393, %v1457
    %v1490 = vsel %vm1426, %v1394, %v1458
    %v1491 = vsel %vm1427, %v1395, %v1459
    %v1492 = vsel %vm1428, %v1396, %v1460
    %v1493 = vsel %vm1429, %v1397, %v1461
    %v1494 = vsel %vm1430, %v1398, %v1462
    %v1495 = vsel %vm1431, %v1399, %v1463
    %v1496 = vsel %vm1432, %v1400, %v1464
    %v1497 = vsel %vm1433, %v1401, %v1465
    %v1498 = vsel %vm1434, %v1402, %v1466
    %v1499 = vsel %vm1435, %v1403, %v1467
    %v1500 = vsel %vm1436, %v1404, %v1468
    %v1501 = vsel %vm1437, %v1405, %v1469
    %v1502 = vsel %vm1438, %v1406, %v1470
    %v1503 = vsel %vm1439, %v1407, %v1471
    %v1504 = vsel %vm1440, %v1408, %v1472
    %v1505 = vsel %vm1441, %v1409, %v1473
    %v1506 = vsel %vm1442, %v1410, %v1474
    %v1507 = vsel %vm1443, %v1411, %v1475
    %v1508 = vsel %vm1444, %v1412, %v1476
    %v1509 = vsel %vm1445, %v1413, %v1477
    %v1510 = vsel %vm1446, %v1414, %v1478
    %v1511 = vsel %vm1447, %v1415, %v1479
    %s1512 = scalar_lea.vmem [#allocation5], 256
    %v1513 = vld [vmem:[%s1512] sm:$0xff]
    %v1514 = vld [vmem:[%s1512 + $0x8] sm:$0xff]
    %v1515 = vld [vmem:[%s1512 + $0x10] sm:$0xff]
    %v1516 = vld [vmem:[%s1512 + $0x18] sm:$0xff]
    %v1517 = vld [vmem:[%s1512 + $0x20] sm:$0xff]
    %v1518 = vld [vmem:[%s1512 + $0x28] sm:$0xff]
    %v1519 = vld [vmem:[%s1512 + $0x30] sm:$0xff]
    %v1520 = vld [vmem:[%s1512 + $0x38] sm:$0xff]
    %v1521 = vld [vmem:[%s1512 + $0x40] sm:$0xff]
    %v1522 = vld [vmem:[%s1512 + $0x48] sm:$0xff]
    %v1523 = vld [vmem:[%s1512 + $0x50] sm:$0xff]
    %v1524 = vld [vmem:[%s1512 + $0x58] sm:$0xff]
    %v1525 = vld [vmem:[%s1512 + $0x60] sm:$0xff]
    %v1526 = vld [vmem:[%s1512 + $0x68] sm:$0xff]
    %v1527 = vld [vmem:[%s1512 + $0x70] sm:$0xff]
    %v1528 = vld [vmem:[%s1512 + $0x78] sm:$0xff]
    %v1529 = vld [vmem:[%s1512 + $0x80] sm:$0xff]
    %v1530 = vld [vmem:[%s1512 + $0x88] sm:$0xff]
    %v1531 = vld [vmem:[%s1512 + $0x90] sm:$0xff]
    %v1532 = vld [vmem:[%s1512 + $0x98] sm:$0xff]
    %v1533 = vld [vmem:[%s1512 + $0xa0] sm:$0xff]
    %v1534 = vld [vmem:[%s1512 + $0xa8] sm:$0xff]
    %v1535 = vld [vmem:[%s1512 + $0xb0] sm:$0xff]
    %v1536 = vld [vmem:[%s1512 + $0xb8] sm:$0xff]
    %v1537 = vld [vmem:[%s1512 + $0xc0] sm:$0xff]
    %v1538 = vld [vmem:[%s1512 + $0xc8] sm:$0xff]
    %v1539 = vld [vmem:[%s1512 + $0xd0] sm:$0xff]
    %v1540 = vld [vmem:[%s1512 + $0xd8] sm:$0xff]
    %v1541 = vld [vmem:[%s1512 + $0xe0] sm:$0xff]
    %v1542 = vld [vmem:[%s1512 + $0xe8] sm:$0xff]
    %v1543 = vld [vmem:[%s1512 + $0xf0] sm:$0xff]
    %v1544 = vld [vmem:[%s1512 + $0xf8] sm:$0xff]
    %s1545 = scalar_lea.vmem %s5, 4
    %v1546 = vld [vmem:[%s1545] ss:$8 sm:$0x3]
    %s1547 = scalar_lea.vmem %s5, 5
    %v1548 = vld [vmem:[%s1547] ss:$8 sm:$0x3]
    %v1549 = vpack.c.bf16 %v1482, %v1480
    %v1550 = vpack.c.bf16 %v1483, %v1481
    %v1551 = vpack.c.bf16 %v1486, %v1484
    %v1552 = vpack.c.bf16 %v1487, %v1485
    %v1553 = vpack.c.bf16 %v1490, %v1488
    %v1554 = vpack.c.bf16 %v1491, %v1489
    %v1555 = vpack.c.bf16 %v1494, %v1492
    %v1556 = vpack.c.bf16 %v1495, %v1493
    %v1557 = vpack.c.bf16 %v1498, %v1496
    %v1558 = vpack.c.bf16 %v1499, %v1497
    %v1559 = vpack.c.bf16 %v1502, %v1500
    %v1560 = vpack.c.bf16 %v1503, %v1501
    %v1561 = vpack.c.bf16 %v1506, %v1504
    %v1562 = vpack.c.bf16 %v1507, %v1505
    %v1563 = vpack.c.bf16 %v1510, %v1508
    %v1564 = vpack.c.bf16 %v1511, %v1509
    %v1597 = vunpack.c.l.b16 %v1513
    %v1598 = vunpack.c.h.b16 %v1513
    %v1599 = vunpack.c.l.b16 %v1514
    %v1600 = vunpack.c.h.b16 %v1514
    %v1601 = vunpack.c.l.b16 %v1515
    %v1602 = vunpack.c.h.b16 %v1515
    %v1603 = vunpack.c.l.b16 %v1516
    %v1604 = vunpack.c.h.b16 %v1516
    %v1605 = vunpack.c.l.b16 %v1517
    %v1606 = vunpack.c.h.b16 %v1517
    %v1607 = vunpack.c.l.b16 %v1518
    %v1608 = vunpack.c.h.b16 %v1518
    %v1609 = vunpack.c.l.b16 %v1519
    %v1610 = vunpack.c.h.b16 %v1519
    %v1611 = vunpack.c.l.b16 %v1520
    %v1612 = vunpack.c.h.b16 %v1520
    %v1613 = vunpack.c.l.b16 %v1521
    %v1614 = vunpack.c.h.b16 %v1521
    %v1615 = vunpack.c.l.b16 %v1522
    %v1616 = vunpack.c.h.b16 %v1522
    %v1617 = vunpack.c.l.b16 %v1523
    %v1618 = vunpack.c.h.b16 %v1523
    %v1619 = vunpack.c.l.b16 %v1524
    %v1620 = vunpack.c.h.b16 %v1524
    %v1621 = vunpack.c.l.b16 %v1525
    %v1622 = vunpack.c.h.b16 %v1525
    %v1623 = vunpack.c.l.b16 %v1526
    %v1624 = vunpack.c.h.b16 %v1526
    %v1625 = vunpack.c.l.b16 %v1527
    %v1626 = vunpack.c.h.b16 %v1527
    %v1627 = vunpack.c.l.b16 %v1528
    %v1628 = vunpack.c.h.b16 %v1528
    %v1629 = vunpack.c.l.b16 %v1529
    %v1630 = vunpack.c.h.b16 %v1529
    %v1631 = vunpack.c.l.b16 %v1530
    %v1632 = vunpack.c.h.b16 %v1530
    %v1633 = vunpack.c.l.b16 %v1531
    %v1634 = vunpack.c.h.b16 %v1531
    %v1635 = vunpack.c.l.b16 %v1532
    %v1636 = vunpack.c.h.b16 %v1532
    %v1637 = vunpack.c.l.b16 %v1533
    %v1638 = vunpack.c.h.b16 %v1533
    %v1639 = vunpack.c.l.b16 %v1534
    %v1640 = vunpack.c.h.b16 %v1534
    %v1641 = vunpack.c.l.b16 %v1535
    %v1642 = vunpack.c.h.b16 %v1535
    %v1643 = vunpack.c.l.b16 %v1536
    %v1644 = vunpack.c.h.b16 %v1536
    %v1645 = vunpack.c.l.b16 %v1537
    %v1646 = vunpack.c.h.b16 %v1537
    %v1647 = vunpack.c.l.b16 %v1538
    %v1648 = vunpack.c.h.b16 %v1538
    %v1649 = vunpack.c.l.b16 %v1539
    %v1650 = vunpack.c.h.b16 %v1539
    %v1651 = vunpack.c.l.b16 %v1540
    %v1652 = vunpack.c.h.b16 %v1540
    %v1653 = vunpack.c.l.b16 %v1541
    %v1654 = vunpack.c.h.b16 %v1541
    %v1655 = vunpack.c.l.b16 %v1542
    %v1656 = vunpack.c.h.b16 %v1542
    %v1657 = vunpack.c.l.b16 %v1543
    %v1658 = vunpack.c.h.b16 %v1543
    %v1659 = vunpack.c.l.b16 %v1544
    %v1660 = vunpack.c.h.b16 %v1544
    %v1661 = vpack.c.b16 %v1599, %v1597
    %v1662 = vpack.c.b16 %v1600, %v1598
    %v1663 = vpack.c.b16 %v1603, %v1601
    %v1664 = vpack.c.b16 %v1604, %v1602
    %v1665 = vpack.c.b16 %v1607, %v1605
    %v1666 = vpack.c.b16 %v1608, %v1606
    %v1667 = vpack.c.b16 %v1611, %v1609
    %v1668 = vpack.c.b16 %v1612, %v1610
    %v1669 = vpack.c.b16 %v1615, %v1613
    %v1670 = vpack.c.b16 %v1616, %v1614
    %v1671 = vpack.c.b16 %v1619, %v1617
    %v1672 = vpack.c.b16 %v1620, %v1618
    %v1673 = vpack.c.b16 %v1623, %v1621
    %v1674 = vpack.c.b16 %v1624, %v1622
    %v1675 = vpack.c.b16 %v1627, %v1625
    %v1676 = vpack.c.b16 %v1628, %v1626
    %v1677 = vpack.c.b16 %v1631, %v1629
    %v1678 = vpack.c.b16 %v1632, %v1630
    %v1679 = vpack.c.b16 %v1635, %v1633
    %v1680 = vpack.c.b16 %v1636, %v1634
    %v1681 = vpack.c.b16 %v1639, %v1637
    %v1682 = vpack.c.b16 %v1640, %v1638
    %v1683 = vpack.c.b16 %v1643, %v1641
    %v1684 = vpack.c.b16 %v1644, %v1642
    %v1685 = vpack.c.b16 %v1647, %v1645
    %v1686 = vpack.c.b16 %v1648, %v1646
    %v1687 = vpack.c.b16 %v1651, %v1649
    %v1688 = vpack.c.b16 %v1652, %v1650
    %v1689 = vpack.c.b16 %v1655, %v1653
    %v1690 = vpack.c.b16 %v1656, %v1654
    %v1691 = vpack.c.b16 %v1659, %v1657
    %v1692 = vpack.c.b16 %v1660, %v1658
    %1725 = vmatprep.subr.bf16.mxu0 %v1662
    %1726 = vmatpush1.bf16.msra.mxu0 %v1661
    %1727 = vmatprep.subr.bf16.mxu0 %v1664
    %1728 = vmatpush1.bf16.msra.mxu0 %v1663
    %1729 = vmatprep.subr.bf16.mxu0 %v1666
    %1730 = vmatpush1.bf16.msra.mxu0 %v1665
    %1731 = vmatprep.subr.bf16.mxu0 %v1668
    %1732 = vmatpush1.bf16.msra.mxu0 %v1667
    %1733 = vmatprep.subr.bf16.mxu0 %v1670
    %1734 = vmatpush1.bf16.msra.mxu0 %v1669
    %1735 = vmatprep.subr.bf16.mxu0 %v1672
    %1736 = vmatpush1.bf16.msra.mxu0 %v1671
    %1737 = vmatprep.subr.bf16.mxu0 %v1674
    %1738 = vmatpush1.bf16.msra.mxu0 %v1673
    %1739 = vmatprep.subr.bf16.mxu0 %v1676
    %1740 = vmatpush1.bf16.msra.mxu0 %v1675
    %1741 = vmatprep.subr.bf16.mxu0 %v1678
    %1742 = vmatpush1.bf16.msra.mxu0 %v1677
    %1743 = vmatprep.subr.bf16.mxu0 %v1680
    %1744 = vmatpush1.bf16.msra.mxu0 %v1679
    %1745 = vmatprep.subr.bf16.mxu0 %v1682
    %1746 = vmatpush1.bf16.msra.mxu0 %v1681
    %1747 = vmatprep.subr.bf16.mxu0 %v1684
    %1748 = vmatpush1.bf16.msra.mxu0 %v1683
    %1749 = vmatprep.subr.bf16.mxu0 %v1686
    %1750 = vmatpush1.bf16.msra.mxu0 %v1685
    %1751 = vmatprep.subr.bf16.mxu0 %v1688
    %1752 = vmatpush1.bf16.msra.mxu0 %v1687
    %1753 = vmatprep.subr.bf16.mxu0 %v1690
    %1754 = vmatpush1.bf16.msra.mxu0 %v1689
    %1755 = vmatprep.subr.bf16.mxu0 %v1692
    %1756 = vmatpush1.bf16.msra.mxu0 %v1691
    %1757 = vmatprep.mubr.bf16.mxu0 %v1550
    %1758 = vmatmul.mubr.bf16.gmra.mrb[0].mxu0 %v1549
    %v1759 = vpop.f32.mrb[0].mxu0
    %v1760 = vadd.f32 0.0, %v1759
    %v1761 = vpop.f32.mrb[0].mxu0
    %v1762 = vadd.f32 0.0, %v1761
    %v1763 = vpop.f32.mrb[0].mxu0
    %v1764 = vadd.f32 0.0, %v1763
    %v1765 = vpop.f32.mrb[0].mxu0
    %v1766 = vadd.f32 0.0, %v1765
    %1767 = vmatprep.mubr.bf16.mxu0 %v1552
    %1768 = vmatmul.mubr.bf16.gmra.mrb[0].mxu0 %v1551
    %v1769 = vpop.f32.mrb[0].mxu0
    %v1770 = vadd.f32 0.0, %v1769
    %v1771 = vpop.f32.mrb[0].mxu0
    %v1772 = vadd.f32 0.0, %v1771
    %v1773 = vpop.f32.mrb[0].mxu0
    %v1774 = vadd.f32 0.0, %v1773
    %v1775 = vpop.f32.mrb[0].mxu0
    %v1776 = vadd.f32 0.0, %v1775
    %1777 = vmatprep.mubr.bf16.mxu0 %v1554
    %1778 = vmatmul.mubr.bf16.gmra.mrb[0].mxu0 %v1553
    %v1779 = vpop.f32.mrb[0].mxu0
    %v1780 = vadd.f32 0.0, %v1779
    %v1781 = vpop.f32.mrb[0].mxu0
    %v1782 = vadd.f32 0.0, %v1781
    %v1783 = vpop.f32.mrb[0].mxu0
    %v1784 = vadd.f32 0.0, %v1783
    %v1785 = vpop.f32.mrb[0].mxu0
    %v1786 = vadd.f32 0.0, %v1785
    %1787 = vmatprep.mubr.bf16.mxu0 %v1556
    %1788 = vmatmul.mubr.bf16.gmra.mrb[0].mxu0 %v1555
    %v1789 = vpop.f32.mrb[0].mxu0
    %v1790 = vadd.f32 0.0, %v1789
    %v1791 = vpop.f32.mrb[0].mxu0
    %v1792 = vadd.f32 0.0, %v1791
    %v1793 = vpop.f32.mrb[0].mxu0
    %v1794 = vadd.f32 0.0, %v1793
    %v1795 = vpop.f32.mrb[0].mxu0
    %v1796 = vadd.f32 0.0, %v1795
    %1797 = vmatprep.mubr.bf16.mxu0 %v1558
    %1798 = vmatmul.mubr.bf16.gmra.mrb[0].mxu0 %v1557
    %v1799 = vpop.f32.mrb[0].mxu0
    %v1800 = vadd.f32 0.0, %v1799
    %v1801 = vpop.f32.mrb[0].mxu0
    %v1802 = vadd.f32 0.0, %v1801
    %v1803 = vpop.f32.mrb[0].mxu0
    %v1804 = vadd.f32 0.0, %v1803
    %v1805 = vpop.f32.mrb[0].mxu0
    %v1806 = vadd.f32 0.0, %v1805
    %1807 = vmatprep.mubr.bf16.mxu0 %v1560
    %1808 = vmatmul.mubr.bf16.gmra.mrb[0].mxu0 %v1559
    %v1809 = vpop.f32.mrb[0].mxu0
    %v1810 = vadd.f32 0.0, %v1809
    %v1811 = vpop.f32.mrb[0].mxu0
    %v1812 = vadd.f32 0.0, %v1811
    %v1813 = vpop.f32.mrb[0].mxu0
    %v1814 = vadd.f32 0.0, %v1813
    %v1815 = vpop.f32.mrb[0].mxu0
    %v1816 = vadd.f32 0.0, %v1815
    %1817 = vmatprep.mubr.bf16.mxu0 %v1562
    %1818 = vmatmul.mubr.bf16.gmra.mrb[0].mxu0 %v1561
    %v1819 = vpop.f32.mrb[0].mxu0
    %v1820 = vadd.f32 0.0, %v1819
    %v1821 = vpop.f32.mrb[0].mxu0
    %v1822 = vadd.f32 0.0, %v1821
    %v1823 = vpop.f32.mrb[0].mxu0
    %v1824 = vadd.f32 0.0, %v1823
    %v1825 = vpop.f32.mrb[0].mxu0
    %v1826 = vadd.f32 0.0, %v1825
    %1827 = vmatprep.mubr.bf16.mxu0 %v1564
    %1828 = vmatmul.mubr.bf16.gmra.mrb[0].mxu0 %v1563
    %v1829 = vpop.f32.mrb[0].mxu0
    %v1830 = vadd.f32 0.0, %v1829
    %v1831 = vpop.f32.mrb[0].mxu0
    %v1832 = vadd.f32 0.0, %v1831
    %v1833 = vpop.f32.mrb[0].mxu0
    %v1834 = vadd.f32 0.0, %v1833
    %v1835 = vpop.f32.mrb[0].mxu0
    %v1836 = vadd.f32 0.0, %v1835
    %1837 = vdwg.mxu0
    %v1838 = vpack.c.bf16 %v1764, %v1760
    %v1839 = vpack.c.bf16 %v1766, %v1762
    %v1840 = vpack.c.bf16 %v1774, %v1770
    %v1841 = vpack.c.bf16 %v1776, %v1772
    %v1842 = vpack.c.bf16 %v1784, %v1780
    %v1843 = vpack.c.bf16 %v1786, %v1782
    %v1844 = vpack.c.bf16 %v1794, %v1790
    %v1845 = vpack.c.bf16 %v1796, %v1792
    %v1846 = vpack.c.bf16 %v1804, %v1800
    %v1847 = vpack.c.bf16 %v1806, %v1802
    %v1848 = vpack.c.bf16 %v1814, %v1810
    %v1849 = vpack.c.bf16 %v1816, %v1812
    %v1850 = vpack.c.bf16 %v1824, %v1820
    %v1851 = vpack.c.bf16 %v1826, %v1822
    %v1852 = vpack.c.bf16 %v1834, %v1830
    %v1853 = vpack.c.bf16 %v1836, %v1832
    %1854 = vmatprep.subr.bf16.mxu0 %v1839
    %1855 = vmatpush1.bf16.msra.mxu0 %v1838
    %1856 = vmatprep.subr.bf16.mxu0 %v1841
    %1857 = vmatpush1.bf16.msra.mxu0 %v1840
    %1858 = vmatprep.subr.bf16.mxu0 %v1843
    %1859 = vmatpush1.bf16.msra.mxu0 %v1842
    %1860 = vmatprep.subr.bf16.mxu0 %v1845
    %1861 = vmatpush1.bf16.msra.mxu0 %v1844
    %1862 = vmatprep.subr.bf16.mxu0 %v1847
    %1863 = vmatpush1.bf16.msra.mxu0 %v1846
    %1864 = vmatprep.subr.bf16.mxu0 %v1849
    %1865 = vmatpush1.bf16.msra.mxu0 %v1848
    %1866 = vmatprep.subr.bf16.mxu0 %v1851
    %1867 = vmatpush1.bf16.msra.mxu0 %v1850
    %1868 = vmatprep.subr.bf16.mxu0 %v1853
    %1869 = vmatpush1.bf16.msra.mxu0 %v1852
    %1870 = vmatprep.subr.bf16.mxu0 0
    %1871 = vmatpush1.bf16.msra.mxu0 0
    %1872 = vmatprep.subr.bf16.mxu0 0
    %1873 = vmatpush1.bf16.msra.mxu0 0
    %1874 = vmatprep.subr.bf16.mxu0 0
    %1875 = vmatpush1.bf16.msra.mxu0 0
    %1876 = vmatprep.subr.bf16.mxu0 0
    %1877 = vmatpush1.bf16.msra.mxu0 0
    %1878 = vmatprep.subr.bf16.mxu0 0
    %1879 = vmatpush1.bf16.msra.mxu0 0
    %1880 = vmatprep.subr.bf16.mxu0 0
    %1881 = vmatpush1.bf16.msra.mxu0 0
    %1882 = vmatprep.subr.bf16.mxu0 0
    %1883 = vmatpush1.bf16.msra.mxu0 0
    %1884 = vmatprep.subr.bf16.mxu0 0
    %1885 = vmatpush1.bf16.msra.mxu0 0
    %1886 = vmatprep.mubr.bf16.mxu0 0
    %1887 = vmatmul.mubr.bf16.gmra.mrb[0].mxu0 1065369472
    %v1888 = vpop.f32.mrb[0].mxu0
    %v1889 = vadd.f32 0.0, %v1888
    %v1890 = vpop.f32.mrb[0].mxu0
    %v1891 = vadd.f32 0.0, %v1890
    %v1892 = vpop.f32.mrb[0].mxu0
    %v1893 = vpop.f32.mrb[0].mxu0
    %1894 = vdwg.mxu0
    %v1895 = vmul.bf16 %v1838, %v1838
    %v1896 = vmul.bf16 %v1839, %v1839
    %v1897 = vmul.bf16 %v1840, %v1840
    %v1898 = vmul.bf16 %v1841, %v1841
    %v1899 = vmul.bf16 %v1842, %v1842
    %v1900 = vmul.bf16 %v1843, %v1843
    %v1901 = vmul.bf16 %v1844, %v1844
    %v1902 = vmul.bf16 %v1845, %v1845
    %v1903 = vmul.bf16 %v1846, %v1846
    %v1904 = vmul.bf16 %v1847, %v1847
    %v1905 = vmul.bf16 %v1848, %v1848
    %v1906 = vmul.bf16 %v1849, %v1849
    %v1907 = vmul.bf16 %v1850, %v1850
    %v1908 = vmul.bf16 %v1851, %v1851
    %v1909 = vmul.bf16 %v1852, %v1852
    %v1910 = vmul.bf16 %v1853, %v1853
    %1911 = vmatprep.subr.bf16.mxu0 %v1896
    %1912 = vmatpush1.bf16.msra.mxu0 %v1895
    %1913 = vmatprep.subr.bf16.mxu0 %v1898
    %1914 = vmatpush1.bf16.msra.mxu0 %v1897
    %1915 = vmatprep.subr.bf16.mxu0 %v1900
    %1916 = vmatpush1.bf16.msra.mxu0 %v1899
    %1917 = vmatprep.subr.bf16.mxu0 %v1902
    %1918 = vmatpush1.bf16.msra.mxu0 %v1901
    %1919 = vmatprep.subr.bf16.mxu0 %v1904
    %1920 = vmatpush1.bf16.msra.mxu0 %v1903
    %1921 = vmatprep.subr.bf16.mxu0 %v1906
    %1922 = vmatpush1.bf16.msra.mxu0 %v1905
    %1923 = vmatprep.subr.bf16.mxu0 %v1908
    %1924 = vmatpush1.bf16.msra.mxu0 %v1907
    %1925 = vmatprep.subr.bf16.mxu0 %v1910
    %1926 = vmatpush1.bf16.msra.mxu0 %v1909
    %1927 = vmatprep.subr.bf16.mxu0 0
    %1928 = vmatpush1.bf16.msra.mxu0 0
    %1929 = vmatprep.subr.bf16.mxu0 0
    %1930 = vmatpush1.bf16.msra.mxu0 0
    %1931 = vmatprep.subr.bf16.mxu0 0
    %1932 = vmatpush1.bf16.msra.mxu0 0
    %1933 = vmatprep.subr.bf16.mxu0 0
    %1934 = vmatpush1.bf16.msra.mxu0 0
    %1935 = vmatprep.subr.bf16.mxu0 0
    %1936 = vmatpush1.bf16.msra.mxu0 0
    %1937 = vmatprep.subr.bf16.mxu0 0
    %1938 = vmatpush1.bf16.msra.mxu0 0
    %1939 = vmatprep.subr.bf16.mxu0 0
    %1940 = vmatpush1.bf16.msra.mxu0 0
    %1941 = vmatprep.subr.bf16.mxu0 0
    %1942 = vmatpush1.bf16.msra.mxu0 0
    %1943 = vmatprep.mubr.bf16.mxu0 0
    %1944 = vmatmul.mubr.bf16.gmra.mrb[0].mxu0 1065369472
    %v1945 = vpop.f32.mrb[0].mxu0
    %v1946 = vadd.f32 0.0, %v1945
    %v1947 = vpop.f32.mrb[0].mxu0
    %v1948 = vadd.f32 0.0, %v1947
    %v1949 = vpop.f32.mrb[0].mxu0
    %v1950 = vpop.f32.mrb[0].mxu0
    %1951 = vdwg.mxu0
    %v1952 = vmul.f32 %v1889, 0.0078125
    %v1953 = vmul.f32 %v1891, 0.0078125
    %v1954 = vmul.f32 %v1946, 0.0078125
    %v1955 = vmul.f32 %v1948, 0.0078125
    %v1956 = vmul.f32 %v1952, %v1952
    %v1957 = vmul.f32 %v1953, %v1953
    %v1958 = vsub.f32 %v1954, %v1956
    %v1959 = vsub.f32 %v1955, %v1957
    %v1960 = vadd.f32 %v1958, 0.9
    %v1961 = vadd.f32 %v1959, 0.9
    %v1962 = vrsqrt.pop %v1960
    %v1963 = vrsqrt.pop %v1961
    %v1966 = vcombine.low %v1962, %v1963
    %v1968 = vunpack.c.l.s4 1966171168
    %v1969 = vunpack.c.0.s8 %v1968
    %v1970 = vlaneseq
    %v1971 = vshrl.u32 %v1970, 7
    %v1972 = vsub.s32 %v1969, %v1971
    %v1973 = vrot.slane %v1966, %v1972
    %v1975 = vunpack.c.l.s4 1966171168
    %v1976 = vunpack.c.0.s8 %v1975
    %v1977 = vlaneseq
    %v1978 = vshrl.u32 %v1977, 7
    %v1979 = vsub.s32 %v1976, %v1978
    %v1980 = vrot.slane %v1973, %v1979
    %v1982 = vmul.f32 %v1546, %v1980
    %v1984 = vlaneseq
    %v1985 = vshrl.u32 %v1984, 7
    %v1986 = vsub.s32 0, %v1985
    %v1987 = vrot.slane %v1982, %v1986
    %v1988 = vlaneseq
    %v1989 = vshrl.u32 %v1988, 7
    %v1990 = vsub.s32 1, %v1989
    %v1991 = vrot.slane %v1982, %v1990
    %v1994 = vmul.f32 %v1952, %v1987
    %v1995 = vmul.f32 %v1953, %v1991
    %v1998 = vcombine.low %v1994, %v1995
    %v2000 = vunpack.c.l.s4 1966171168
    %v2001 = vunpack.c.0.s8 %v2000
    %v2002 = vlaneseq
    %v2003 = vshrl.u32 %v2002, 7
    %v2004 = vsub.s32 %v2001, %v2003
    %v2005 = vrot.slane %v1998, %v2004
    %v2007 = vunpack.c.l.s4 1966171168
    %v2008 = vunpack.c.0.s8 %v2007
    %v2009 = vlaneseq
    %v2010 = vshrl.u32 %v2009, 7
    %v2011 = vsub.s32 %v2008, %v2010
    %v2012 = vrot.slane %v2005, %v2011
    %v2014 = vsub.f32 %v1548, %v2012
    %v2015 = vmul.f32 %v1760, %v1987
    %v2016 = vmul.f32 %v1762, %v1991
    %v2017 = vmul.f32 %v1764, %v1987
    %v2018 = vmul.f32 %v1766, %v1991
    %v2019 = vmul.f32 %v1770, %v1987
    %v2020 = vmul.f32 %v1772, %v1991
    %v2021 = vmul.f32 %v1774, %v1987
    %v2022 = vmul.f32 %v1776, %v1991
    %v2023 = vmul.f32 %v1780, %v1987
    %v2024 = vmul.f32 %v1782, %v1991
    %v2025 = vmul.f32 %v1784, %v1987
    %v2026 = vmul.f32 %v1786, %v1991
    %v2027 = vmul.f32 %v1790, %v1987
    %v2028 = vmul.f32 %v1792, %v1991
    %v2029 = vmul.f32 %v1794, %v1987
    %v2030 = vmul.f32 %v1796, %v1991
    %v2031 = vmul.f32 %v1800, %v1987
    %v2032 = vmul.f32 %v1802, %v1991
    %v2033 = vmul.f32 %v1804, %v1987
    %v2034 = vmul.f32 %v1806, %v1991
    %v2035 = vmul.f32 %v1810, %v1987
    %v2036 = vmul.f32 %v1812, %v1991
    %v2037 = vmul.f32 %v1814, %v1987
    %v2038 = vmul.f32 %v1816, %v1991
    %v2039 = vmul.f32 %v1820, %v1987
    %v2040 = vmul.f32 %v1822, %v1991
    %v2041 = vmul.f32 %v1824, %v1987
    %v2042 = vmul.f32 %v1826, %v1991
    %v2043 = vmul.f32 %v1830, %v1987
    %v2044 = vmul.f32 %v1832, %v1991
    %v2045 = vmul.f32 %v1834, %v1987
    %v2046 = vmul.f32 %v1836, %v1991
    %v2048 = vlaneseq
    %v2049 = vshrl.u32 %v2048, 7
    %v2050 = vsub.s32 0, %v2049
    %v2051 = vrot.slane %v2014, %v2050
    %v2052 = vlaneseq
    %v2053 = vshrl.u32 %v2052, 7
    %v2054 = vsub.s32 1, %v2053
    %v2055 = vrot.slane %v2014, %v2054
    %v2058 = vadd.f32 %v2015, %v2051
    %v2059 = vadd.f32 %v2016, %v2055
    %v2060 = vadd.f32 %v2017, %v2051
    %v2061 = vadd.f32 %v2018, %v2055
    %v2062 = vadd.f32 %v2019, %v2051
    %v2063 = vadd.f32 %v2020, %v2055
    %v2064 = vadd.f32 %v2021, %v2051
    %v2065 = vadd.f32 %v2022, %v2055
    %v2066 = vadd.f32 %v2023, %v2051
    %v2067 = vadd.f32 %v2024, %v2055
    %v2068 = vadd.f32 %v2025, %v2051
    %v2069 = vadd.f32 %v2026, %v2055
    %v2070 = vadd.f32 %v2027, %v2051
    %v2071 = vadd.f32 %v2028, %v2055
    %v2072 = vadd.f32 %v2029, %v2051
    %v2073 = vadd.f32 %v2030, %v2055
    %v2074 = vadd.f32 %v2031, %v2051
    %v2075 = vadd.f32 %v2032, %v2055
    %v2076 = vadd.f32 %v2033, %v2051
    %v2077 = vadd.f32 %v2034, %v2055
    %v2078 = vadd.f32 %v2035, %v2051
    %v2079 = vadd.f32 %v2036, %v2055
    %v2080 = vadd.f32 %v2037, %v2051
    %v2081 = vadd.f32 %v2038, %v2055
    %v2082 = vadd.f32 %v2039, %v2051
    %v2083 = vadd.f32 %v2040, %v2055
    %v2084 = vadd.f32 %v2041, %v2051
    %v2085 = vadd.f32 %v2042, %v2055
    %v2086 = vadd.f32 %v2043, %v2051
    %v2087 = vadd.f32 %v2044, %v2055
    %v2088 = vadd.f32 %v2045, %v2051
    %v2089 = vadd.f32 %v2046, %v2055
    %vm2090 = vcmp.gt.f32.partialorder %v2058, 0.0
    %vm2091 = vcmp.gt.f32.partialorder %v2059, 0.0
    %vm2092 = vcmp.gt.f32.partialorder %v2060, 0.0
    %vm2093 = vcmp.gt.f32.partialorder %v2061, 0.0
    %vm2094 = vcmp.gt.f32.partialorder %v2062, 0.0
    %vm2095 = vcmp.gt.f32.partialorder %v2063, 0.0
    %vm2096 = vcmp.gt.f32.partialorder %v2064, 0.0
    %vm2097 = vcmp.gt.f32.partialorder %v2065, 0.0
    %vm2098 = vcmp.gt.f32.partialorder %v2066, 0.0
    %vm2099 = vcmp.gt.f32.partialorder %v2067, 0.0
    %vm2100 = vcmp.gt.f32.partialorder %v2068, 0.0
    %vm2101 = vcmp.gt.f32.partialorder %v2069, 0.0
    %vm2102 = vcmp.gt.f32.partialorder %v2070, 0.0
    %vm2103 = vcmp.gt.f32.partialorder %v2071, 0.0
    %vm2104 = vcmp.gt.f32.partialorder %v2072, 0.0
    %vm2105 = vcmp.gt.f32.partialorder %v2073, 0.0
    %vm2106 = vcmp.gt.f32.partialorder %v2074, 0.0
    %vm2107 = vcmp.gt.f32.partialorder %v2075, 0.0
    %vm2108 = vcmp.gt.f32.partialorder %v2076, 0.0
    %vm2109 = vcmp.gt.f32.partialorder %v2077, 0.0
    %vm2110 = vcmp.gt.f32.partialorder %v2078, 0.0
    %vm2111 = vcmp.gt.f32.partialorder %v2079, 0.0
    %vm2112 = vcmp.gt.f32.partialorder %v2080, 0.0
    %vm2113 = vcmp.gt.f32.partialorder %v2081, 0.0
    %vm2114 = vcmp.gt.f32.partialorder %v2082, 0.0
    %vm2115 = vcmp.gt.f32.partialorder %v2083, 0.0
    %vm2116 = vcmp.gt.f32.partialorder %v2084, 0.0
    %vm2117 = vcmp.gt.f32.partialorder %v2085, 0.0
    %vm2118 = vcmp.gt.f32.partialorder %v2086, 0.0
    %vm2119 = vcmp.gt.f32.partialorder %v2087, 0.0
    %vm2120 = vcmp.gt.f32.partialorder %v2088, 0.0
    %vm2121 = vcmp.gt.f32.partialorder %v2089, 0.0
    %v2122 = vmul.f32 %v2058, 0.3
    %v2123 = vmul.f32 %v2059, 0.3
    %v2124 = vmul.f32 %v2060, 0.3
    %v2125 = vmul.f32 %v2061, 0.3
    %v2126 = vmul.f32 %v2062, 0.3
    %v2127 = vmul.f32 %v2063, 0.3
    %v2128 = vmul.f32 %v2064, 0.3
    %v2129 = vmul.f32 %v2065, 0.3
    %v2130 = vmul.f32 %v2066, 0.3
    %v2131 = vmul.f32 %v2067, 0.3
    %v2132 = vmul.f32 %v2068, 0.3
    %v2133 = vmul.f32 %v2069, 0.3
    %v2134 = vmul.f32 %v2070, 0.3
    %v2135 = vmul.f32 %v2071, 0.3
    %v2136 = vmul.f32 %v2072, 0.3
    %v2137 = vmul.f32 %v2073, 0.3
    %v2138 = vmul.f32 %v2074, 0.3
    %v2139 = vmul.f32 %v2075, 0.3
    %v2140 = vmul.f32 %v2076, 0.3
    %v2141 = vmul.f32 %v2077, 0.3
    %v2142 = vmul.f32 %v2078, 0.3
    %v2143 = vmul.f32 %v2079, 0.3
    %v2144 = vmul.f32 %v2080, 0.3
    %v2145 = vmul.f32 %v2081, 0.3
    %v2146 = vmul.f32 %v2082, 0.3
    %v2147 = vmul.f32 %v2083, 0.3
    %v2148 = vmul.f32 %v2084, 0.3
    %v2149 = vmul.f32 %v2085, 0.3
    %v2150 = vmul.f32 %v2086, 0.3
    %v2151 = vmul.f32 %v2087, 0.3
    %v2152 = vmul.f32 %v2088, 0.3
    %v2153 = vmul.f32 %v2089, 0.3
    %v2154 = vsel %vm2090, %v2058, %v2122
    %v2155 = vsel %vm2091, %v2059, %v2123
    %v2156 = vsel %vm2092, %v2060, %v2124
    %v2157 = vsel %vm2093, %v2061, %v2125
    %v2158 = vsel %vm2094, %v2062, %v2126
    %v2159 = vsel %vm2095, %v2063, %v2127
    %v2160 = vsel %vm2096, %v2064, %v2128
    %v2161 = vsel %vm2097, %v2065, %v2129
    %v2162 = vsel %vm2098, %v2066, %v2130
    %v2163 = vsel %vm2099, %v2067, %v2131
    %v2164 = vsel %vm2100, %v2068, %v2132
    %v2165 = vsel %vm2101, %v2069, %v2133
    %v2166 = vsel %vm2102, %v2070, %v2134
    %v2167 = vsel %vm2103, %v2071, %v2135
    %v2168 = vsel %vm2104, %v2072, %v2136
    %v2169 = vsel %vm2105, %v2073, %v2137
    %v2170 = vsel %vm2106, %v2074, %v2138
    %v2171 = vsel %vm2107, %v2075, %v2139
    %v2172 = vsel %vm2108, %v2076, %v2140
    %v2173 = vsel %vm2109, %v2077, %v2141
    %v2174 = vsel %vm2110, %v2078, %v2142
    %v2175 = vsel %vm2111, %v2079, %v2143
    %v2176 = vsel %vm2112, %v2080, %v2144
    %v2177 = vsel %vm2113, %v2081, %v2145
    %v2178 = vsel %vm2114, %v2082, %v2146
    %v2179 = vsel %vm2115, %v2083, %v2147
    %v2180 = vsel %vm2116, %v2084, %v2148
    %v2181 = vsel %vm2117, %v2085, %v2149
    %v2182 = vsel %vm2118, %v2086, %v2150
    %v2183 = vsel %vm2119, %v2087, %v2151
    %v2184 = vsel %vm2120, %v2088, %v2152
    %v2185 = vsel %vm2121, %v2089, %v2153
    %s2186 = scalar_lea.vmem [#allocation5], 512
    %v2187 = vld [vmem:[%s2186] sm:$0xff]
    %v2188 = vld [vmem:[%s2186 + $0x8] sm:$0xff]
    %v2189 = vld [vmem:[%s2186 + $0x10] sm:$0xff]
    %v2190 = vld [vmem:[%s2186 + $0x18] sm:$0xff]
    %v2191 = vld [vmem:[%s2186 + $0x20] sm:$0xff]
    %v2192 = vld [vmem:[%s2186 + $0x28] sm:$0xff]
    %v2193 = vld [vmem:[%s2186 + $0x30] sm:$0xff]
    %v2194 = vld [vmem:[%s2186 + $0x38] sm:$0xff]
    %v2195 = vld [vmem:[%s2186 + $0x40] sm:$0xff]
    %v2196 = vld [vmem:[%s2186 + $0x48] sm:$0xff]
    %v2197 = vld [vmem:[%s2186 + $0x50] sm:$0xff]
    %v2198 = vld [vmem:[%s2186 + $0x58] sm:$0xff]
    %v2199 = vld [vmem:[%s2186 + $0x60] sm:$0xff]
    %v2200 = vld [vmem:[%s2186 + $0x68] sm:$0xff]
    %v2201 = vld [vmem:[%s2186 + $0x70] sm:$0xff]
    %v2202 = vld [vmem:[%s2186 + $0x78] sm:$0xff]
    %v2203 = vld [vmem:[%s2186 + $0x80] sm:$0xff]
    %v2204 = vld [vmem:[%s2186 + $0x88] sm:$0xff]
    %v2205 = vld [vmem:[%s2186 + $0x90] sm:$0xff]
    %v2206 = vld [vmem:[%s2186 + $0x98] sm:$0xff]
    %v2207 = vld [vmem:[%s2186 + $0xa0] sm:$0xff]
    %v2208 = vld [vmem:[%s2186 + $0xa8] sm:$0xff]
    %v2209 = vld [vmem:[%s2186 + $0xb0] sm:$0xff]
    %v2210 = vld [vmem:[%s2186 + $0xb8] sm:$0xff]
    %v2211 = vld [vmem:[%s2186 + $0xc0] sm:$0xff]
    %v2212 = vld [vmem:[%s2186 + $0xc8] sm:$0xff]
    %v2213 = vld [vmem:[%s2186 + $0xd0] sm:$0xff]
    %v2214 = vld [vmem:[%s2186 + $0xd8] sm:$0xff]
    %v2215 = vld [vmem:[%s2186 + $0xe0] sm:$0xff]
    %v2216 = vld [vmem:[%s2186 + $0xe8] sm:$0xff]
    %v2217 = vld [vmem:[%s2186 + $0xf0] sm:$0xff]
    %v2218 = vld [vmem:[%s2186 + $0xf8] sm:$0xff]
    %s2219 = scalar_lea.vmem %s5, 6
    %v2220 = vld [vmem:[%s2219] ss:$8 sm:$0x3]
    %s2221 = scalar_lea.vmem %s5, 7
    %v2222 = vld [vmem:[%s2221] ss:$8 sm:$0x3]
    %v2223 = vpack.c.bf16 %v2156, %v2154
    %v2224 = vpack.c.bf16 %v2157, %v2155
    %v2225 = vpack.c.bf16 %v2160, %v2158
    %v2226 = vpack.c.bf16 %v2161, %v2159
    %v2227 = vpack.c.bf16 %v2164, %v2162
    %v2228 = vpack.c.bf16 %v2165, %v2163
    %v2229 = vpack.c.bf16 %v2168, %v2166
    %v2230 = vpack.c.bf16 %v2169, %v2167
    %v2231 = vpack.c.bf16 %v2172, %v2170
    %v2232 = vpack.c.bf16 %v2173, %v2171
    %v2233 = vpack.c.bf16 %v2176, %v2174
    %v2234 = vpack.c.bf16 %v2177, %v2175
    %v2235 = vpack.c.bf16 %v2180, %v2178
    %v2236 = vpack.c.bf16 %v2181, %v2179
    %v2237 = vpack.c.bf16 %v2184, %v2182
    %v2238 = vpack.c.bf16 %v2185, %v2183
    %v2271 = vunpack.c.l.b16 %v2187
    %v2272 = vunpack.c.h.b16 %v2187
    %v2273 = vunpack.c.l.b16 %v2188
    %v2274 = vunpack.c.h.b16 %v2188
    %v2275 = vunpack.c.l.b16 %v2189
    %v2276 = vunpack.c.h.b16 %v2189
    %v2277 = vunpack.c.l.b16 %v2190
    %v2278 = vunpack.c.h.b16 %v2190
    %v2279 = vunpack.c.l.b16 %v2191
    %v2280 = vunpack.c.h.b16 %v2191
    %v2281 = vunpack.c.l.b16 %v2192
    %v2282 = vunpack.c.h.b16 %v2192
    %v2283 = vunpack.c.l.b16 %v2193
    %v2284 = vunpack.c.h.b16 %v2193
    %v2285 = vunpack.c.l.b16 %v2194
    %v2286 = vunpack.c.h.b16 %v2194
    %v2287 = vunpack.c.l.b16 %v2195
    %v2288 = vunpack.c.h.b16 %v2195
    %v2289 = vunpack.c.l.b16 %v2196
    %v2290 = vunpack.c.h.b16 %v2196
    %v2291 = vunpack.c.l.b16 %v2197
    %v2292 = vunpack.c.h.b16 %v2197
    %v2293 = vunpack.c.l.b16 %v2198
    %v2294 = vunpack.c.h.b16 %v2198
    %v2295 = vunpack.c.l.b16 %v2199
    %v2296 = vunpack.c.h.b16 %v2199
    %v2297 = vunpack.c.l.b16 %v2200
    %v2298 = vunpack.c.h.b16 %v2200
    %v2299 = vunpack.c.l.b16 %v2201
    %v2300 = vunpack.c.h.b16 %v2201
    %v2301 = vunpack.c.l.b16 %v2202
    %v2302 = vunpack.c.h.b16 %v2202
    %v2303 = vunpack.c.l.b16 %v2203
    %v2304 = vunpack.c.h.b16 %v2203
    %v2305 = vunpack.c.l.b16 %v2204
    %v2306 = vunpack.c.h.b16 %v2204
    %v2307 = vunpack.c.l.b16 %v2205
    %v2308 = vunpack.c.h.b16 %v2205
    %v2309 = vunpack.c.l.b16 %v2206
    %v2310 = vunpack.c.h.b16 %v2206
    %v2311 = vunpack.c.l.b16 %v2207
    %v2312 = vunpack.c.h.b16 %v2207
    %v2313 = vunpack.c.l.b16 %v2208
    %v2314 = vunpack.c.h.b16 %v2208
    %v2315 = vunpack.c.l.b16 %v2209
    %v2316 = vunpack.c.h.b16 %v2209
    %v2317 = vunpack.c.l.b16 %v2210
    %v2318 = vunpack.c.h.b16 %v2210
    %v2319 = vunpack.c.l.b16 %v2211
    %v2320 = vunpack.c.h.b16 %v2211
    %v2321 = vunpack.c.l.b16 %v2212
    %v2322 = vunpack.c.h.b16 %v2212
    %v2323 = vunpack.c.l.b16 %v2213
    %v2324 = vunpack.c.h.b16 %v2213
    %v2325 = vunpack.c.l.b16 %v2214
    %v2326 = vunpack.c.h.b16 %v2214
    %v2327 = vunpack.c.l.b16 %v2215
    %v2328 = vunpack.c.h.b16 %v2215
    %v2329 = vunpack.c.l.b16 %v2216
    %v2330 = vunpack.c.h.b16 %v2216
    %v2331 = vunpack.c.l.b16 %v2217
    %v2332 = vunpack.c.h.b16 %v2217
    %v2333 = vunpack.c.l.b16 %v2218
    %v2334 = vunpack.c.h.b16 %v2218
    %v2335 = vpack.c.b16 %v2273, %v2271
    %v2336 = vpack.c.b16 %v2274, %v2272
    %v2337 = vpack.c.b16 %v2277, %v2275
    %v2338 = vpack.c.b16 %v2278, %v2276
    %v2339 = vpack.c.b16 %v2281, %v2279
    %v2340 = vpack.c.b16 %v2282, %v2280
    %v2341 = vpack.c.b16 %v2285, %v2283
    %v2342 = vpack.c.b16 %v2286, %v2284
    %v2343 = vpack.c.b16 %v2289, %v2287
    %v2344 = vpack.c.b16 %v2290, %v2288
    %v2345 = vpack.c.b16 %v2293, %v2291
    %v2346 = vpack.c.b16 %v2294, %v2292
    %v2347 = vpack.c.b16 %v2297, %v2295
    %v2348 = vpack.c.b16 %v2298, %v2296
    %v2349 = vpack.c.b16 %v2301, %v2299
    %v2350 = vpack.c.b16 %v2302, %v2300
    %v2351 = vpack.c.b16 %v2305, %v2303
    %v2352 = vpack.c.b16 %v2306, %v2304
    %v2353 = vpack.c.b16 %v2309, %v2307
    %v2354 = vpack.c.b16 %v2310, %v2308
    %v2355 = vpack.c.b16 %v2313, %v2311
    %v2356 = vpack.c.b16 %v2314, %v2312
    %v2357 = vpack.c.b16 %v2317, %v2315
    %v2358 = vpack.c.b16 %v2318, %v2316
    %v2359 = vpack.c.b16 %v2321, %v2319
    %v2360 = vpack.c.b16 %v2322, %v2320
    %v2361 = vpack.c.b16 %v2325, %v2323
    %v2362 = vpack.c.b16 %v2326, %v2324
    %v2363 = vpack.c.b16 %v2329, %v2327
    %v2364 = vpack.c.b16 %v2330, %v2328
    %v2365 = vpack.c.b16 %v2333, %v2331
    %v2366 = vpack.c.b16 %v2334, %v2332
    %2399 = vmatprep.subr.bf16.mxu0 %v2336
    %2400 = vmatpush1.bf16.msra.mxu0 %v2335
    %2401 = vmatprep.subr.bf16.mxu0 %v2338
    %2402 = vmatpush1.bf16.msra.mxu0 %v2337
    %2403 = vmatprep.subr.bf16.mxu0 %v2340
    %2404 = vmatpush1.bf16.msra.mxu0 %v2339
    %2405 = vmatprep.subr.bf16.mxu0 %v2342
    %2406 = vmatpush1.bf16.msra.mxu0 %v2341
    %2407 = vmatprep.subr.bf16.mxu0 %v2344
    %2408 = vmatpush1.bf16.msra.mxu0 %v2343
    %2409 = vmatprep.subr.bf16.mxu0 %v2346
    %2410 = vmatpush1.bf16.msra.mxu0 %v2345
    %2411 = vmatprep.subr.bf16.mxu0 %v2348
    %2412 = vmatpush1.bf16.msra.mxu0 %v2347
    %2413 = vmatprep.subr.bf16.mxu0 %v2350
    %2414 = vmatpush1.bf16.msra.mxu0 %v2349
    %2415 = vmatprep.subr.bf16.mxu0 %v2352
    %2416 = vmatpush1.bf16.msra.mxu0 %v2351
    %2417 = vmatprep.subr.bf16.mxu0 %v2354
    %2418 = vmatpush1.bf16.msra.mxu0 %v2353
    %2419 = vmatprep.subr.bf16.mxu0 %v2356
    %2420 = vmatpush1.bf16.msra.mxu0 %v2355
    %2421 = vmatprep.subr.bf16.mxu0 %v2358
    %2422 = vmatpush1.bf16.msra.mxu0 %v2357
    %2423 = vmatprep.subr.bf16.mxu0 %v2360
    %2424 = vmatpush1.bf16.msra.mxu0 %v2359
    %2425 = vmatprep.subr.bf16.mxu0 %v2362
    %2426 = vmatpush1.bf16.msra.mxu0 %v2361
    %2427 = vmatprep.subr.bf16.mxu0 %v2364
    %2428 = vmatpush1.bf16.msra.mxu0 %v2363
    %2429 = vmatprep.subr.bf16.mxu0 %v2366
    %2430 = vmatpush1.bf16.msra.mxu0 %v2365
    %2431 = vmatprep.mubr.bf16.mxu0 %v2224
    %2432 = vmatmul.mubr.bf16.gmra.mrb[0].mxu0 %v2223
    %v2433 = vpop.f32.mrb[0].mxu0
    %v2434 = vadd.f32 0.0, %v2433
    %v2435 = vpop.f32.mrb[0].mxu0
    %v2436 = vadd.f32 0.0, %v2435
    %v2437 = vpop.f32.mrb[0].mxu0
    %v2438 = vadd.f32 0.0, %v2437
    %v2439 = vpop.f32.mrb[0].mxu0
    %v2440 = vadd.f32 0.0, %v2439
    %2441 = vmatprep.mubr.bf16.mxu0 %v2226
    %2442 = vmatmul.mubr.bf16.gmra.mrb[0].mxu0 %v2225
    %v2443 = vpop.f32.mrb[0].mxu0
    %v2444 = vadd.f32 0.0, %v2443
    %v2445 = vpop.f32.mrb[0].mxu0
    %v2446 = vadd.f32 0.0, %v2445
    %v2447 = vpop.f32.mrb[0].mxu0
    %v2448 = vadd.f32 0.0, %v2447
    %v2449 = vpop.f32.mrb[0].mxu0
    %v2450 = vadd.f32 0.0, %v2449
    %2451 = vmatprep.mubr.bf16.mxu0 %v2228
    %2452 = vmatmul.mubr.bf16.gmra.mrb[0].mxu0 %v2227
    %v2453 = vpop.f32.mrb[0].mxu0
    %v2454 = vadd.f32 0.0, %v2453
    %v2455 = vpop.f32.mrb[0].mxu0
    %v2456 = vadd.f32 0.0, %v2455
    %v2457 = vpop.f32.mrb[0].mxu0
    %v2458 = vadd.f32 0.0, %v2457
    %v2459 = vpop.f32.mrb[0].mxu0
    %v2460 = vadd.f32 0.0, %v2459
    %2461 = vmatprep.mubr.bf16.mxu0 %v2230
    %2462 = vmatmul.mubr.bf16.gmra.mrb[0].mxu0 %v2229
    %v2463 = vpop.f32.mrb[0].mxu0
    %v2464 = vadd.f32 0.0, %v2463
    %v2465 = vpop.f32.mrb[0].mxu0
    %v2466 = vadd.f32 0.0, %v2465
    %v2467 = vpop.f32.mrb[0].mxu0
    %v2468 = vadd.f32 0.0, %v2467
    %v2469 = vpop.f32.mrb[0].mxu0
    %v2470 = vadd.f32 0.0, %v2469
    %2471 = vmatprep.mubr.bf16.mxu0 %v2232
    %2472 = vmatmul.mubr.bf16.gmra.mrb[0].mxu0 %v2231
    %v2473 = vpop.f32.mrb[0].mxu0
    %v2474 = vadd.f32 0.0, %v2473
    %v2475 = vpop.f32.mrb[0].mxu0
    %v2476 = vadd.f32 0.0, %v2475
    %v2477 = vpop.f32.mrb[0].mxu0
    %v2478 = vadd.f32 0.0, %v2477
    %v2479 = vpop.f32.mrb[0].mxu0
    %v2480 = vadd.f32 0.0, %v2479
    %2481 = vmatprep.mubr.bf16.mxu0 %v2234
    %2482 = vmatmul.mubr.bf16.gmra.mrb[0].mxu0 %v2233
    %v2483 = vpop.f32.mrb[0].mxu0
    %v2484 = vadd.f32 0.0, %v2483
    %v2485 = vpop.f32.mrb[0].mxu0
    %v2486 = vadd.f32 0.0, %v2485
    %v2487 = vpop.f32.mrb[0].mxu0
    %v2488 = vadd.f32 0.0, %v2487
    %v2489 = vpop.f32.mrb[0].mxu0
    %v2490 = vadd.f32 0.0, %v2489
    %2491 = vmatprep.mubr.bf16.mxu0 %v2236
    %2492 = vmatmul.mubr.bf16.gmra.mrb[0].mxu0 %v2235
    %v2493 = vpop.f32.mrb[0].mxu0
    %v2494 = vadd.f32 0.0, %v2493
    %v2495 = vpop.f32.mrb[0].mxu0
    %v2496 = vadd.f32 0.0, %v2495
    %v2497 = vpop.f32.mrb[0].mxu0
    %v2498 = vadd.f32 0.0, %v2497
    %v2499 = vpop.f32.mrb[0].mxu0
    %v2500 = vadd.f32 0.0, %v2499
    %2501 = vmatprep.mubr.bf16.mxu0 %v2238
    %2502 = vmatmul.mubr.bf16.gmra.mrb[0].mxu0 %v2237
    %v2503 = vpop.f32.mrb[0].mxu0
    %v2504 = vadd.f32 0.0, %v2503
    %v2505 = vpop.f32.mrb[0].mxu0
    %v2506 = vadd.f32 0.0, %v2505
    %v2507 = vpop.f32.mrb[0].mxu0
    %v2508 = vadd.f32 0.0, %v2507
    %v2509 = vpop.f32.mrb[0].mxu0
    %v2510 = vadd.f32 0.0, %v2509
    %2511 = vdwg.mxu0
    %v2512 = vpack.c.bf16 %v2438, %v2434
    %v2513 = vpack.c.bf16 %v2440, %v2436
    %v2514 = vpack.c.bf16 %v2448, %v2444
    %v2515 = vpack.c.bf16 %v2450, %v2446
    %v2516 = vpack.c.bf16 %v2458, %v2454
    %v2517 = vpack.c.bf16 %v2460, %v2456
    %v2518 = vpack.c.bf16 %v2468, %v2464
    %v2519 = vpack.c.bf16 %v2470, %v2466
    %v2520 = vpack.c.bf16 %v2478, %v2474
    %v2521 = vpack.c.bf16 %v2480, %v2476
    %v2522 = vpack.c.bf16 %v2488, %v2484
    %v2523 = vpack.c.bf16 %v2490, %v2486
    %v2524 = vpack.c.bf16 %v2498, %v2494
    %v2525 = vpack.c.bf16 %v2500, %v2496
    %v2526 = vpack.c.bf16 %v2508, %v2504
    %v2527 = vpack.c.bf16 %v2510, %v2506
    %2528 = vmatprep.subr.bf16.mxu0 %v2513
    %2529 = vmatpush1.bf16.msra.mxu0 %v2512
    %2530 = vmatprep.subr.bf16.mxu0 %v2515
    %2531 = vmatpush1.bf16.msra.mxu0 %v2514
    %2532 = vmatprep.subr.bf16.mxu0 %v2517
    %2533 = vmatpush1.bf16.msra.mxu0 %v2516
    %2534 = vmatprep.subr.bf16.mxu0 %v2519
    %2535 = vmatpush1.bf16.msra.mxu0 %v2518
    %2536 = vmatprep.subr.bf16.mxu0 %v2521
    %2537 = vmatpush1.bf16.msra.mxu0 %v2520
    %2538 = vmatprep.subr.bf16.mxu0 %v2523
    %2539 = vmatpush1.bf16.msra.mxu0 %v2522
    %2540 = vmatprep.subr.bf16.mxu0 %v2525
    %2541 = vmatpush1.bf16.msra.mxu0 %v2524
    %2542 = vmatprep.subr.bf16.mxu0 %v2527
    %2543 = vmatpush1.bf16.msra.mxu0 %v2526
    %2544 = vmatprep.subr.bf16.mxu0 0
    %2545 = vmatpush1.bf16.msra.mxu0 0
    %2546 = vmatprep.subr.bf16.mxu0 0
    %2547 = vmatpush1.bf16.msra.mxu0 0
    %2548 = vmatprep.subr.bf16.mxu0 0
    %2549 = vmatpush1.bf16.msra.mxu0 0
    %2550 = vmatprep.subr.bf16.mxu0 0
    %2551 = vmatpush1.bf16.msra.mxu0 0
    %2552 = vmatprep.subr.bf16.mxu0 0
    %2553 = vmatpush1.bf16.msra.mxu0 0
    %2554 = vmatprep.subr.bf16.mxu0 0
    %2555 = vmatpush1.bf16.msra.mxu0 0
    %2556 = vmatprep.subr.bf16.mxu0 0
    %2557 = vmatpush1.bf16.msra.mxu0 0
    %2558 = vmatprep.subr.bf16.mxu0 0
    %2559 = vmatpush1.bf16.msra.mxu0 0
    %2560 = vmatprep.mubr.bf16.mxu0 0
    %2561 = vmatmul.mubr.bf16.gmra.mrb[0].mxu0 1065369472
    %v2562 = vpop.f32.mrb[0].mxu0
    %v2563 = vadd.f32 0.0, %v2562
    %v2564 = vpop.f32.mrb[0].mxu0
    %v2565 = vadd.f32 0.0, %v2564
    %v2566 = vpop.f32.mrb[0].mxu0
    %v2567 = vpop.f32.mrb[0].mxu0
    %2568 = vdwg.mxu0
    %v2569 = vmul.bf16 %v2512, %v2512
    %v2570 = vmul.bf16 %v2513, %v2513
    %v2571 = vmul.bf16 %v2514, %v2514
    %v2572 = vmul.bf16 %v2515, %v2515
    %v2573 = vmul.bf16 %v2516, %v2516
    %v2574 = vmul.bf16 %v2517, %v2517
    %v2575 = vmul.bf16 %v2518, %v2518
    %v2576 = vmul.bf16 %v2519, %v2519
    %v2577 = vmul.bf16 %v2520, %v2520
    %v2578 = vmul.bf16 %v2521, %v2521
    %v2579 = vmul.bf16 %v2522, %v2522
    %v2580 = vmul.bf16 %v2523, %v2523
    %v2581 = vmul.bf16 %v2524, %v2524
    %v2582 = vmul.bf16 %v2525, %v2525
    %v2583 = vmul.bf16 %v2526, %v2526
    %v2584 = vmul.bf16 %v2527, %v2527
    %2585 = vmatprep.subr.bf16.mxu0 %v2570
    %2586 = vmatpush1.bf16.msra.mxu0 %v2569
    %2587 = vmatprep.subr.bf16.mxu0 %v2572
    %2588 = vmatpush1.bf16.msra.mxu0 %v2571
    %2589 = vmatprep.subr.bf16.mxu0 %v2574
    %2590 = vmatpush1.bf16.msra.mxu0 %v2573
    %2591 = vmatprep.subr.bf16.mxu0 %v2576
    %2592 = vmatpush1.bf16.msra.mxu0 %v2575
    %2593 = vmatprep.subr.bf16.mxu0 %v2578
    %2594 = vmatpush1.bf16.msra.mxu0 %v2577
    %2595 = vmatprep.subr.bf16.mxu0 %v2580
    %2596 = vmatpush1.bf16.msra.mxu0 %v2579
    %2597 = vmatprep.subr.bf16.mxu0 %v2582
    %2598 = vmatpush1.bf16.msra.mxu0 %v2581
    %2599 = vmatprep.subr.bf16.mxu0 %v2584
    %2600 = vmatpush1.bf16.msra.mxu0 %v2583
    %2601 = vmatprep.subr.bf16.mxu0 0
    %2602 = vmatpush1.bf16.msra.mxu0 0
    %2603 = vmatprep.subr.bf16.mxu0 0
    %2604 = vmatpush1.bf16.msra.mxu0 0
    %2605 = vmatprep.subr.bf16.mxu0 0
    %2606 = vmatpush1.bf16.msra.mxu0 0
    %2607 = vmatprep.subr.bf16.mxu0 0
    %2608 = vmatpush1.bf16.msra.mxu0 0
    %2609 = vmatprep.subr.bf16.mxu0 0
    %2610 = vmatpush1.bf16.msra.mxu0 0
    %2611 = vmatprep.subr.bf16.mxu0 0
    %2612 = vmatpush1.bf16.msra.mxu0 0
    %2613 = vmatprep.subr.bf16.mxu0 0
    %2614 = vmatpush1.bf16.msra.mxu0 0
    %2615 = vmatprep.subr.bf16.mxu0 0
    %2616 = vmatpush1.bf16.msra.mxu0 0
    %2617 = vmatprep.mubr.bf16.mxu0 0
    %2618 = vmatmul.mubr.bf16.gmra.mrb[0].mxu0 1065369472
    %v2619 = vpop.f32.mrb[0].mxu0
    %v2620 = vadd.f32 0.0, %v2619
    %v2621 = vpop.f32.mrb[0].mxu0
    %v2622 = vadd.f32 0.0, %v2621
    %v2623 = vpop.f32.mrb[0].mxu0
    %v2624 = vpop.f32.mrb[0].mxu0
    %2625 = vdwg.mxu0
    %v2626 = vmul.f32 %v2563, 0.0078125
    %v2627 = vmul.f32 %v2565, 0.0078125
    %v2628 = vmul.f32 %v2620, 0.0078125
    %v2629 = vmul.f32 %v2622, 0.0078125
    %v2630 = vmul.f32 %v2626, %v2626
    %v2631 = vmul.f32 %v2627, %v2627
    %v2632 = vsub.f32 %v2628, %v2630
    %v2633 = vsub.f32 %v2629, %v2631
    %v2634 = vadd.f32 %v2632, 0.9
    %v2635 = vadd.f32 %v2633, 0.9
    %v2636 = vrsqrt.pop %v2634
    %v2637 = vrsqrt.pop %v2635
    %v2640 = vcombine.low %v2636, %v2637
    %v2642 = vunpack.c.l.s4 1966171168
    %v2643 = vunpack.c.0.s8 %v2642
    %v2644 = vlaneseq
    %v2645 = vshrl.u32 %v2644, 7
    %v2646 = vsub.s32 %v2643, %v2645
    %v2647 = vrot.slane %v2640, %v2646
    %v2649 = vunpack.c.l.s4 1966171168
    %v2650 = vunpack.c.0.s8 %v2649
    %v2651 = vlaneseq
    %v2652 = vshrl.u32 %v2651, 7
    %v2653 = vsub.s32 %v2650, %v2652
    %v2654 = vrot.slane %v2647, %v2653
    %v2656 = vmul.f32 %v2220, %v2654
    %v2658 = vlaneseq
    %v2659 = vshrl.u32 %v2658, 7
    %v2660 = vsub.s32 0, %v2659
    %v2661 = vrot.slane %v2656, %v2660
    %v2662 = vlaneseq
    %v2663 = vshrl.u32 %v2662, 7
    %v2664 = vsub.s32 1, %v2663
    %v2665 = vrot.slane %v2656, %v2664
    %v2668 = vmul.f32 %v2626, %v2661
    %v2669 = vmul.f32 %v2627, %v2665
    %v2672 = vcombine.low %v2668, %v2669
    %v2674 = vunpack.c.l.s4 1966171168
    %v2675 = vunpack.c.0.s8 %v2674
    %v2676 = vlaneseq
    %v2677 = vshrl.u32 %v2676, 7
    %v2678 = vsub.s32 %v2675, %v2677
    %v2679 = vrot.slane %v2672, %v2678
    %v2681 = vunpack.c.l.s4 1966171168
    %v2682 = vunpack.c.0.s8 %v2681
    %v2683 = vlaneseq
    %v2684 = vshrl.u32 %v2683, 7
    %v2685 = vsub.s32 %v2682, %v2684
    %v2686 = vrot.slane %v2679, %v2685
    %v2688 = vsub.f32 %v2222, %v2686
    %v2689 = vmul.f32 %v2434, %v2661
    %v2690 = vmul.f32 %v2436, %v2665
    %v2691 = vmul.f32 %v2438, %v2661
    %v2692 = vmul.f32 %v2440, %v2665
    %v2693 = vmul.f32 %v2444, %v2661
    %v2694 = vmul.f32 %v2446, %v2665
    %v2695 = vmul.f32 %v2448, %v2661
    %v2696 = vmul.f32 %v2450, %v2665
    %v2697 = vmul.f32 %v2454, %v2661
    %v2698 = vmul.f32 %v2456, %v2665
    %v2699 = vmul.f32 %v2458, %v2661
    %v2700 = vmul.f32 %v2460, %v2665
    %v2701 = vmul.f32 %v2464, %v2661
    %v2702 = vmul.f32 %v2466, %v2665
    %v2703 = vmul.f32 %v2468, %v2661
    %v2704 = vmul.f32 %v2470, %v2665
    %v2705 = vmul.f32 %v2474, %v2661
    %v2706 = vmul.f32 %v2476, %v2665
    %v2707 = vmul.f32 %v2478, %v2661
    %v2708 = vmul.f32 %v2480, %v2665
    %v2709 = vmul.f32 %v2484, %v2661
    %v2710 = vmul.f32 %v2486, %v2665
    %v2711 = vmul.f32 %v2488, %v2661
    %v2712 = vmul.f32 %v2490, %v2665
    %v2713 = vmul.f32 %v2494, %v2661
    %v2714 = vmul.f32 %v2496, %v2665
    %v2715 = vmul.f32 %v2498, %v2661
    %v2716 = vmul.f32 %v2500, %v2665
    %v2717 = vmul.f32 %v2504, %v2661
    %v2718 = vmul.f32 %v2506, %v2665
    %v2719 = vmul.f32 %v2508, %v2661
    %v2720 = vmul.f32 %v2510, %v2665
    %v2722 = vlaneseq
    %v2723 = vshrl.u32 %v2722, 7
    %v2724 = vsub.s32 0, %v2723
    %v2725 = vrot.slane %v2688, %v2724
    %v2726 = vlaneseq
    %v2727 = vshrl.u32 %v2726, 7
    %v2728 = vsub.s32 1, %v2727
    %v2729 = vrot.slane %v2688, %v2728
    %v2732 = vadd.f32 %v2689, %v2725
    %v2733 = vadd.f32 %v2690, %v2729
    %v2734 = vadd.f32 %v2691, %v2725
    %v2735 = vadd.f32 %v2692, %v2729
    %v2736 = vadd.f32 %v2693, %v2725
    %v2737 = vadd.f32 %v2694, %v2729
    %v2738 = vadd.f32 %v2695, %v2725
    %v2739 = vadd.f32 %v2696, %v2729
    %v2740 = vadd.f32 %v2697, %v2725
    %v2741 = vadd.f32 %v2698, %v2729
    %v2742 = vadd.f32 %v2699, %v2725
    %v2743 = vadd.f32 %v2700, %v2729
    %v2744 = vadd.f32 %v2701, %v2725
    %v2745 = vadd.f32 %v2702, %v2729
    %v2746 = vadd.f32 %v2703, %v2725
    %v2747 = vadd.f32 %v2704, %v2729
    %v2748 = vadd.f32 %v2705, %v2725
    %v2749 = vadd.f32 %v2706, %v2729
    %v2750 = vadd.f32 %v2707, %v2725
    %v2751 = vadd.f32 %v2708, %v2729
    %v2752 = vadd.f32 %v2709, %v2725
    %v2753 = vadd.f32 %v2710, %v2729
    %v2754 = vadd.f32 %v2711, %v2725
    %v2755 = vadd.f32 %v2712, %v2729
    %v2756 = vadd.f32 %v2713, %v2725
    %v2757 = vadd.f32 %v2714, %v2729
    %v2758 = vadd.f32 %v2715, %v2725
    %v2759 = vadd.f32 %v2716, %v2729
    %v2760 = vadd.f32 %v2717, %v2725
    %v2761 = vadd.f32 %v2718, %v2729
    %v2762 = vadd.f32 %v2719, %v2725
    %v2763 = vadd.f32 %v2720, %v2729
    %vm2764 = vcmp.gt.f32.partialorder %v2732, 0.0
    %vm2765 = vcmp.gt.f32.partialorder %v2733, 0.0
    %vm2766 = vcmp.gt.f32.partialorder %v2734, 0.0
    %vm2767 = vcmp.gt.f32.partialorder %v2735, 0.0
    %vm2768 = vcmp.gt.f32.partialorder %v2736, 0.0
    %vm2769 = vcmp.gt.f32.partialorder %v2737, 0.0
    %vm2770 = vcmp.gt.f32.partialorder %v2738, 0.0
    %vm2771 = vcmp.gt.f32.partialorder %v2739, 0.0
    %vm2772 = vcmp.gt.f32.partialorder %v2740, 0.0
    %vm2773 = vcmp.gt.f32.partialorder %v2741, 0.0
    %vm2774 = vcmp.gt.f32.partialorder %v2742, 0.0
    %vm2775 = vcmp.gt.f32.partialorder %v2743, 0.0
    %vm2776 = vcmp.gt.f32.partialorder %v2744, 0.0
    %vm2777 = vcmp.gt.f32.partialorder %v2745, 0.0
    %vm2778 = vcmp.gt.f32.partialorder %v2746, 0.0
    %vm2779 = vcmp.gt.f32.partialorder %v2747, 0.0
    %vm2780 = vcmp.gt.f32.partialorder %v2748, 0.0
    %vm2781 = vcmp.gt.f32.partialorder %v2749, 0.0
    %vm2782 = vcmp.gt.f32.partialorder %v2750, 0.0
    %vm2783 = vcmp.gt.f32.partialorder %v2751, 0.0
    %vm2784 = vcmp.gt.f32.partialorder %v2752, 0.0
    %vm2785 = vcmp.gt.f32.partialorder %v2753, 0.0
    %vm2786 = vcmp.gt.f32.partialorder %v2754, 0.0
    %vm2787 = vcmp.gt.f32.partialorder %v2755, 0.0
    %vm2788 = vcmp.gt.f32.partialorder %v2756, 0.0
    %vm2789 = vcmp.gt.f32.partialorder %v2757, 0.0
    %vm2790 = vcmp.gt.f32.partialorder %v2758, 0.0
    %vm2791 = vcmp.gt.f32.partialorder %v2759, 0.0
    %vm2792 = vcmp.gt.f32.partialorder %v2760, 0.0
    %vm2793 = vcmp.gt.f32.partialorder %v2761, 0.0
    %vm2794 = vcmp.gt.f32.partialorder %v2762, 0.0
    %vm2795 = vcmp.gt.f32.partialorder %v2763, 0.0
    %v2796 = vmul.f32 %v2732, 0.3
    %v2797 = vmul.f32 %v2733, 0.3
    %v2798 = vmul.f32 %v2734, 0.3
    %v2799 = vmul.f32 %v2735, 0.3
    %v2800 = vmul.f32 %v2736, 0.3
    %v2801 = vmul.f32 %v2737, 0.3
    %v2802 = vmul.f32 %v2738, 0.3
    %v2803 = vmul.f32 %v2739, 0.3
    %v2804 = vmul.f32 %v2740, 0.3
    %v2805 = vmul.f32 %v2741, 0.3
    %v2806 = vmul.f32 %v2742, 0.3
    %v2807 = vmul.f32 %v2743, 0.3
    %v2808 = vmul.f32 %v2744, 0.3
    %v2809 = vmul.f32 %v2745, 0.3
    %v2810 = vmul.f32 %v2746, 0.3
    %v2811 = vmul.f32 %v2747, 0.3
    %v2812 = vmul.f32 %v2748, 0.3
    %v2813 = vmul.f32 %v2749, 0.3
    %v2814 = vmul.f32 %v2750, 0.3
    %v2815 = vmul.f32 %v2751, 0.3
    %v2816 = vmul.f32 %v2752, 0.3
    %v2817 = vmul.f32 %v2753, 0.3
    %v2818 = vmul.f32 %v2754, 0.3
    %v2819 = vmul.f32 %v2755, 0.3
    %v2820 = vmul.f32 %v2756, 0.3
    %v2821 = vmul.f32 %v2757, 0.3
    %v2822 = vmul.f32 %v2758, 0.3
    %v2823 = vmul.f32 %v2759, 0.3
    %v2824 = vmul.f32 %v2760, 0.3
    %v2825 = vmul.f32 %v2761, 0.3
    %v2826 = vmul.f32 %v2762, 0.3
    %v2827 = vmul.f32 %v2763, 0.3
    %v2828 = vsel %vm2764, %v2732, %v2796
    %v2829 = vsel %vm2765, %v2733, %v2797
    %v2830 = vsel %vm2766, %v2734, %v2798
    %v2831 = vsel %vm2767, %v2735, %v2799
    %v2832 = vsel %vm2768, %v2736, %v2800
    %v2833 = vsel %vm2769, %v2737, %v2801
    %v2834 = vsel %vm2770, %v2738, %v2802
    %v2835 = vsel %vm2771, %v2739, %v2803
    %v2836 = vsel %vm2772, %v2740, %v2804
    %v2837 = vsel %vm2773, %v2741, %v2805
    %v2838 = vsel %vm2774, %v2742, %v2806
    %v2839 = vsel %vm2775, %v2743, %v2807
    %v2840 = vsel %vm2776, %v2744, %v2808
    %v2841 = vsel %vm2777, %v2745, %v2809
    %v2842 = vsel %vm2778, %v2746, %v2810
    %v2843 = vsel %vm2779, %v2747, %v2811
    %v2844 = vsel %vm2780, %v2748, %v2812
    %v2845 = vsel %vm2781, %v2749, %v2813
    %v2846 = vsel %vm2782, %v2750, %v2814
    %v2847 = vsel %vm2783, %v2751, %v2815
    %v2848 = vsel %vm2784, %v2752, %v2816
    %v2849 = vsel %vm2785, %v2753, %v2817
    %v2850 = vsel %vm2786, %v2754, %v2818
    %v2851 = vsel %vm2787, %v2755, %v2819
    %v2852 = vsel %vm2788, %v2756, %v2820
    %v2853 = vsel %vm2789, %v2757, %v2821
    %v2854 = vsel %vm2790, %v2758, %v2822
    %v2855 = vsel %vm2791, %v2759, %v2823
    %v2856 = vsel %vm2792, %v2760, %v2824
    %v2857 = vsel %vm2793, %v2761, %v2825
    %v2858 = vsel %vm2794, %v2762, %v2826
    %v2859 = vsel %vm2795, %v2763, %v2827
    %s2860 = scalar_lea.vmem [#allocation5], 768
    %v2861 = vld [vmem:[%s2860] sm:$0xff]
    %v2862 = vld [vmem:[%s2860 + $0x8] sm:$0xff]
    %v2863 = vld [vmem:[%s2860 + $0x10] sm:$0xff]
    %v2864 = vld [vmem:[%s2860 + $0x18] sm:$0xff]
    %v2865 = vld [vmem:[%s2860 + $0x20] sm:$0xff]
    %v2866 = vld [vmem:[%s2860 + $0x28] sm:$0xff]
    %v2867 = vld [vmem:[%s2860 + $0x30] sm:$0xff]
    %v2868 = vld [vmem:[%s2860 + $0x38] sm:$0xff]
    %v2869 = vld [vmem:[%s2860 + $0x40] sm:$0xff]
    %v2870 = vld [vmem:[%s2860 + $0x48] sm:$0xff]
    %v2871 = vld [vmem:[%s2860 + $0x50] sm:$0xff]
    %v2872 = vld [vmem:[%s2860 + $0x58] sm:$0xff]
    %v2873 = vld [vmem:[%s2860 + $0x60] sm:$0xff]
    %v2874 = vld [vmem:[%s2860 + $0x68] sm:$0xff]
    %v2875 = vld [vmem:[%s2860 + $0x70] sm:$0xff]
    %v2876 = vld [vmem:[%s2860 + $0x78] sm:$0xff]
    %v2877 = vld [vmem:[%s2860 + $0x80] sm:$0xff]
    %v2878 = vld [vmem:[%s2860 + $0x88] sm:$0xff]
    %v2879 = vld [vmem:[%s2860 + $0x90] sm:$0xff]
    %v2880 = vld [vmem:[%s2860 + $0x98] sm:$0xff]
    %v2881 = vld [vmem:[%s2860 + $0xa0] sm:$0xff]
    %v2882 = vld [vmem:[%s2860 + $0xa8] sm:$0xff]
    %v2883 = vld [vmem:[%s2860 + $0xb0] sm:$0xff]
    %v2884 = vld [vmem:[%s2860 + $0xb8] sm:$0xff]
    %v2885 = vld [vmem:[%s2860 + $0xc0] sm:$0xff]
    %v2886 = vld [vmem:[%s2860 + $0xc8] sm:$0xff]
    %v2887 = vld [vmem:[%s2860 + $0xd0] sm:$0xff]
    %v2888 = vld [vmem:[%s2860 + $0xd8] sm:$0xff]
    %v2889 = vld [vmem:[%s2860 + $0xe0] sm:$0xff]
    %v2890 = vld [vmem:[%s2860 + $0xe8] sm:$0xff]
    %v2891 = vld [vmem:[%s2860 + $0xf0] sm:$0xff]
    %v2892 = vld [vmem:[%s2860 + $0xf8] sm:$0xff]
    %s2893 = scalar_lea.vmem %s5, 16
    %v2894 = vld [vmem:[%s2893] ss:$8 sm:$0x3]
    %s2895 = scalar_lea.vmem %s5, 17
    %v2896 = vld [vmem:[%s2895] ss:$8 sm:$0x3]
    %v2897 = vpack.c.bf16 %v2830, %v2828
    %v2898 = vpack.c.bf16 %v2831, %v2829
    %v2899 = vpack.c.bf16 %v2834, %v2832
    %v2900 = vpack.c.bf16 %v2835, %v2833
    %v2901 = vpack.c.bf16 %v2838, %v2836
    %v2902 = vpack.c.bf16 %v2839, %v2837
    %v2903 = vpack.c.bf16 %v2842, %v2840
    %v2904 = vpack.c.bf16 %v2843, %v2841
    %v2905 = vpack.c.bf16 %v2846, %v2844
    %v2906 = vpack.c.bf16 %v2847, %v2845
    %v2907 = vpack.c.bf16 %v2850, %v2848
    %v2908 = vpack.c.bf16 %v2851, %v2849
    %v2909 = vpack.c.bf16 %v2854, %v2852
    %v2910 = vpack.c.bf16 %v2855, %v2853
    %v2911 = vpack.c.bf16 %v2858, %v2856
    %v2912 = vpack.c.bf16 %v2859, %v2857
    %v2945 = vunpack.c.l.b16 %v2861
    %v2946 = vunpack.c.h.b16 %v2861
    %v2947 = vunpack.c.l.b16 %v2862
    %v2948 = vunpack.c.h.b16 %v2862
    %v2949 = vunpack.c.l.b16 %v2863
    %v2950 = vunpack.c.h.b16 %v2863
    %v2951 = vunpack.c.l.b16 %v2864
    %v2952 = vunpack.c.h.b16 %v2864
    %v2953 = vunpack.c.l.b16 %v2865
    %v2954 = vunpack.c.h.b16 %v2865
    %v2955 = vunpack.c.l.b16 %v2866
    %v2956 = vunpack.c.h.b16 %v2866
    %v2957 = vunpack.c.l.b16 %v2867
    %v2958 = vunpack.c.h.b16 %v2867
    %v2959 = vunpack.c.l.b16 %v2868
    %v2960 = vunpack.c.h.b16 %v2868
    %v2961 = vunpack.c.l.b16 %v2869
    %v2962 = vunpack.c.h.b16 %v2869
    %v2963 = vunpack.c.l.b16 %v2870
    %v2964 = vunpack.c.h.b16 %v2870
    %v2965 = vunpack.c.l.b16 %v2871
    %v2966 = vunpack.c.h.b16 %v2871
    %v2967 = vunpack.c.l.b16 %v2872
    %v2968 = vunpack.c.h.b16 %v2872
    %v2969 = vunpack.c.l.b16 %v2873
    %v2970 = vunpack.c.h.b16 %v2873
    %v2971 = vunpack.c.l.b16 %v2874
    %v2972 = vunpack.c.h.b16 %v2874
    %v2973 = vunpack.c.l.b16 %v2875
    %v2974 = vunpack.c.h.b16 %v2875
    %v2975 = vunpack.c.l.b16 %v2876
    %v2976 = vunpack.c.h.b16 %v2876
    %v2977 = vunpack.c.l.b16 %v2877
    %v2978 = vunpack.c.h.b16 %v2877
    %v2979 = vunpack.c.l.b16 %v2878
    %v2980 = vunpack.c.h.b16 %v2878
    %v2981 = vunpack.c.l.b16 %v2879
    %v2982 = vunpack.c.h.b16 %v2879
    %v2983 = vunpack.c.l.b16 %v2880
    %v2984 = vunpack.c.h.b16 %v2880
    %v2985 = vunpack.c.l.b16 %v2881
    %v2986 = vunpack.c.h.b16 %v2881
    %v2987 = vunpack.c.l.b16 %v2882
    %v2988 = vunpack.c.h.b16 %v2882
    %v2989 = vunpack.c.l.b16 %v2883
    %v2990 = vunpack.c.h.b16 %v2883
    %v2991 = vunpack.c.l.b16 %v2884
    %v2992 = vunpack.c.h.b16 %v2884
    %v2993 = vunpack.c.l.b16 %v2885
    %v2994 = vunpack.c.h.b16 %v2885
    %v2995 = vunpack.c.l.b16 %v2886
    %v2996 = vunpack.c.h.b16 %v2886
    %v2997 = vunpack.c.l.b16 %v2887
    %v2998 = vunpack.c.h.b16 %v2887
    %v2999 = vunpack.c.l.b16 %v2888
    %v3000 = vunpack.c.h.b16 %v2888
    %v3001 = vunpack.c.l.b16 %v2889
    %v3002 = vunpack.c.h.b16 %v2889
    %v3003 = vunpack.c.l.b16 %v2890
    %v3004 = vunpack.c.h.b16 %v2890
    %v3005 = vunpack.c.l.b16 %v2891
    %v3006 = vunpack.c.h.b16 %v2891
    %v3007 = vunpack.c.l.b16 %v2892
    %v3008 = vunpack.c.h.b16 %v2892
    %v3009 = vpack.c.b16 %v2947, %v2945
    %v3010 = vpack.c.b16 %v2948, %v2946
    %v3011 = vpack.c.b16 %v2951, %v2949
    %v3012 = vpack.c.b16 %v2952, %v2950
    %v3013 = vpack.c.b16 %v2955, %v2953
    %v3014 = vpack.c.b16 %v2956, %v2954
    %v3015 = vpack.c.b16 %v2959, %v2957
    %v3016 = vpack.c.b16 %v2960, %v2958
    %v3017 = vpack.c.b16 %v2963, %v2961
    %v3018 = vpack.c.b16 %v2964, %v2962
    %v3019 = vpack.c.b16 %v2967, %v2965
    %v3020 = vpack.c.b16 %v2968, %v2966
    %v3021 = vpack.c.b16 %v2971, %v2969
    %v3022 = vpack.c.b16 %v2972, %v2970
    %v3023 = vpack.c.b16 %v2975, %v2973
    %v3024 = vpack.c.b16 %v2976, %v2974
    %v3025 = vpack.c.b16 %v2979, %v2977
    %v3026 = vpack.c.b16 %v2980, %v2978
    %v3027 = vpack.c.b16 %v2983, %v2981
    %v3028 = vpack.c.b16 %v2984, %v2982
    %v3029 = vpack.c.b16 %v2987, %v2985
    %v3030 = vpack.c.b16 %v2988, %v2986
    %v3031 = vpack.c.b16 %v2991, %v2989
    %v3032 = vpack.c.b16 %v2992, %v2990
    %v3033 = vpack.c.b16 %v2995, %v2993
    %v3034 = vpack.c.b16 %v2996, %v2994
    %v3035 = vpack.c.b16 %v2999, %v2997
    %v3036 = vpack.c.b16 %v3000, %v2998
    %v3037 = vpack.c.b16 %v3003, %v3001
    %v3038 = vpack.c.b16 %v3004, %v3002
    %v3039 = vpack.c.b16 %v3007, %v3005
    %v3040 = vpack.c.b16 %v3008, %v3006
    %3073 = vmatprep.subr.bf16.mxu0 %v3010
    %3074 = vmatpush1.bf16.msra.mxu0 %v3009
    %3075 = vmatprep.subr.bf16.mxu0 %v3012
    %3076 = vmatpush1.bf16.msra.mxu0 %v3011
    %3077 = vmatprep.subr.bf16.mxu0 %v3014
    %3078 = vmatpush1.bf16.msra.mxu0 %v3013
    %3079 = vmatprep.subr.bf16.mxu0 %v3016
    %3080 = vmatpush1.bf16.msra.mxu0 %v3015
    %3081 = vmatprep.subr.bf16.mxu0 %v3018
    %3082 = vmatpush1.bf16.msra.mxu0 %v3017
    %3083 = vmatprep.subr.bf16.mxu0 %v3020
    %3084 = vmatpush1.bf16.msra.mxu0 %v3019
    %3085 = vmatprep.subr.bf16.mxu0 %v3022
    %3086 = vmatpush1.bf16.msra.mxu0 %v3021
    %3087 = vmatprep.subr.bf16.mxu0 %v3024
    %3088 = vmatpush1.bf16.msra.mxu0 %v3023
    %3089 = vmatprep.subr.bf16.mxu0 %v3026
    %3090 = vmatpush1.bf16.msra.mxu0 %v3025
    %3091 = vmatprep.subr.bf16.mxu0 %v3028
    %3092 = vmatpush1.bf16.msra.mxu0 %v3027
    %3093 = vmatprep.subr.bf16.mxu0 %v3030
    %3094 = vmatpush1.bf16.msra.mxu0 %v3029
    %3095 = vmatprep.subr.bf16.mxu0 %v3032
    %3096 = vmatpush1.bf16.msra.mxu0 %v3031
    %3097 = vmatprep.subr.bf16.mxu0 %v3034
    %3098 = vmatpush1.bf16.msra.mxu0 %v3033
    %3099 = vmatprep.subr.bf16.mxu0 %v3036
    %3100 = vmatpush1.bf16.msra.mxu0 %v3035
    %3101 = vmatprep.subr.bf16.mxu0 %v3038
    %3102 = vmatpush1.bf16.msra.mxu0 %v3037
    %3103 = vmatprep.subr.bf16.mxu0 %v3040
    %3104 = vmatpush1.bf16.msra.mxu0 %v3039
    %3105 = vmatprep.mubr.bf16.mxu0 %v2898
    %3106 = vmatmul.mubr.bf16.gmra.mrb[0].mxu0 %v2897
    %v3107 = vpop.f32.mrb[0].mxu0
    %v3108 = vadd.f32 0.0, %v3107
    %v3109 = vpop.f32.mrb[0].mxu0
    %v3110 = vadd.f32 0.0, %v3109
    %v3111 = vpop.f32.mrb[0].mxu0
    %v3112 = vadd.f32 0.0, %v3111
    %v3113 = vpop.f32.mrb[0].mxu0
    %v3114 = vadd.f32 0.0, %v3113
    %3115 = vmatprep.mubr.bf16.mxu0 %v2900
    %3116 = vmatmul.mubr.bf16.gmra.mrb[0].mxu0 %v2899
    %v3117 = vpop.f32.mrb[0].mxu0
    %v3118 = vadd.f32 0.0, %v3117
    %v3119 = vpop.f32.mrb[0].mxu0
    %v3120 = vadd.f32 0.0, %v3119
    %v3121 = vpop.f32.mrb[0].mxu0
    %v3122 = vadd.f32 0.0, %v3121
    %v3123 = vpop.f32.mrb[0].mxu0
    %v3124 = vadd.f32 0.0, %v3123
    %3125 = vmatprep.mubr.bf16.mxu0 %v2902
    %3126 = vmatmul.mubr.bf16.gmra.mrb[0].mxu0 %v2901
    %v3127 = vpop.f32.mrb[0].mxu0
    %v3128 = vadd.f32 0.0, %v3127
    %v3129 = vpop.f32.mrb[0].mxu0
    %v3130 = vadd.f32 0.0, %v3129
    %v3131 = vpop.f32.mrb[0].mxu0
    %v3132 = vadd.f32 0.0, %v3131
    %v3133 = vpop.f32.mrb[0].mxu0
    %v3134 = vadd.f32 0.0, %v3133
    %3135 = vmatprep.mubr.bf16.mxu0 %v2904
    %3136 = vmatmul.mubr.bf16.gmra.mrb[0].mxu0 %v2903
    %v3137 = vpop.f32.mrb[0].mxu0
    %v3138 = vadd.f32 0.0, %v3137
    %v3139 = vpop.f32.mrb[0].mxu0
    %v3140 = vadd.f32 0.0, %v3139
    %v3141 = vpop.f32.mrb[0].mxu0
    %v3142 = vadd.f32 0.0, %v3141
    %v3143 = vpop.f32.mrb[0].mxu0
    %v3144 = vadd.f32 0.0, %v3143
    %3145 = vmatprep.mubr.bf16.mxu0 %v2906
    %3146 = vmatmul.mubr.bf16.gmra.mrb[0].mxu0 %v2905
    %v3147 = vpop.f32.mrb[0].mxu0
    %v3148 = vadd.f32 0.0, %v3147
    %v3149 = vpop.f32.mrb[0].mxu0
    %v3150 = vadd.f32 0.0, %v3149
    %v3151 = vpop.f32.mrb[0].mxu0
    %v3152 = vadd.f32 0.0, %v3151
    %v3153 = vpop.f32.mrb[0].mxu0
    %v3154 = vadd.f32 0.0, %v3153
    %3155 = vmatprep.mubr.bf16.mxu0 %v2908
    %3156 = vmatmul.mubr.bf16.gmra.mrb[0].mxu0 %v2907
    %v3157 = vpop.f32.mrb[0].mxu0
    %v3158 = vadd.f32 0.0, %v3157
    %v3159 = vpop.f32.mrb[0].mxu0
    %v3160 = vadd.f32 0.0, %v3159
    %v3161 = vpop.f32.mrb[0].mxu0
    %v3162 = vadd.f32 0.0, %v3161
    %v3163 = vpop.f32.mrb[0].mxu0
    %v3164 = vadd.f32 0.0, %v3163
    %3165 = vmatprep.mubr.bf16.mxu0 %v2910
    %3166 = vmatmul.mubr.bf16.gmra.mrb[0].mxu0 %v2909
    %v3167 = vpop.f32.mrb[0].mxu0
    %v3168 = vadd.f32 0.0, %v3167
    %v3169 = vpop.f32.mrb[0].mxu0
    %v3170 = vadd.f32 0.0, %v3169
    %v3171 = vpop.f32.mrb[0].mxu0
    %v3172 = vadd.f32 0.0, %v3171
    %v3173 = vpop.f32.mrb[0].mxu0
    %v3174 = vadd.f32 0.0, %v3173
    %3175 = vmatprep.mubr.bf16.mxu0 %v2912
    %3176 = vmatmul.mubr.bf16.gmra.mrb[0].mxu0 %v2911
    %v3177 = vpop.f32.mrb[0].mxu0
    %v3178 = vadd.f32 0.0, %v3177
    %v3179 = vpop.f32.mrb[0].mxu0
    %v3180 = vadd.f32 0.0, %v3179
    %v3181 = vpop.f32.mrb[0].mxu0
    %v3182 = vadd.f32 0.0, %v3181
    %v3183 = vpop.f32.mrb[0].mxu0
    %v3184 = vadd.f32 0.0, %v3183
    %3185 = vdwg.mxu0
    %v3186 = vpack.c.bf16 %v3112, %v3108
    %v3187 = vpack.c.bf16 %v3114, %v3110
    %v3188 = vpack.c.bf16 %v3122, %v3118
    %v3189 = vpack.c.bf16 %v3124, %v3120
    %v3190 = vpack.c.bf16 %v3132, %v3128
    %v3191 = vpack.c.bf16 %v3134, %v3130
    %v3192 = vpack.c.bf16 %v3142, %v3138
    %v3193 = vpack.c.bf16 %v3144, %v3140
    %v3194 = vpack.c.bf16 %v3152, %v3148
    %v3195 = vpack.c.bf16 %v3154, %v3150
    %v3196 = vpack.c.bf16 %v3162, %v3158
    %v3197 = vpack.c.bf16 %v3164, %v3160
    %v3198 = vpack.c.bf16 %v3172, %v3168
    %v3199 = vpack.c.bf16 %v3174, %v3170
    %v3200 = vpack.c.bf16 %v3182, %v3178
    %v3201 = vpack.c.bf16 %v3184, %v3180
    %3202 = vmatprep.subr.bf16.mxu0 %v3187
    %3203 = vmatpush1.bf16.msra.mxu0 %v3186
    %3204 = vmatprep.subr.bf16.mxu0 %v3189
    %3205 = vmatpush1.bf16.msra.mxu0 %v3188
    %3206 = vmatprep.subr.bf16.mxu0 %v3191
    %3207 = vmatpush1.bf16.msra.mxu0 %v3190
    %3208 = vmatprep.subr.bf16.mxu0 %v3193
    %3209 = vmatpush1.bf16.msra.mxu0 %v3192
    %3210 = vmatprep.subr.bf16.mxu0 %v3195
    %3211 = vmatpush1.bf16.msra.mxu0 %v3194
    %3212 = vmatprep.subr.bf16.mxu0 %v3197
    %3213 = vmatpush1.bf16.msra.mxu0 %v3196
    %3214 = vmatprep.subr.bf16.mxu0 %v3199
    %3215 = vmatpush1.bf16.msra.mxu0 %v3198
    %3216 = vmatprep.subr.bf16.mxu0 %v3201
    %3217 = vmatpush1.bf16.msra.mxu0 %v3200
    %3218 = vmatprep.subr.bf16.mxu0 0
    %3219 = vmatpush1.bf16.msra.mxu0 0
    %3220 = vmatprep.subr.bf16.mxu0 0
    %3221 = vmatpush1.bf16.msra.mxu0 0
    %3222 = vmatprep.subr.bf16.mxu0 0
    %3223 = vmatpush1.bf16.msra.mxu0 0
    %3224 = vmatprep.subr.bf16.mxu0 0
    %3225 = vmatpush1.bf16.msra.mxu0 0
    %3226 = vmatprep.subr.bf16.mxu0 0
    %3227 = vmatpush1.bf16.msra.mxu0 0
    %3228 = vmatprep.subr.bf16.mxu0 0
    %3229 = vmatpush1.bf16.msra.mxu0 0
    %3230 = vmatprep.subr.bf16.mxu0 0
    %3231 = vmatpush1.bf16.msra.mxu0 0
    %3232 = vmatprep.subr.bf16.mxu0 0
    %3233 = vmatpush1.bf16.msra.mxu0 0
    %3234 = vmatprep.mubr.bf16.mxu0 0
    %3235 = vmatmul.mubr.bf16.gmra.mrb[0].mxu0 1065369472
    %v3236 = vpop.f32.mrb[0].mxu0
    %v3237 = vadd.f32 0.0, %v3236
    %v3238 = vpop.f32.mrb[0].mxu0
    %v3239 = vadd.f32 0.0, %v3238
    %v3240 = vpop.f32.mrb[0].mxu0
    %v3241 = vpop.f32.mrb[0].mxu0
    %3242 = vdwg.mxu0
    %v3243 = vmul.bf16 %v3186, %v3186
    %v3244 = vmul.bf16 %v3187, %v3187
    %v3245 = vmul.bf16 %v3188, %v3188
    %v3246 = vmul.bf16 %v3189, %v3189
    %v3247 = vmul.bf16 %v3190, %v3190
    %v3248 = vmul.bf16 %v3191, %v3191
    %v3249 = vmul.bf16 %v3192, %v3192
    %v3250 = vmul.bf16 %v3193, %v3193
    %v3251 = vmul.bf16 %v3194, %v3194
    %v3252 = vmul.bf16 %v3195, %v3195
    %v3253 = vmul.bf16 %v3196, %v3196
    %v3254 = vmul.bf16 %v3197, %v3197
    %v3255 = vmul.bf16 %v3198, %v3198
    %v3256 = vmul.bf16 %v3199, %v3199
    %v3257 = vmul.bf16 %v3200, %v3200
    %v3258 = vmul.bf16 %v3201, %v3201
    %3259 = vmatprep.subr.bf16.mxu0 %v3244
    %3260 = vmatpush1.bf16.msra.mxu0 %v3243
    %3261 = vmatprep.subr.bf16.mxu0 %v3246
    %3262 = vmatpush1.bf16.msra.mxu0 %v3245
    %3263 = vmatprep.subr.bf16.mxu0 %v3248
    %3264 = vmatpush1.bf16.msra.mxu0 %v3247
    %3265 = vmatprep.subr.bf16.mxu0 %v3250
    %3266 = vmatpush1.bf16.msra.mxu0 %v3249
    %3267 = vmatprep.subr.bf16.mxu0 %v3252
    %3268 = vmatpush1.bf16.msra.mxu0 %v3251
    %3269 = vmatprep.subr.bf16.mxu0 %v3254
    %3270 = vmatpush1.bf16.msra.mxu0 %v3253
    %3271 = vmatprep.subr.bf16.mxu0 %v3256
    %3272 = vmatpush1.bf16.msra.mxu0 %v3255
    %3273 = vmatprep.subr.bf16.mxu0 %v3258
    %3274 = vmatpush1.bf16.msra.mxu0 %v3257
    %3275 = vmatprep.subr.bf16.mxu0 0
    %3276 = vmatpush1.bf16.msra.mxu0 0
    %3277 = vmatprep.subr.bf16.mxu0 0
    %3278 = vmatpush1.bf16.msra.mxu0 0
    %3279 = vmatprep.subr.bf16.mxu0 0
    %3280 = vmatpush1.bf16.msra.mxu0 0
    %3281 = vmatprep.subr.bf16.mxu0 0
    %3282 = vmatpush1.bf16.msra.mxu0 0
    %3283 = vmatprep.subr.bf16.mxu0 0
    %3284 = vmatpush1.bf16.msra.mxu0 0
    %3285 = vmatprep.subr.bf16.mxu0 0
    %3286 = vmatpush1.bf16.msra.mxu0 0
    %3287 = vmatprep.subr.bf16.mxu0 0
    %3288 = vmatpush1.bf16.msra.mxu0 0
    %3289 = vmatprep.subr.bf16.mxu0 0
    %3290 = vmatpush1.bf16.msra.mxu0 0
    %3291 = vmatprep.mubr.bf16.mxu0 0
    %3292 = vmatmul.mubr.bf16.gmra.mrb[0].mxu0 1065369472
    %v3293 = vpop.f32.mrb[0].mxu0
    %v3294 = vadd.f32 0.0, %v3293
    %v3295 = vpop.f32.mrb[0].mxu0
    %v3296 = vadd.f32 0.0, %v3295
    %v3297 = vpop.f32.mrb[0].mxu0
    %v3298 = vpop.f32.mrb[0].mxu0
    %3299 = vdwg.mxu0
    %v3300 = vmul.f32 %v3237, 0.0078125
    %v3301 = vmul.f32 %v3239, 0.0078125
    %v3302 = vmul.f32 %v3294, 0.0078125
    %v3303 = vmul.f32 %v3296, 0.0078125
    %v3304 = vmul.f32 %v3300, %v3300
    %v3305 = vmul.f32 %v3301, %v3301
    %v3306 = vsub.f32 %v3302, %v3304
    %v3307 = vsub.f32 %v3303, %v3305
    %v3308 = vadd.f32 %v3306, 0.9
    %v3309 = vadd.f32 %v3307, 0.9
    %v3310 = vrsqrt.pop %v3308
    %v3311 = vrsqrt.pop %v3309
    %v3314 = vcombine.low %v3310, %v3311
    %v3316 = vunpack.c.l.s4 1966171168
    %v3317 = vunpack.c.0.s8 %v3316
    %v3318 = vlaneseq
    %v3319 = vshrl.u32 %v3318, 7
    %v3320 = vsub.s32 %v3317, %v3319
    %v3321 = vrot.slane %v3314, %v3320
    %v3323 = vunpack.c.l.s4 1966171168
    %v3324 = vunpack.c.0.s8 %v3323
    %v3325 = vlaneseq
    %v3326 = vshrl.u32 %v3325, 7
    %v3327 = vsub.s32 %v3324, %v3326
    %v3328 = vrot.slane %v3321, %v3327
    %v3330 = vmul.f32 %v2894, %v3328
    %v3332 = vlaneseq
    %v3333 = vshrl.u32 %v3332, 7
    %v3334 = vsub.s32 0, %v3333
    %v3335 = vrot.slane %v3330, %v3334
    %v3336 = vlaneseq
    %v3337 = vshrl.u32 %v3336, 7
    %v3338 = vsub.s32 1, %v3337
    %v3339 = vrot.slane %v3330, %v3338
    %v3342 = vmul.f32 %v3300, %v3335
    %v3343 = vmul.f32 %v3301, %v3339
    %v3346 = vcombine.low %v3342, %v3343
    %v3348 = vunpack.c.l.s4 1966171168
    %v3349 = vunpack.c.0.s8 %v3348
    %v3350 = vlaneseq
    %v3351 = vshrl.u32 %v3350, 7
    %v3352 = vsub.s32 %v3349, %v3351
    %v3353 = vrot.slane %v3346, %v3352
    %v3355 = vunpack.c.l.s4 1966171168
    %v3356 = vunpack.c.0.s8 %v3355
    %v3357 = vlaneseq
    %v3358 = vshrl.u32 %v3357, 7
    %v3359 = vsub.s32 %v3356, %v3358
    %v3360 = vrot.slane %v3353, %v3359
    %v3362 = vsub.f32 %v2896, %v3360
    %v3363 = vmul.f32 %v3108, %v3335
    %v3364 = vmul.f32 %v3110, %v3339
    %v3365 = vmul.f32 %v3112, %v3335
    %v3366 = vmul.f32 %v3114, %v3339
    %v3367 = vmul.f32 %v3118, %v3335
    %v3368 = vmul.f32 %v3120, %v3339
    %v3369 = vmul.f32 %v3122, %v3335
    %v3370 = vmul.f32 %v3124, %v3339
    %v3371 = vmul.f32 %v3128, %v3335
    %v3372 = vmul.f32 %v3130, %v3339
    %v3373 = vmul.f32 %v3132, %v3335
    %v3374 = vmul.f32 %v3134, %v3339
    %v3375 = vmul.f32 %v3138, %v3335
    %v3376 = vmul.f32 %v3140, %v3339
    %v3377 = vmul.f32 %v3142, %v3335
    %v3378 = vmul.f32 %v3144, %v3339
    %v3379 = vmul.f32 %v3148, %v3335
    %v3380 = vmul.f32 %v3150, %v3339
    %v3381 = vmul.f32 %v3152, %v3335
    %v3382 = vmul.f32 %v3154, %v3339
    %v3383 = vmul.f32 %v3158, %v3335
    %v3384 = vmul.f32 %v3160, %v3339
    %v3385 = vmul.f32 %v3162, %v3335
    %v3386 = vmul.f32 %v3164, %v3339
    %v3387 = vmul.f32 %v3168, %v3335
    %v3388 = vmul.f32 %v3170, %v3339
    %v3389 = vmul.f32 %v3172, %v3335
    %v3390 = vmul.f32 %v3174, %v3339
    %v3391 = vmul.f32 %v3178, %v3335
    %v3392 = vmul.f32 %v3180, %v3339
    %v3393 = vmul.f32 %v3182, %v3335
    %v3394 = vmul.f32 %v3184, %v3339
    %v3396 = vlaneseq
    %v3397 = vshrl.u32 %v3396, 7
    %v3398 = vsub.s32 0, %v3397
    %v3399 = vrot.slane %v3362, %v3398
    %v3400 = vlaneseq
    %v3401 = vshrl.u32 %v3400, 7
    %v3402 = vsub.s32 1, %v3401
    %v3403 = vrot.slane %v3362, %v3402
    %v3406 = vadd.f32 %v3363, %v3399
    %v3407 = vadd.f32 %v3364, %v3403
    %v3408 = vadd.f32 %v3365, %v3399
    %v3409 = vadd.f32 %v3366, %v3403
    %v3410 = vadd.f32 %v3367, %v3399
    %v3411 = vadd.f32 %v3368, %v3403
    %v3412 = vadd.f32 %v3369, %v3399
    %v3413 = vadd.f32 %v3370, %v3403
    %v3414 = vadd.f32 %v3371, %v3399
    %v3415 = vadd.f32 %v3372, %v3403
    %v3416 = vadd.f32 %v3373, %v3399
    %v3417 = vadd.f32 %v3374, %v3403
    %v3418 = vadd.f32 %v3375, %v3399
    %v3419 = vadd.f32 %v3376, %v3403
    %v3420 = vadd.f32 %v3377, %v3399
    %v3421 = vadd.f32 %v3378, %v3403
    %v3422 = vadd.f32 %v3379, %v3399
    %v3423 = vadd.f32 %v3380, %v3403
    %v3424 = vadd.f32 %v3381, %v3399
    %v3425 = vadd.f32 %v3382, %v3403
    %v3426 = vadd.f32 %v3383, %v3399
    %v3427 = vadd.f32 %v3384, %v3403
    %v3428 = vadd.f32 %v3385, %v3399
    %v3429 = vadd.f32 %v3386, %v3403
    %v3430 = vadd.f32 %v3387, %v3399
    %v3431 = vadd.f32 %v3388, %v3403
    %v3432 = vadd.f32 %v3389, %v3399
    %v3433 = vadd.f32 %v3390, %v3403
    %v3434 = vadd.f32 %v3391, %v3399
    %v3435 = vadd.f32 %v3392, %v3403
    %v3436 = vadd.f32 %v3393, %v3399
    %v3437 = vadd.f32 %v3394, %v3403
    %vm3438 = vcmp.gt.f32.partialorder %v3406, 0.0
    %vm3439 = vcmp.gt.f32.partialorder %v3407, 0.0
    %vm3440 = vcmp.gt.f32.partialorder %v3408, 0.0
    %vm3441 = vcmp.gt.f32.partialorder %v3409, 0.0
    %vm3442 = vcmp.gt.f32.partialorder %v3410, 0.0
    %vm3443 = vcmp.gt.f32.partialorder %v3411, 0.0
    %vm3444 = vcmp.gt.f32.partialorder %v3412, 0.0
    %vm3445 = vcmp.gt.f32.partialorder %v3413, 0.0
    %vm3446 = vcmp.gt.f32.partialorder %v3414, 0.0
    %vm3447 = vcmp.gt.f32.partialorder %v3415, 0.0
    %vm3448 = vcmp.gt.f32.partialorder %v3416, 0.0
    %vm3449 = vcmp.gt.f32.partialorder %v3417, 0.0
    %vm3450 = vcmp.gt.f32.partialorder %v3418, 0.0
    %vm3451 = vcmp.gt.f32.partialorder %v3419, 0.0
    %vm3452 = vcmp.gt.f32.partialorder %v3420, 0.0
    %vm3453 = vcmp.gt.f32.partialorder %v3421, 0.0
    %vm3454 = vcmp.gt.f32.partialorder %v3422, 0.0
    %vm3455 = vcmp.gt.f32.partialorder %v3423, 0.0
    %vm3456 = vcmp.gt.f32.partialorder %v3424, 0.0
    %vm3457 = vcmp.gt.f32.partialorder %v3425, 0.0
    %vm3458 = vcmp.gt.f32.partialorder %v3426, 0.0
    %vm3459 = vcmp.gt.f32.partialorder %v3427, 0.0
    %vm3460 = vcmp.gt.f32.partialorder %v3428, 0.0
    %vm3461 = vcmp.gt.f32.partialorder %v3429, 0.0
    %vm3462 = vcmp.gt.f32.partialorder %v3430, 0.0
    %vm3463 = vcmp.gt.f32.partialorder %v3431, 0.0
    %vm3464 = vcmp.gt.f32.partialorder %v3432, 0.0
    %vm3465 = vcmp.gt.f32.partialorder %v3433, 0.0
    %vm3466 = vcmp.gt.f32.partialorder %v3434, 0.0
    %vm3467 = vcmp.gt.f32.partialorder %v3435, 0.0
    %vm3468 = vcmp.gt.f32.partialorder %v3436, 0.0
    %vm3469 = vcmp.gt.f32.partialorder %v3437, 0.0
    %v3470 = vmul.f32 %v3406, 0.3
    %v3471 = vmul.f32 %v3407, 0.3
    %v3472 = vmul.f32 %v3408, 0.3
    %v3473 = vmul.f32 %v3409, 0.3
    %v3474 = vmul.f32 %v3410, 0.3
    %v3475 = vmul.f32 %v3411, 0.3
    %v3476 = vmul.f32 %v3412, 0.3
    %v3477 = vmul.f32 %v3413, 0.3
    %v3478 = vmul.f32 %v3414, 0.3
    %v3479 = vmul.f32 %v3415, 0.3
    %v3480 = vmul.f32 %v3416, 0.3
    %v3481 = vmul.f32 %v3417, 0.3
    %v3482 = vmul.f32 %v3418, 0.3
    %v3483 = vmul.f32 %v3419, 0.3
    %v3484 = vmul.f32 %v3420, 0.3
    %v3485 = vmul.f32 %v3421, 0.3
    %v3486 = vmul.f32 %v3422, 0.3
    %v3487 = vmul.f32 %v3423, 0.3
    %v3488 = vmul.f32 %v3424, 0.3
    %v3489 = vmul.f32 %v3425, 0.3
    %v3490 = vmul.f32 %v3426, 0.3
    %v3491 = vmul.f32 %v3427, 0.3
    %v3492 = vmul.f32 %v3428, 0.3
    %v3493 = vmul.f32 %v3429, 0.3
    %v3494 = vmul.f32 %v3430, 0.3
    %v3495 = vmul.f32 %v3431, 0.3
    %v3496 = vmul.f32 %v3432, 0.3
    %v3497 = vmul.f32 %v3433, 0.3
    %v3498 = vmul.f32 %v3434, 0.3
    %v3499 = vmul.f32 %v3435, 0.3
    %v3500 = vmul.f32 %v3436, 0.3
    %v3501 = vmul.f32 %v3437, 0.3
    %v3502 = vsel %vm3438, %v3406, %v3470
    %v3503 = vsel %vm3439, %v3407, %v3471
    %v3504 = vsel %vm3440, %v3408, %v3472
    %v3505 = vsel %vm3441, %v3409, %v3473
    %v3506 = vsel %vm3442, %v3410, %v3474
    %v3507 = vsel %vm3443, %v3411, %v3475
    %v3508 = vsel %vm3444, %v3412, %v3476
    %v3509 = vsel %vm3445, %v3413, %v3477
    %v3510 = vsel %vm3446, %v3414, %v3478
    %v3511 = vsel %vm3447, %v3415, %v3479
    %v3512 = vsel %vm3448, %v3416, %v3480
    %v3513 = vsel %vm3449, %v3417, %v3481
    %v3514 = vsel %vm3450, %v3418, %v3482
    %v3515 = vsel %vm3451, %v3419, %v3483
    %v3516 = vsel %vm3452, %v3420, %v3484
    %v3517 = vsel %vm3453, %v3421, %v3485
    %v3518 = vsel %vm3454, %v3422, %v3486
    %v3519 = vsel %vm3455, %v3423, %v3487
    %v3520 = vsel %vm3456, %v3424, %v3488
    %v3521 = vsel %vm3457, %v3425, %v3489
    %v3522 = vsel %vm3458, %v3426, %v3490
    %v3523 = vsel %vm3459, %v3427, %v3491
    %v3524 = vsel %vm3460, %v3428, %v3492
    %v3525 = vsel %vm3461, %v3429, %v3493
    %v3526 = vsel %vm3462, %v3430, %v3494
    %v3527 = vsel %vm3463, %v3431, %v3495
    %v3528 = vsel %vm3464, %v3432, %v3496
    %v3529 = vsel %vm3465, %v3433, %v3497
    %v3530 = vsel %vm3466, %v3434, %v3498
    %v3531 = vsel %vm3467, %v3435, %v3499
    %v3532 = vsel %vm3468, %v3436, %v3500
    %v3533 = vsel %vm3469, %v3437, %v3501
    %3534 = vst [vmem:[#allocation7] sm:$0xff] %v3502
    %3535 = vst [vmem:[#allocation7 + $0x8] sm:$0xff] %v3503
    %3536 = vst [vmem:[#allocation7 + $0x10] sm:$0xff] %v3504
    %3537 = vst [vmem:[#allocation7 + $0x18] sm:$0xff] %v3505
    %3538 = vst [vmem:[#allocation7 + $0x20] sm:$0xff] %v3506
    %3539 = vst [vmem:[#allocation7 + $0x28] sm:$0xff] %v3507
    %3540 = vst [vmem:[#allocation7 + $0x30] sm:$0xff] %v3508
    %3541 = vst [vmem:[#allocation7 + $0x38] sm:$0xff] %v3509
    %3542 = vst [vmem:[#allocation7 + $0x40] sm:$0xff] %v3510
    %3543 = vst [vmem:[#allocation7 + $0x48] sm:$0xff] %v3511
    %3544 = vst [vmem:[#allocation7 + $0x50] sm:$0xff] %v3512
    %3545 = vst [vmem:[#allocation7 + $0x58] sm:$0xff] %v3513
    %3546 = vst [vmem:[#allocation7 + $0x60] sm:$0xff] %v3514
    %3547 = vst [vmem:[#allocation7 + $0x68] sm:$0xff] %v3515
    %3548 = vst [vmem:[#allocation7 + $0x70] sm:$0xff] %v3516
    %3549 = vst [vmem:[#allocation7 + $0x78] sm:$0xff] %v3517
    %3550 = vst [vmem:[#allocation7 + $0x80] sm:$0xff] %v3518
    %3551 = vst [vmem:[#allocation7 + $0x88] sm:$0xff] %v3519
    %3552 = vst [vmem:[#allocation7 + $0x90] sm:$0xff] %v3520
    %3553 = vst [vmem:[#allocation7 + $0x98] sm:$0xff] %v3521
    %3554 = vst [vmem:[#allocation7 + $0xa0] sm:$0xff] %v3522
    %3555 = vst [vmem:[#allocation7 + $0xa8] sm:$0xff] %v3523
    %3556 = vst [vmem:[#allocation7 + $0xb0] sm:$0xff] %v3524
    %3557 = vst [vmem:[#allocation7 + $0xb8] sm:$0xff] %v3525
    %3558 = vst [vmem:[#allocation7 + $0xc0] sm:$0xff] %v3526
    %3559 = vst [vmem:[#allocation7 + $0xc8] sm:$0xff] %v3527
    %3560 = vst [vmem:[#allocation7 + $0xd0] sm:$0xff] %v3528
    %3561 = vst [vmem:[#allocation7 + $0xd8] sm:$0xff] %v3529
    %3562 = vst [vmem:[#allocation7 + $0xe0] sm:$0xff] %v3530
    %3563 = vst [vmem:[#allocation7 + $0xe8] sm:$0xff] %v3531
    %3564 = vst [vmem:[#allocation7 + $0xf0] sm:$0xff] %v3532
    %3565 = vst [vmem:[#allocation7 + $0xf8] sm:$0xff] %v3533
    // Predicated region
    $region34: #{tpu_custom_call.1} parent=1 // pred_check
      _
    $region35: #{tpu_custom_call.1} parent=1 // pred_check_branch
      %3567 = sbr.rel (0) target = $region37
    $region36: #{tpu_custom_call.1} parent=1 // pred_region
      %s3569 = ssub.s32 4096, 4096
      %3570 = vsyncadd [#allocation4], %s3569
      %s3571 = sshll.u32 [#allocation7], 4
      %s3572 = int_to_ptr.vmem [resolvable:$true] %s3571
      %3577 = dma.vmem_to_hbm [thread:$0]  %s3572, 4096, %s6, [#allocation4], 256, 256, 16
    $region37: #{tpu_custom_call.1} parent=1 // pred_fallthru
      _
    // Predicated region
    $region38: #{tpu_custom_call.1} parent=1 // pred_check
      _
    $region39: #{tpu_custom_call.1} parent=1 // pred_check_branch
      %3579 = sbr.rel (0) target = $region41
    $region40: #{tpu_custom_call.1} parent=1 // pred_region
      %3580 = dma.done [#allocation4], 4096
    $region41: #{tpu_custom_call.1} parent=1 // pred_fallthru
      _
    %3581 = vsyncpa [#allocation3], 1
    %3582 = vsyncpa [#allocation6], 1
    %3583 = vsyncpa [#allocation4], 1

</llo_original>
